<compile_context>
chip_gen: v7x
topology: tpu7x:2x2x1
jax: 0.10.0
libtpu: 0.0.40
codegen_flags: <defaults>
</compile_context>

<pallas_src>
import jax
import jax.numpy as jnp
from jax import lax
from jax.experimental import pallas as pl
from jax.experimental.pallas import tpu as pltpu

_EPS = 1e-5
_LANE = 128


def _round_up(n, m):
    return ((n + m - 1) // m) * m


# --------------------------------------------------------------------------
# Kernel
# --------------------------------------------------------------------------
def _double_conv_kernel(x_ref, w1_ref, b1_ref, w2_ref, b2_ref, o_ref,
                        xp1_ref, xp2_ref):
    """One batch element: (3x3 conv + folded BN + ReLU) twice, fused.

    x_ref:   (1, H, W, Cin)       f32 input tile
    w*_ref:  (9*Cin*, C*)         bf16 weights with BN scale pre-folded,
                                  K index = (dy*3 + dx)*Cin + ci
    b*_ref:  (1, C*)              f32 folded BN bias ((conv_b - mean)*s + beta)
    o_ref:   (1, H, W, Cout_pad)  f32 output tile (lane-padded channels)
    xp*_ref: (H+2, Wp, C)         bf16 zero-padded halo scratch, Wp = rup(W+2, 8)
    """
    H, W = x_ref.shape[1], x_ref.shape[2]

    # Establish the zero halo.  Whole-buffer zeroing is tiny next to the image
    # and makes no assumption about scratch persistence across grid steps/cores.
    xp1_ref[...] = jnp.zeros(xp1_ref.shape, xp1_ref.dtype)
    xp2_ref[...] = jnp.zeros(xp2_ref.shape, xp2_ref.dtype)

    # Cast the input to bf16 exactly once and drop it into the padded interior.
    xp1_ref[pl.ds(1, H), pl.ds(1, W), :] = x_ref[0].astype(jnp.bfloat16)

    def conv3x3_bias_relu(xp_ref, w_ref, b_ref, out_dtype):
        cout = w_ref.shape[-1]
        # im2col: nine shifted (H, W, C) windows read straight from the padded
        # VMEM scratch, concatenated along channels.  The (H, W, 9C)->(H*W, 9C)
        # reshape is a layout-free leading-dim merge, so the MXU sees M = H*W
        # and K = 9*C: one deep matmul per conv, tap accumulation on the MXU.
        wins = [xp_ref[pl.ds(dy, H), pl.ds(dx, W), :]
                for dy in range(3) for dx in range(3)]
        patch = jnp.concatenate(wins, axis=-1).reshape(H * W, -1)  # bf16
        acc = lax.dot_general(patch, w_ref[...],
                              dimension_numbers=(((1,), (0,)), ((), ())),
                              preferred_element_type=jnp.float32)  # (H*W, cout)
        # BN scale already lives in the weights; epilogue = bias add + ReLU.
        # Padded bias lanes are zero so padded channels stay exactly 0.
        y = jnp.maximum(acc + b_ref[...], 0.0)
        return y.reshape(H, W, cout).astype(out_dtype)

    # conv1 + BN + ReLU -> bf16 intermediate, written straight into conv2's
    # padded scratch (never leaves VMEM, never materialised in f32).
    xp2_ref[pl.ds(1, H), pl.ds(1, W), :] = conv3x3_bias_relu(
        xp1_ref, w1_ref, b1_ref, jnp.bfloat16)

    # conv2 + BN + ReLU -> lane-dense output store.
    o_ref[0] = conv3x3_bias_relu(xp2_ref, w2_ref, b2_ref, o_ref.dtype)


# --------------------------------------------------------------------------
# pallas_call wrapper (NHWC, lane-padded channels)
# --------------------------------------------------------------------------
def _double_conv_pallas(x_nhwc, w1, b1, w2, b2):
    N, H, W, Cin = x_nhwc.shape
    Cmid = w1.shape[-1]          # lane-padded
    Cout = w2.shape[-1]          # lane-padded
    Wp = _round_up(W + 2, 8)     # sublane-aligned padded width

    return pl.pallas_call(
        _double_conv_kernel,
        out_shape=jax.ShapeDtypeStruct((N, H, W, Cout), jnp.float32),
        grid_spec=pltpu.PrefetchScalarGridSpec(
            num_scalar_prefetch=0,
            grid=(N,),
            in_specs=[
                pl.BlockSpec((1, H, W, Cin), lambda b: (b, 0, 0, 0)),
                pl.BlockSpec(w1.shape, lambda b: (0, 0)),
                pl.BlockSpec(b1.shape, lambda b: (0, 0)),
                pl.BlockSpec(w2.shape, lambda b: (0, 0)),
                pl.BlockSpec(b2.shape, lambda b: (0, 0)),
            ],
            out_specs=pl.BlockSpec((1, H, W, Cout), lambda b: (b, 0, 0, 0)),
            scratch_shapes=[
                pltpu.VMEM((H + 2, Wp, Cin), jnp.bfloat16),   # conv1 halo buf
                pltpu.VMEM((H + 2, Wp, Cmid), jnp.bfloat16),  # conv2 halo buf
            ],
        ),
        compiler_params=pltpu.CompilerParams(
            dimension_semantics=("parallel",),      # batch shards across TCs
            vmem_limit_bytes=64 * 1024 * 1024,      # ample; retune with strip tiling
        ),
    )(x_nhwc, w1, b1, w2, b2)


# --------------------------------------------------------------------------
# Parameters: init (PyTorch-style shapes), BN fold + kernel packing
# --------------------------------------------------------------------------
def init_double_conv_params(key, in_ch, out_ch):
    ks = jax.random.split(key, 8)

    def conv_init(kw, kb, cin, cout):
        w = 0.1 * jax.random.normal(kw, (cout, cin, 3, 3), jnp.float32)  # OIHW
        b = 0.05 * jax.random.normal(kb, (cout,), jnp.float32)
        return w, b

    def bn_init(kg, kb, c):
        gamma = 1.0 + 0.1 * jax.random.normal(kg, (c,), jnp.float32)
        beta = 0.1 * jax.random.normal(kb, (c,), jnp.float32)
        mean = jnp.zeros((c,), jnp.float32)     # PyTorch running-stat defaults
        var = jnp.ones((c,), jnp.float32)
        return gamma, beta, mean, var

    w1, b1 = conv_init(ks[0], ks[1], in_ch, out_ch)
    bn1 = bn_init(ks[2], ks[3], out_ch)
    w2, b2 = conv_init(ks[4], ks[5], out_ch, out_ch)
    bn2 = bn_init(ks[6], ks[7], out_ch)
    return (w1, b1, bn1), (w2, b2, bn2)


def _pack_conv_bn(w_oihw, conv_b, gamma, beta, mean, var, cin_pad, cout_pad):
    """Fold eval-mode BN into the conv: scale into the bf16 weights, bias kept f32."""
    cout, cin = w_oihw.shape[0], w_oihw.shape[1]
    s = gamma / jnp.sqrt(var + _EPS)                        # (cout,)
    bias = (conv_b - mean) * s + beta                       # (cout,)
    w = jnp.transpose(w_oihw, (2, 3, 1, 0))                 # (kh, kw, ci, co)
    w = w * s[None, None, None, :]                          # fold BN scale
    w = jnp.pad(w, ((0, 0), (0, 0),
                    (0, cin_pad - cin), (0, cout_pad - cout)))
    # Row-major taps: K index = (dy*3 + dx)*cin_pad + ci, matching the in-kernel
    # (dy, dx) window concat order.
    w = w.reshape(9 * cin_pad, cout_pad).astype(jnp.bfloat16)
    bias = jnp.pad(bias, (0, cout_pad - cout)).reshape(1, cout_pad)
    return w, bias.astype(jnp.float32)


def pack_double_conv_params(params, in_ch, out_ch):
    (w1, b1, (g1, be1, m1, v1)), (w2, b2, (g2, be2, m2, v2)) = params
    cmid_p = _round_up(out_ch, _LANE)
    cout_p = _round_up(out_ch, _LANE)
    # TODO(synk): cout_p=128 for out_ch=8 writes 16x extra (zero) output lanes to
    # HBM; real UNet widths (>=128) don't pay this.
    w1p, b1p = _pack_conv_bn(w1, b1, g1, be1, m1, v1, in_ch, cmid_p)
    w2p, b2p = _pack_conv_bn(w2, b2, g2, be2, m2, v2, cmid_p, cout_p)
    return w1p, b1p, w2p, b2p


def double_conv_forward(x_nchw, packed, out_ch):
    """Full double_conv forward. x_nchw: (N, Cin, H, W) -> (N, out_ch, H, W)."""
    w1p, b1p, w2p, b2p = packed
    x = jnp.transpose(x_nchw, (0, 2, 3, 1))             # NCHW -> NHWC
    y = _double_conv_pallas(x, w1p, b1p, w2p, b2p)
    y = y[..., :out_ch]                                  # drop lane padding
    return jnp.transpose(y, (0, 3, 1, 2))                # NHWC -> NCHW


# --------------------------------------------------------------------------
# Plain-JAX reference (f32) for correctness check
# --------------------------------------------------------------------------
def _reference(x_nchw, params):
    def step(x, w, conv_b, gamma, beta, mean, var):
        y = lax.conv_general_dilated(x, w, (1, 1), ((1, 1), (1, 1)),
                                     dimension_numbers=("NCHW", "OIHW", "NCHW"))
        y = y + conv_b[None, :, None, None]
        y = (y - mean[None, :, None, None]) * (
            gamma / jnp.sqrt(var + _EPS))[None, :, None, None]
        y = y + beta[None, :, None, None]
        return jnp.maximum(y, 0.0)

    (w1, b1, (g1, be1, m1, v1)), (w2, b2, (g2, be2, m2, v2)) = params
    y = step(x_nchw, w1, b1, g1, be1, m1, v1)
    return step(y, w2, b2, g2, be2, m2, v2)


if __name__ == "__main__":
    key = jax.random.PRNGKey(0)
    kx, kp = jax.random.split(key)

    N, Cin, Cout, H, W = 2, 4, 8, 16, 16
    x = jax.random.normal(kx, (N, Cin, H, W), dtype=jnp.float32)

    params = init_double_conv_params(kp, Cin, Cout)
    packed = pack_double_conv_params(params, Cin, Cout)

    out = jax.block_until_ready(double_conv_forward(x, packed, Cout))
    ref = _reference(x, params)

    assert out.shape == (N, Cout, H, W)
    max_err = float(jnp.max(jnp.abs(out - ref)))
    # bf16 MXU inputs / intermediates with f32 accumulation -> loosened tolerance.
    assert jnp.allclose(out, ref, atol=2e-2, rtol=2e-2), f"max abs err {max_err}"

    print("KERNEL_OK")
</pallas_src>

<mosaic_0001>
module attributes {stable_mosaic.version = 11 : i64} {
  func.func @_double_conv_kernel(%arg0: i32, %arg1: memref<1x16x16x4xf32, #tpu.memory_space<vmem>>, %arg2: memref<36x128xbf16, #tpu.memory_space<vmem>>, %arg3: memref<1x128xf32, #tpu.memory_space<vmem>>, %arg4: memref<1152x128xbf16, #tpu.memory_space<vmem>>, %arg5: memref<1x128xf32, #tpu.memory_space<vmem>>, %arg6: memref<1x16x16x128xf32, #tpu.memory_space<vmem>>, %arg7: memref<18x24x4xbf16, #tpu.memory_space<vmem>>, %arg8: memref<18x24x128xbf16, #tpu.memory_space<vmem>>) attributes {dimension_semantics = [#tpu.dimension_semantics<parallel>], iteration_bounds = array<i64: 2>, scalar_prefetch = 0 : i64, scratch_operands = 2 : i64, tpu.core_type = #tpu.core_type<tc>, window_params = [{transform_indices = @transform_0, window_bounds = array<i64: 1, 16, 16, 4>}, {pipeline_mode = #tpu.pipeline_mode<synchronous>, transform_indices = @transform_1, window_bounds = array<i64: 36, 128>}, {pipeline_mode = #tpu.pipeline_mode<synchronous>, transform_indices = @transform_2, window_bounds = array<i64: 1, 128>}, {pipeline_mode = #tpu.pipeline_mode<synchronous>, transform_indices = @transform_3, window_bounds = array<i64: 1152, 128>}, {pipeline_mode = #tpu.pipeline_mode<synchronous>, transform_indices = @transform_4, window_bounds = array<i64: 1, 128>}, {transform_indices = @transform_5, window_bounds = array<i64: 1, 16, 16, 128>}]} {
    %cst = arith.constant 0.000000e+00 : bf16
    %0 = vector.broadcast %cst : bf16 to vector<18x24x4xbf16>
    %c0 = arith.constant 0 : index
    %c0_0 = arith.constant 0 : index
    %c0_1 = arith.constant 0 : index
    %1 = vector.load %arg7[%c0, %c0_0, %c0_1] : memref<18x24x4xbf16, #tpu.memory_space<vmem>>, vector<18x24x4xbf16>
    tpu.vector_store %arg7[%c0, %c0_0, %c0_1], %0 {strides = array<i32>} : memref<18x24x4xbf16, #tpu.memory_space<vmem>>, vector<18x24x4xbf16>,
    %cst_2 = arith.constant 0.000000e+00 : bf16
    %2 = vector.broadcast %cst_2 : bf16 to vector<18x24x128xbf16>
    %c0_3 = arith.constant 0 : index
    %c0_4 = arith.constant 0 : index
    %c0_5 = arith.constant 0 : index
    %3 = vector.load %arg8[%c0_3, %c0_4, %c0_5] : memref<18x24x128xbf16, #tpu.memory_space<vmem>>, vector<18x24x128xbf16>
    tpu.vector_store %arg8[%c0_3, %c0_4, %c0_5], %2 {strides = array<i32>} : memref<18x24x128xbf16, #tpu.memory_space<vmem>>, vector<18x24x128xbf16>,
    %c0_6 = arith.constant 0 : index
    %c0_7 = arith.constant 0 : index
    %c0_8 = arith.constant 0 : index
    %c0_9 = arith.constant 0 : index
    %4 = vector.load %arg1[%c0_6, %c0_7, %c0_8, %c0_9] : memref<1x16x16x4xf32, #tpu.memory_space<vmem>>, vector<1x16x16x4xf32>
    %5 = vector.shape_cast %4 : vector<1x16x16x4xf32> to vector<16x16x4xf32>
    %6 = arith.truncf %5 : vector<16x16x4xf32> to vector<16x16x4xbf16>
    %c1 = arith.constant 1 : index
    %c1_10 = arith.constant 1 : index
    %c0_11 = arith.constant 0 : index
    %7 = vector.load %arg7[%c1, %c1_10, %c0_11] : memref<18x24x4xbf16, #tpu.memory_space<vmem>>, vector<16x16x4xbf16>
    tpu.vector_store %arg7[%c1, %c1_10, %c0_11], %6 {strides = array<i32>} : memref<18x24x4xbf16, #tpu.memory_space<vmem>>, vector<16x16x4xbf16>,
    %c0_12 = arith.constant 0 : index
    %c0_13 = arith.constant 0 : index
    %c0_14 = arith.constant 0 : index
    %8 = vector.load %arg7[%c0_12, %c0_13, %c0_14] : memref<18x24x4xbf16, #tpu.memory_space<vmem>>, vector<16x16x4xbf16>
    %c0_15 = arith.constant 0 : index
    %c1_16 = arith.constant 1 : index
    %c0_17 = arith.constant 0 : index
    %9 = vector.load %arg7[%c0_15, %c1_16, %c0_17] : memref<18x24x4xbf16, #tpu.memory_space<vmem>>, vector<16x16x4xbf16>
    %c0_18 = arith.constant 0 : index
    %c2 = arith.constant 2 : index
    %c0_19 = arith.constant 0 : index
    %10 = vector.load %arg7[%c0_18, %c2, %c0_19] : memref<18x24x4xbf16, #tpu.memory_space<vmem>>, vector<16x16x4xbf16>
    %c1_20 = arith.constant 1 : index
    %c0_21 = arith.constant 0 : index
    %c0_22 = arith.constant 0 : index
    %11 = vector.load %arg7[%c1_20, %c0_21, %c0_22] : memref<18x24x4xbf16, #tpu.memory_space<vmem>>, vector<16x16x4xbf16>
    %c1_23 = arith.constant 1 : index
    %c1_24 = arith.constant 1 : index
    %c0_25 = arith.constant 0 : index
    %12 = vector.load %arg7[%c1_23, %c1_24, %c0_25] : memref<18x24x4xbf16, #tpu.memory_space<vmem>>, vector<16x16x4xbf16>
    %c1_26 = arith.constant 1 : index
    %c2_27 = arith.constant 2 : index
    %c0_28 = arith.constant 0 : index
    %13 = vector.load %arg7[%c1_26, %c2_27, %c0_28] : memref<18x24x4xbf16, #tpu.memory_space<vmem>>, vector<16x16x4xbf16>
    %c2_29 = arith.constant 2 : index
    %c0_30 = arith.constant 0 : index
    %c0_31 = arith.constant 0 : index
    %14 = vector.load %arg7[%c2_29, %c0_30, %c0_31] : memref<18x24x4xbf16, #tpu.memory_space<vmem>>, vector<16x16x4xbf16>
    %c2_32 = arith.constant 2 : index
    %c1_33 = arith.constant 1 : index
    %c0_34 = arith.constant 0 : index
    %15 = vector.load %arg7[%c2_32, %c1_33, %c0_34] : memref<18x24x4xbf16, #tpu.memory_space<vmem>>, vector<16x16x4xbf16>
    %c2_35 = arith.constant 2 : index
    %c2_36 = arith.constant 2 : index
    %c0_37 = arith.constant 0 : index
    %16 = vector.load %arg7[%c2_35, %c2_36, %c0_37] : memref<18x24x4xbf16, #tpu.memory_space<vmem>>, vector<16x16x4xbf16>
    %17 = tpu.concatenate %8, %9, %10, %11, %12, %13, %14, %15, %16 in 2 : vector<16x16x4xbf16>, vector<16x16x4xbf16>, vector<16x16x4xbf16>, vector<16x16x4xbf16>, vector<16x16x4xbf16>, vector<16x16x4xbf16>, vector<16x16x4xbf16>, vector<16x16x4xbf16>, vector<16x16x4xbf16> -> vector<16x16x36xbf16>
    %18 = vector.shape_cast %17 : vector<16x16x36xbf16> to vector<256x36xbf16>
    %c0_38 = arith.constant 0 : index
    %c0_39 = arith.constant 0 : index
    %19 = vector.load %arg2[%c0_38, %c0_39] : memref<36x128xbf16, #tpu.memory_space<vmem>>, vector<36x128xbf16>
    %cst_40 = arith.constant dense<0.000000e+00> : vector<256x128xf32>
    %20 = tpu.matmul %18, %19, %cst_40 {dimension_numbers = #tpu.dot_dimension_numbers<[1], [0], [0], [1], [0, 0, 1, 1], [], []>} : vector<256x36xbf16>, vector<36x128xbf16>, vector<256x128xf32> -> vector<256x128xf32>
    %c0_41 = arith.constant 0 : index
    %c0_42 = arith.constant 0 : index
    %21 = vector.load %arg3[%c0_41, %c0_42] : memref<1x128xf32, #tpu.memory_space<vmem>>, vector<1x128xf32>
    %22 = vector.broadcast %21 : vector<1x128xf32> to vector<256x128xf32>
    %23 = arith.addf %20, %22 : vector<256x128xf32>
    %cst_43 = arith.constant 0.000000e+00 : f32
    %24 = vector.broadcast %cst_43 : f32 to vector<256x128xf32>
    %25 = arith.maximumf %23, %24 : vector<256x128xf32>
    %26 = vector.shape_cast %25 : vector<256x128xf32> to vector<16x16x128xf32>
    %27 = arith.truncf %26 : vector<16x16x128xf32> to vector<16x16x128xbf16>
    %c1_44 = arith.constant 1 : index
    %c1_45 = arith.constant 1 : index
    %c0_46 = arith.constant 0 : index
    %28 = vector.load %arg8[%c1_44, %c1_45, %c0_46] : memref<18x24x128xbf16, #tpu.memory_space<vmem>>, vector<16x16x128xbf16>
    tpu.vector_store %arg8[%c1_44, %c1_45, %c0_46], %27 {strides = array<i32>} : memref<18x24x128xbf16, #tpu.memory_space<vmem>>, vector<16x16x128xbf16>,
    %c0_47 = arith.constant 0 : index
    %c0_48 = arith.constant 0 : index
    %c0_49 = arith.constant 0 : index
    %29 = vector.load %arg8[%c0_47, %c0_48, %c0_49] : memref<18x24x128xbf16, #tpu.memory_space<vmem>>, vector<16x16x128xbf16>
    %c0_50 = arith.constant 0 : index
    %c1_51 = arith.constant 1 : index
    %c0_52 = arith.constant 0 : index
    %30 = vector.load %arg8[%c0_50, %c1_51, %c0_52] : memref<18x24x128xbf16, #tpu.memory_space<vmem>>, vector<16x16x128xbf16>
    %c0_53 = arith.constant 0 : index
    %c2_54 = arith.constant 2 : index
    %c0_55 = arith.constant 0 : index
    %31 = vector.load %arg8[%c0_53, %c2_54, %c0_55] : memref<18x24x128xbf16, #tpu.memory_space<vmem>>, vector<16x16x128xbf16>
    %c1_56 = arith.constant 1 : index
    %c0_57 = arith.constant 0 : index
    %c0_58 = arith.constant 0 : index
    %32 = vector.load %arg8[%c1_56, %c0_57, %c0_58] : memref<18x24x128xbf16, #tpu.memory_space<vmem>>, vector<16x16x128xbf16>
    %c1_59 = arith.constant 1 : index
    %c1_60 = arith.constant 1 : index
    %c0_61 = arith.constant 0 : index
    %33 = vector.load %arg8[%c1_59, %c1_60, %c0_61] : memref<18x24x128xbf16, #tpu.memory_space<vmem>>, vector<16x16x128xbf16>
    %c1_62 = arith.constant 1 : index
    %c2_63 = arith.constant 2 : index
    %c0_64 = arith.constant 0 : index
    %34 = vector.load %arg8[%c1_62, %c2_63, %c0_64] : memref<18x24x128xbf16, #tpu.memory_space<vmem>>, vector<16x16x128xbf16>
    %c2_65 = arith.constant 2 : index
    %c0_66 = arith.constant 0 : index
    %c0_67 = arith.constant 0 : index
    %35 = vector.load %arg8[%c2_65, %c0_66, %c0_67] : memref<18x24x128xbf16, #tpu.memory_space<vmem>>, vector<16x16x128xbf16>
    %c2_68 = arith.constant 2 : index
    %c1_69 = arith.constant 1 : index
    %c0_70 = arith.constant 0 : index
    %36 = vector.load %arg8[%c2_68, %c1_69, %c0_70] : memref<18x24x128xbf16, #tpu.memory_space<vmem>>, vector<16x16x128xbf16>
    %c2_71 = arith.constant 2 : index
    %c2_72 = arith.constant 2 : index
    %c0_73 = arith.constant 0 : index
    %37 = vector.load %arg8[%c2_71, %c2_72, %c0_73] : memref<18x24x128xbf16, #tpu.memory_space<vmem>>, vector<16x16x128xbf16>
    %38 = tpu.concatenate %29, %30, %31, %32, %33, %34, %35, %36, %37 in 2 : vector<16x16x128xbf16>, vector<16x16x128xbf16>, vector<16x16x128xbf16>, vector<16x16x128xbf16>, vector<16x16x128xbf16>, vector<16x16x128xbf16>, vector<16x16x128xbf16>, vector<16x16x128xbf16>, vector<16x16x128xbf16> -> vector<16x16x1152xbf16>
    %39 = vector.shape_cast %38 : vector<16x16x1152xbf16> to vector<256x1152xbf16>
    %c0_74 = arith.constant 0 : index
    %c0_75 = arith.constant 0 : index
    %40 = vector.load %arg4[%c0_74, %c0_75] : memref<1152x128xbf16, #tpu.memory_space<vmem>>, vector<1152x128xbf16>
    %cst_76 = arith.constant dense<0.000000e+00> : vector<256x128xf32>
    %41 = tpu.matmul %39, %40, %cst_76 {dimension_numbers = #tpu.dot_dimension_numbers<[1], [0], [0], [1], [0, 0, 1, 1], [], []>} : vector<256x1152xbf16>, vector<1152x128xbf16>, vector<256x128xf32> -> vector<256x128xf32>
    %c0_77 = arith.constant 0 : index
    %c0_78 = arith.constant 0 : index
    %42 = vector.load %arg5[%c0_77, %c0_78] : memref<1x128xf32, #tpu.memory_space<vmem>>, vector<1x128xf32>
    %43 = vector.broadcast %42 : vector<1x128xf32> to vector<256x128xf32>
    %44 = arith.addf %41, %43 : vector<256x128xf32>
    %cst_79 = arith.constant 0.000000e+00 : f32
    %45 = vector.broadcast %cst_79 : f32 to vector<256x128xf32>
    %46 = arith.maximumf %44, %45 : vector<256x128xf32>
    %47 = vector.shape_cast %46 : vector<256x128xf32> to vector<16x16x128xf32>
    %c0_80 = arith.constant 0 : index
    %c0_81 = arith.constant 0 : index
    %c0_82 = arith.constant 0 : index
    %c0_83 = arith.constant 0 : index
    %48 = vector.load %arg6[%c0_80, %c0_81, %c0_82, %c0_83] : memref<1x16x16x128xf32, #tpu.memory_space<vmem>>, vector<1x16x16x128xf32>
    %49 = vector.shape_cast %48 : vector<1x16x16x128xf32> to vector<16x16x128xf32>
    %50 = vector.shape_cast %47 : vector<16x16x128xf32> to vector<1x16x16x128xf32>
    tpu.vector_store %arg6[%c0_80, %c0_81, %c0_82, %c0_83], %50 {strides = array<i32>} : memref<1x16x16x128xf32, #tpu.memory_space<vmem>>, vector<1x16x16x128xf32>,
    return
  }
  func.func @transform_0(%arg0: i32) -> (i32, i32, i32, i32) {
    %c0_i32 = arith.constant 0 : i32
    %c0_i32_0 = arith.constant 0 : i32
    %c0_i32_1 = arith.constant 0 : i32
    %c0_i32_2 = arith.constant 0 : i32
    return %arg0, %c0_i32, %c0_i32_0, %c0_i32_1 : i32, i32, i32, i32
  }
  func.func @transform_1(%arg0: i32) -> (i32, i32) {
    %c0_i32 = arith.constant 0 : i32
    %c0_i32_0 = arith.constant 0 : i32
    %c0_i32_1 = arith.constant 0 : i32
    return %c0_i32, %c0_i32_0 : i32, i32
  }
  func.func @transform_2(%arg0: i32) -> (i32, i32) {
    %c0_i32 = arith.constant 0 : i32
    %c0_i32_0 = arith.constant 0 : i32
    %c0_i32_1 = arith.constant 0 : i32
    return %c0_i32, %c0_i32_0 : i32, i32
  }
  func.func @transform_3(%arg0: i32) -> (i32, i32) {
    %c0_i32 = arith.constant 0 : i32
    %c0_i32_0 = arith.constant 0 : i32
    %c0_i32_1 = arith.constant 0 : i32
    return %c0_i32, %c0_i32_0 : i32, i32
  }
  func.func @transform_4(%arg0: i32) -> (i32, i32) {
    %c0_i32 = arith.constant 0 : i32
    %c0_i32_0 = arith.constant 0 : i32
    %c0_i32_1 = arith.constant 0 : i32
    return %c0_i32, %c0_i32_0 : i32, i32
  }
  func.func @transform_5(%arg0: i32) -> (i32, i32, i32, i32) {
    %c0_i32 = arith.constant 0 : i32
    %c0_i32_0 = arith.constant 0 : i32
    %c0_i32_1 = arith.constant 0 : i32
    %c0_i32_2 = arith.constant 0 : i32
    return %arg0, %c0_i32, %c0_i32_0, %c0_i32_1 : i32, i32, i32, i32
  }
}

</mosaic_0001>

<llo_original>
// kernel: tpu_custom_call.1
$region0: #{tpu_custom_call.1}
  #allocation0 [shape = 'u32[]', space=smem, size = 0x4, offset = 0x4, fixed_abs, tag = 'smem constant byte address 0x4 - core index']
  #allocation1 [shape = 'u32[144,128]{1,0:T(1,128)}', space=vmem, size = 0x12000, scoped, tag = 'internal scratch']
  #allocation2 [shape = 'bf16[18,24,4]{2,1,0:T(8,128)(2,1)}', space=vmem, size = 0x1b000, scoped, tag = 'scratch operand']
  #allocation3 [shape = 'bf16[18,24,128]{2,1,0:T(8,128)(2,1)}', space=vmem, size = 0x1b000, scoped, tag = 'scratch operand']
  %s0 = inlined_call_operand.hbm [shape: f32[2,16,16,4], index: 0, kind: input, shape index: {}]
  %s1 = inlined_call_operand.hbm [shape: bf16[36,128], index: 1, kind: input, shape index: {}]
  %s2 = inlined_call_operand.hbm [shape: f32[1,128], index: 2, kind: input, shape index: {}]
  %s3 = inlined_call_operand.hbm [shape: bf16[1152,128], index: 3, kind: input, shape index: {}]
  %s4 = inlined_call_operand.hbm [shape: f32[1,128], index: 4, kind: input, shape index: {}]
  %s5 = inlined_call_operand.hbm [shape: f32[2,16,16,128], index: 5, kind: output, shape index: {}]
  %s6 = sld [smem:[#allocation0]]
  $region73: #{tpu_custom_call.1} parent=0
    _
  %s8 = ssub.s32 1, %s6
  %s9 = scalar_select 0, %s8, %s6
  $region1: #{tpu_custom_call.1} parent=0
    #allocation4 [shape = 'u8[262144]{0}', space=vmem, size = 0x40000, scoped, tag = 'input window, operand 0']
    #allocation5 [shape = 's32[2]{0}', space=sflag, size = 0x8, scoped, tag = 'scoped memory for tpu_custom_call.1']
    #allocation6 [shape = 's32[2]{0}', space=sflag, size = 0x8, scoped, tag = 'scoped memory for tpu_custom_call.1']
    #allocation7 [shape = 'u8[10240]{0}', space=vmem, size = 0x2800, scoped, tag = 'input window, operand 1, single buffered']
    #allocation8 [shape = 's32[1]{0}', space=sflag, size = 0x4, scoped, tag = 'scoped memory for tpu_custom_call.1']
    #allocation9 [shape = 'u8[512]{0}', space=vmem, size = 0x400, scoped, tag = 'input window, operand 2, single buffered']
    #allocation10 [shape = 'u8[294912]{0}', space=vmem, size = 0x48000, scoped, tag = 'input window, operand 3, single buffered']
    #allocation11 [shape = 's32[1]{0}', space=sflag, size = 0x4, scoped, tag = 'scoped memory for tpu_custom_call.1']
    #allocation12 [shape = 'u8[512]{0}', space=vmem, size = 0x400, scoped, tag = 'input window, operand 4, single buffered']
    #allocation13 [shape = 'u8[262144]{0}', space=vmem, size = 0x40000, scoped, tag = 'output window, operand 0']
    %10 = vsyncpa [#allocation5], 0
    %s11 = scalar_lea.sflag [#allocation5], 1
    %12 = vsyncpa %s11, 0
    %13 = vsyncpa [#allocation8], 0
    %14 = vsyncpa [#allocation11], 0
    %15 = vsyncpa [#allocation6], 0
    %s16 = scalar_lea.sflag [#allocation6], 1
    %17 = vsyncpa %s16, 0
    loop: start=0, step=1, limit=4
    $region2: #{tpu_custom_call.1} parent=1 // loop_pre_header
      _
    $region3: #{tpu_custom_call.1} parent=1 // loop_header
      %s19 = sphi 0, %s23
      %p20 = scmp.ge.s32.totalorder %s19, 4
      %s29 = sphi 0, %s31
      %s32 = sphi 0, %s29
      %s33 = sphi 0, %s32
      %s49 = sphi 0, %s33
      %s53 = sphi 0, %s53
      %s55 = sphi 0, %s53
      %s56 = sphi 0, %s55
      %s70 = sphi 0, %s56
      %s74 = sphi 0, %s74
      %s76 = sphi 0, %s74
      %s77 = sphi 0, %s76
      %s91 = sphi 0, %s77
      %s95 = sphi 0, %s95
      %s97 = sphi 0, %s95
      %s98 = sphi 0, %s97
      %s112 = sphi 0, %s98
      %s116 = sphi 0, %s116
      %s118 = sphi 0, %s116
      %s119 = sphi 0, %s118
      %s133 = sphi 0, %s119
      %s139 = sphi 0, %s141
      %s142 = sphi 0, %s139
      %s143 = sphi 0, %s142
      %s159 = sphi 0, %s143
    $region4: #{tpu_custom_call.1} parent=1 // loop_header_branch
      %22 = sbr.rel (%p20) target = $region8
    $region5: #{tpu_custom_call.1} parent=1 // loop_body
      %s24 = ssub.s32 %s19, 1
      %s25 = ssub.s32 %s19, 2
      %s26 = sadd.s32 %s19, 1
      %s27 = ssub.s32 %s19, %s26
      %p28 = scmp.eq.s32.totalorder %s27, 0
      %s30 = sadd.s32 %s29, 1
      %s31 = scalar_select %p28, %s29, %s30
      %p34 = pneg %p28
      %p35 = scmp.eq.s32.totalorder %s19, 1
      %p36 = por %p34, %p35
      %p37 = scmp.ne.s32.totalorder %s29, %s32
      %p38 = scmp.eq.s32.totalorder %s19, 0
      %p39 = por %p37, %p38
      %p40 = scmp.ne.s32.totalorder %s29, %s32
      %p41 = scmp.eq.s32.totalorder %s24, 1
      %p42 = por %p40, %p41
      %p43 = scmp.ne.s32.totalorder %s32, %s33
      %p44 = scmp.eq.s32.totalorder %s24, 0
      %p45 = por %p43, %p44
      %p46 = scmp.ne.s32.totalorder %s32, %s33
      %p47 = scmp.eq.s32.totalorder %s25, 1
      %p48 = por %p46, %p47
      %p50 = scmp.ne.s32.totalorder %s33, %s49
      %p51 = scmp.eq.s32.totalorder %s25, 0
      %p52 = por %p50, %p51
      %s54 = sadd.s32 %s53, 1
      %p57 = scmp.eq.s32.totalorder %s19, 1
      %p58 = scmp.ne.s32.totalorder %s53, %s55
      %p59 = scmp.eq.s32.totalorder %s19, 0
      %p60 = por %p58, %p59
      %p61 = scmp.ne.s32.totalorder %s53, %s55
      %p62 = scmp.eq.s32.totalorder %s24, 1
      %p63 = por %p61, %p62
      %p64 = scmp.ne.s32.totalorder %s55, %s56
      %p65 = scmp.eq.s32.totalorder %s24, 0
      %p66 = por %p64, %p65
      %p67 = scmp.ne.s32.totalorder %s55, %s56
      %p68 = scmp.eq.s32.totalorder %s25, 1
      %p69 = por %p67, %p68
      %p71 = scmp.ne.s32.totalorder %s56, %s70
      %p72 = scmp.eq.s32.totalorder %s25, 0
      %p73 = por %p71, %p72
      %s75 = sadd.s32 %s74, 1
      %p78 = scmp.eq.s32.totalorder %s19, 1
      %p79 = scmp.ne.s32.totalorder %s74, %s76
      %p80 = scmp.eq.s32.totalorder %s19, 0
      %p81 = por %p79, %p80
      %p82 = scmp.ne.s32.totalorder %s74, %s76
      %p83 = scmp.eq.s32.totalorder %s24, 1
      %p84 = por %p82, %p83
      %p85 = scmp.ne.s32.totalorder %s76, %s77
      %p86 = scmp.eq.s32.totalorder %s24, 0
      %p87 = por %p85, %p86
      %p88 = scmp.ne.s32.totalorder %s76, %s77
      %p89 = scmp.eq.s32.totalorder %s25, 1
      %p90 = por %p88, %p89
      %p92 = scmp.ne.s32.totalorder %s77, %s91
      %p93 = scmp.eq.s32.totalorder %s25, 0
      %p94 = por %p92, %p93
      %s96 = sadd.s32 %s95, 1
      %p99 = scmp.eq.s32.totalorder %s19, 1
      %p100 = scmp.ne.s32.totalorder %s95, %s97
      %p101 = scmp.eq.s32.totalorder %s19, 0
      %p102 = por %p100, %p101
      %p103 = scmp.ne.s32.totalorder %s95, %s97
      %p104 = scmp.eq.s32.totalorder %s24, 1
      %p105 = por %p103, %p104
      %p106 = scmp.ne.s32.totalorder %s97, %s98
      %p107 = scmp.eq.s32.totalorder %s24, 0
      %p108 = por %p106, %p107
      %p109 = scmp.ne.s32.totalorder %s97, %s98
      %p110 = scmp.eq.s32.totalorder %s25, 1
      %p111 = por %p109, %p110
      %p113 = scmp.ne.s32.totalorder %s98, %s112
      %p114 = scmp.eq.s32.totalorder %s25, 0
      %p115 = por %p113, %p114
      %s117 = sadd.s32 %s116, 1
      %p120 = scmp.eq.s32.totalorder %s19, 1
      %p121 = scmp.ne.s32.totalorder %s116, %s118
      %p122 = scmp.eq.s32.totalorder %s19, 0
      %p123 = por %p121, %p122
      %p124 = scmp.ne.s32.totalorder %s116, %s118
      %p125 = scmp.eq.s32.totalorder %s24, 1
      %p126 = por %p124, %p125
      %p127 = scmp.ne.s32.totalorder %s118, %s119
      %p128 = scmp.eq.s32.totalorder %s24, 0
      %p129 = por %p127, %p128
      %p130 = scmp.ne.s32.totalorder %s118, %s119
      %p131 = scmp.eq.s32.totalorder %s25, 1
      %p132 = por %p130, %p131
      %p134 = scmp.ne.s32.totalorder %s119, %s133
      %p135 = scmp.eq.s32.totalorder %s25, 0
      %p136 = por %p134, %p135
      %s137 = ssub.s32 %s19, %s26
      %p138 = scmp.eq.s32.totalorder %s137, 0
      %s140 = sadd.s32 %s139, 1
      %s141 = scalar_select %p138, %s139, %s140
      %p144 = pneg %p138
      %p145 = scmp.eq.s32.totalorder %s19, 1
      %p146 = por %p144, %p145
      %p147 = scmp.ne.s32.totalorder %s139, %s142
      %p148 = scmp.eq.s32.totalorder %s19, 0
      %p149 = por %p147, %p148
      %p150 = scmp.ne.s32.totalorder %s139, %s142
      %p151 = scmp.eq.s32.totalorder %s24, 1
      %p152 = por %p150, %p151
      %p153 = scmp.ne.s32.totalorder %s142, %s143
      %p154 = scmp.eq.s32.totalorder %s24, 0
      %p155 = por %p153, %p154
      %p156 = scmp.ne.s32.totalorder %s142, %s143
      %p157 = scmp.eq.s32.totalorder %s25, 1
      %p158 = por %p156, %p157
      %p160 = scmp.ne.s32.totalorder %s143, %s159
      %p161 = scmp.eq.s32.totalorder %s25, 0
      %p162 = por %p160, %p161
      %p163 = scmp.le.s32.totalorder 1, %s19
      %p164 = scmp.lt.s32.totalorder %s19, 3
      %p165 = pnand %p163, %p164
      %p166 = pneg %p165
      // Predicated region
      $region9: #{tpu_custom_call.1} parent=5 // pred_check
        _
      $region10: #{tpu_custom_call.1} parent=5 // pred_check_branch
        %168 = sbr.rel (%p165) target = $region12
      $region11: #{tpu_custom_call.1} parent=5 // pred_region
        %s169 = ssub.s32 %s19, 1
        // Predicated region
        $region13: #{tpu_custom_call.1} parent=11 // pred_check
          %p170 = pneg %p66
        $region14: #{tpu_custom_call.1} parent=11 // pred_check_branch
          %172 = sbr.rel (%p170) target = $region16
        $region15: #{tpu_custom_call.1} parent=11 // pred_region
          %s174 = ssub.s32 320, 320
          %175 = vsyncadd [#allocation8], %s174
          %s176 = sshll.u32 [#allocation7], 4
          %s177 = int_to_ptr.vmem [resolvable:$true] %s176
          %182 = dma.hbm_to_vmem [thread:$0]  %s1, 320, %s177, [#allocation8], 64, 64, 4
        $region16: #{tpu_custom_call.1} parent=11 // pred_fallthru
          _
        // Predicated region
        $region17: #{tpu_custom_call.1} parent=11 // pred_check
          %p183 = pneg %p87
        $region18: #{tpu_custom_call.1} parent=11 // pred_check_branch
          %185 = sbr.rel (%p183) target = $region20
        $region19: #{tpu_custom_call.1} parent=11 // pred_region
          %s187 = ssub.s32 16, 16
          %188 = vsyncadd [#allocation8], %s187
          %s190 = sshll.u32 [#allocation9], 4
          %s191 = int_to_ptr.vmem [resolvable:$true] %s190
          %193 = dma.hbm_to_vmem [thread:$0]  %s2, 16, %s191, [#allocation8]
        $region20: #{tpu_custom_call.1} parent=11 // pred_fallthru
          _
        // Predicated region
        $region21: #{tpu_custom_call.1} parent=11 // pred_check
          %p194 = pneg %p108
        $region22: #{tpu_custom_call.1} parent=11 // pred_check_branch
          %196 = sbr.rel (%p194) target = $region24
        $region23: #{tpu_custom_call.1} parent=11 // pred_region
          %s198 = ssub.s32 9216, 9216
          %199 = vsyncadd [#allocation11], %s198
          %s200 = sshll.u32 [#allocation10], 4
          %s201 = int_to_ptr.vmem [resolvable:$true] %s200
          %206 = dma.hbm_to_vmem [thread:$0]  %s3, 9216, %s201, [#allocation11], 64, 64, 4
        $region24: #{tpu_custom_call.1} parent=11 // pred_fallthru
          _
        // Predicated region
        $region25: #{tpu_custom_call.1} parent=11 // pred_check
          %p207 = pneg %p129
        $region26: #{tpu_custom_call.1} parent=11 // pred_check_branch
          %209 = sbr.rel (%p207) target = $region28
        $region27: #{tpu_custom_call.1} parent=11 // pred_region
          %s211 = ssub.s32 16, 16
          %212 = vsyncadd [#allocation11], %s211
          %s214 = sshll.u32 [#allocation12], 4
          %s215 = int_to_ptr.vmem [resolvable:$true] %s214
          %217 = dma.hbm_to_vmem [thread:$0]  %s4, 16, %s215, [#allocation11]
        $region28: #{tpu_custom_call.1} parent=11 // pred_fallthru
          _
      $region12: #{tpu_custom_call.1} parent=5 // pred_fallthru
        _
      %p218 = scmp.lt.s32.totalorder %s19, 2
      // Predicated region
      $region29: #{tpu_custom_call.1} parent=5 // pred_check
        %p219 = pneg %p218
      $region30: #{tpu_custom_call.1} parent=5 // pred_check_branch
        %221 = sbr.rel (%p219) target = $region32
      $region31: #{tpu_custom_call.1} parent=5 // pred_region
        // Predicated region
        $region33: #{tpu_custom_call.1} parent=31 // pred_check
          %p222 = pneg %p39
        $region34: #{tpu_custom_call.1} parent=31 // pred_check_branch
          %224 = sbr.rel (%p222) target = $region36
        $region35: #{tpu_custom_call.1} parent=31 // pred_region
          %s225 = sand.u32 %s29, 1
          %s226 = scalar_lea.sflag [#allocation5], %s225
          %s227 = sand.u32 %s29, 1
          %s228 = smul.addr %s227, 256
          %s229 = scalar_lea.vmem [#allocation4], %s228
          %s231 = ssub.s32 4096, 4096
          %232 = vsyncadd %s226, %s231
          %s233 = smul.addr %s19, 32
          %s234 = smul.addr %s233, 128
          %s235 = scalar_lea.hbm %s0, %s234
          %s236 = sshll.u32 %s229, 4
          %s237 = int_to_ptr.vmem [resolvable:$true] %s236
          %242 = dma.hbm_to_vmem [thread:$0]  %s235, 4096, %s237, %s226, 128, 128, 8
        $region36: #{tpu_custom_call.1} parent=31 // pred_fallthru
          _
      $region32: #{tpu_custom_call.1} parent=5 // pred_fallthru
        _
      %p243 = scmp.le.s32.totalorder 1, %s19
      %p244 = scmp.lt.s32.totalorder %s19, 3
      %p245 = pnand %p243, %p244
      %p246 = pneg %p245
      // Predicated region
      $region37: #{tpu_custom_call.1} parent=5 // pred_check
        _
      $region38: #{tpu_custom_call.1} parent=5 // pred_check_branch
        %248 = sbr.rel (%p245) target = $region40
      $region39: #{tpu_custom_call.1} parent=5 // pred_region
        %s249 = ssub.s32 %s19, 1
        %s250 = sand.u32 %s32, 1
        %s251 = scalar_lea.sflag [#allocation5], %s250
        %s252 = sand.u32 %s32, 1
        %s253 = smul.addr %s252, 256
        %s254 = scalar_lea.vmem [#allocation4], %s253
        // Predicated region
        $region41: #{tpu_custom_call.1} parent=39 // pred_check
          %p255 = pneg %p45
        $region42: #{tpu_custom_call.1} parent=39 // pred_check_branch
          %257 = sbr.rel (%p255) target = $region44
        $region43: #{tpu_custom_call.1} parent=39 // pred_region
          %258 = dma.done %s251, 4096
        $region44: #{tpu_custom_call.1} parent=39 // pred_fallthru
          _
        // Predicated region
        $region45: #{tpu_custom_call.1} parent=39 // pred_check
          %p259 = pneg %p66
        $region46: #{tpu_custom_call.1} parent=39 // pred_check_branch
          %261 = sbr.rel (%p259) target = $region48
        $region47: #{tpu_custom_call.1} parent=39 // pred_region
          %262 = dma.done [#allocation8], 320
        $region48: #{tpu_custom_call.1} parent=39 // pred_fallthru
          _
        // Predicated region
        $region49: #{tpu_custom_call.1} parent=39 // pred_check
          %p263 = pneg %p87
        $region50: #{tpu_custom_call.1} parent=39 // pred_check_branch
          %265 = sbr.rel (%p263) target = $region52
        $region51: #{tpu_custom_call.1} parent=39 // pred_region
          %266 = dma.done [#allocation8], 16
        $region52: #{tpu_custom_call.1} parent=39 // pred_fallthru
          _
        // Predicated region
        $region53: #{tpu_custom_call.1} parent=39 // pred_check
          %p267 = pneg %p108
        $region54: #{tpu_custom_call.1} parent=39 // pred_check_branch
          %269 = sbr.rel (%p267) target = $region56
        $region55: #{tpu_custom_call.1} parent=39 // pred_region
          %270 = dma.done [#allocation11], 9216
        $region56: #{tpu_custom_call.1} parent=39 // pred_fallthru
          _
        // Predicated region
        $region57: #{tpu_custom_call.1} parent=39 // pred_check
          %p271 = pneg %p129
        $region58: #{tpu_custom_call.1} parent=39 // pred_check_branch
          %273 = sbr.rel (%p271) target = $region60
        $region59: #{tpu_custom_call.1} parent=39 // pred_region
          %274 = dma.done [#allocation11], 16
        $region60: #{tpu_custom_call.1} parent=39 // pred_fallthru
          _
        %s275 = sand.u32 %s32, 1
        %s276 = scalar_lea.sflag [#allocation5], %s275
        %s277 = sand.u32 %s32, 1
        %s278 = smul.addr %s277, 256
        %s279 = scalar_lea.vmem [#allocation4], %s278
        %p280 = pneg %p45
        %p281 = pneg %p42
        %p282 = pneg %p66
        %p283 = pneg %p63
        %p284 = pneg %p87
        %p285 = pneg %p84
        %p286 = pneg %p108
        %p287 = pneg %p105
        %p288 = pneg %p129
        %p289 = pneg %p126
        %p290 = pneg %p155
        %p291 = pneg %p152
        %s292 = sand.u32 %s142, 1
        %s293 = scalar_lea.sflag [#allocation6], %s292
        %s294 = sand.u32 %s142, 1
        %s295 = smul.addr %s294, 256
        %s296 = scalar_lea.vmem [#allocation13], %s295
        %vm298 = vcmask 27648
        %299 = vst.msk [vmem:[#allocation2] sm:$0xf] %vm298, 0
        %300 = vst.msk [vmem:[#allocation2 + $0x4] sm:$0xf] %vm298, 0
        %301 = vst.msk [vmem:[#allocation2 + $0x8] sm:$0xf] %vm298, 0
        %302 = vst.msk [vmem:[#allocation2 + $0xc] sm:$0xf] %vm298, 0
        %303 = vst.msk [vmem:[#allocation2 + $0x10] sm:$0xf] %vm298, 0
        %304 = vst.msk [vmem:[#allocation2 + $0x14] sm:$0xf] %vm298, 0
        %305 = vst.msk [vmem:[#allocation2 + $0x18] sm:$0xf] %vm298, 0
        %306 = vst.msk [vmem:[#allocation2 + $0x1c] sm:$0xf] %vm298, 0
        %307 = vst.msk [vmem:[#allocation2 + $0x20] sm:$0xf] %vm298, 0
        %308 = vst.msk [vmem:[#allocation2 + $0x24] sm:$0xf] %vm298, 0
        %309 = vst.msk [vmem:[#allocation2 + $0x28] sm:$0xf] %vm298, 0
        %310 = vst.msk [vmem:[#allocation2 + $0x2c] sm:$0xf] %vm298, 0
        %311 = vst.msk [vmem:[#allocation2 + $0x30] sm:$0xf] %vm298, 0
        %312 = vst.msk [vmem:[#allocation2 + $0x34] sm:$0xf] %vm298, 0
        %313 = vst.msk [vmem:[#allocation2 + $0x38] sm:$0xf] %vm298, 0
        %314 = vst.msk [vmem:[#allocation2 + $0x3c] sm:$0xf] %vm298, 0
        %315 = vst.msk [vmem:[#allocation2 + $0x40] sm:$0xf] %vm298, 0
        %316 = vst.msk [vmem:[#allocation2 + $0x44] sm:$0xf] %vm298, 0
        %317 = vst.msk [vmem:[#allocation2 + $0x48] sm:$0xf] %vm298, 0
        %318 = vst.msk [vmem:[#allocation2 + $0x4c] sm:$0xf] %vm298, 0
        %319 = vst.msk [vmem:[#allocation2 + $0x50] sm:$0xf] %vm298, 0
        %320 = vst.msk [vmem:[#allocation2 + $0x54] sm:$0xf] %vm298, 0
        %321 = vst.msk [vmem:[#allocation2 + $0x58] sm:$0xf] %vm298, 0
        %322 = vst.msk [vmem:[#allocation2 + $0x5c] sm:$0xf] %vm298, 0
        %323 = vst.msk [vmem:[#allocation2 + $0x60] sm:$0xf] %vm298, 0
        %324 = vst.msk [vmem:[#allocation2 + $0x64] sm:$0xf] %vm298, 0
        %325 = vst.msk [vmem:[#allocation2 + $0x68] sm:$0xf] %vm298, 0
        %326 = vst.msk [vmem:[#allocation2 + $0x6c] sm:$0xf] %vm298, 0
        %327 = vst.msk [vmem:[#allocation2 + $0x70] sm:$0xf] %vm298, 0
        %328 = vst.msk [vmem:[#allocation2 + $0x74] sm:$0xf] %vm298, 0
        %329 = vst.msk [vmem:[#allocation2 + $0x78] sm:$0xf] %vm298, 0
        %330 = vst.msk [vmem:[#allocation2 + $0x7c] sm:$0xf] %vm298, 0
        %331 = vst.msk [vmem:[#allocation2 + $0x80] sm:$0xf] %vm298, 0
        %332 = vst.msk [vmem:[#allocation2 + $0x84] sm:$0xf] %vm298, 0
        %333 = vst.msk [vmem:[#allocation2 + $0x88] sm:$0xf] %vm298, 0
        %334 = vst.msk [vmem:[#allocation2 + $0x8c] sm:$0xf] %vm298, 0
        %335 = vst.msk [vmem:[#allocation2 + $0x90] sm:$0xf] %vm298, 0
        %336 = vst.msk [vmem:[#allocation2 + $0x94] sm:$0xf] %vm298, 0
        %337 = vst.msk [vmem:[#allocation2 + $0x98] sm:$0xf] %vm298, 0
        %338 = vst.msk [vmem:[#allocation2 + $0x9c] sm:$0xf] %vm298, 0
        %339 = vst.msk [vmem:[#allocation2 + $0xa0] sm:$0xf] %vm298, 0
        %340 = vst.msk [vmem:[#allocation2 + $0xa4] sm:$0xf] %vm298, 0
        %341 = vst.msk [vmem:[#allocation2 + $0xa8] sm:$0xf] %vm298, 0
        %342 = vst.msk [vmem:[#allocation2 + $0xac] sm:$0xf] %vm298, 0
        %343 = vst.msk [vmem:[#allocation2 + $0xb0] sm:$0xf] %vm298, 0
        %344 = vst.msk [vmem:[#allocation2 + $0xb4] sm:$0xf] %vm298, 0
        %345 = vst.msk [vmem:[#allocation2 + $0xb8] sm:$0xf] %vm298, 0
        %346 = vst.msk [vmem:[#allocation2 + $0xbc] sm:$0xf] %vm298, 0
        %347 = vst.msk [vmem:[#allocation2 + $0xc0] sm:$0xf] %vm298, 0
        %348 = vst.msk [vmem:[#allocation2 + $0xc4] sm:$0xf] %vm298, 0
        %349 = vst.msk [vmem:[#allocation2 + $0xc8] sm:$0xf] %vm298, 0
        %350 = vst.msk [vmem:[#allocation2 + $0xcc] sm:$0xf] %vm298, 0
        %351 = vst.msk [vmem:[#allocation2 + $0xd0] sm:$0xf] %vm298, 0
        %352 = vst.msk [vmem:[#allocation2 + $0xd4] sm:$0xf] %vm298, 0
        %353 = vst [vmem:[#allocation3] sm:$0xf] 0
        %354 = vst [vmem:[#allocation3 + $0x4] sm:$0xf] 0
        %355 = vst [vmem:[#allocation3 + $0x8] sm:$0xf] 0
        %356 = vst [vmem:[#allocation3 + $0xc] sm:$0xf] 0
        %357 = vst [vmem:[#allocation3 + $0x10] sm:$0xf] 0
        %358 = vst [vmem:[#allocation3 + $0x14] sm:$0xf] 0
        %359 = vst [vmem:[#allocation3 + $0x18] sm:$0xf] 0
        %360 = vst [vmem:[#allocation3 + $0x1c] sm:$0xf] 0
        %361 = vst [vmem:[#allocation3 + $0x20] sm:$0xf] 0
        %362 = vst [vmem:[#allocation3 + $0x24] sm:$0xf] 0
        %363 = vst [vmem:[#allocation3 + $0x28] sm:$0xf] 0
        %364 = vst [vmem:[#allocation3 + $0x2c] sm:$0xf] 0
        %365 = vst [vmem:[#allocation3 + $0x30] sm:$0xf] 0
        %366 = vst [vmem:[#allocation3 + $0x34] sm:$0xf] 0
        %367 = vst [vmem:[#allocation3 + $0x38] sm:$0xf] 0
        %368 = vst [vmem:[#allocation3 + $0x3c] sm:$0xf] 0
        %369 = vst [vmem:[#allocation3 + $0x40] sm:$0xf] 0
        %370 = vst [vmem:[#allocation3 + $0x44] sm:$0xf] 0
        %371 = vst [vmem:[#allocation3 + $0x48] sm:$0xf] 0
        %372 = vst [vmem:[#allocation3 + $0x4c] sm:$0xf] 0
        %373 = vst [vmem:[#allocation3 + $0x50] sm:$0xf] 0
        %374 = vst [vmem:[#allocation3 + $0x54] sm:$0xf] 0
        %375 = vst [vmem:[#allocation3 + $0x58] sm:$0xf] 0
        %376 = vst [vmem:[#allocation3 + $0x5c] sm:$0xf] 0
        %377 = vst [vmem:[#allocation3 + $0x60] sm:$0xf] 0
        %378 = vst [vmem:[#allocation3 + $0x64] sm:$0xf] 0
        %379 = vst [vmem:[#allocation3 + $0x68] sm:$0xf] 0
        %380 = vst [vmem:[#allocation3 + $0x6c] sm:$0xf] 0
        %381 = vst [vmem:[#allocation3 + $0x70] sm:$0xf] 0
        %382 = vst [vmem:[#allocation3 + $0x74] sm:$0xf] 0
        %383 = vst [vmem:[#allocation3 + $0x78] sm:$0xf] 0
        %384 = vst [vmem:[#allocation3 + $0x7c] sm:$0xf] 0
        %385 = vst [vmem:[#allocation3 + $0x80] sm:$0xf] 0
        %386 = vst [vmem:[#allocation3 + $0x84] sm:$0xf] 0
        %387 = vst [vmem:[#allocation3 + $0x88] sm:$0xf] 0
        %388 = vst [vmem:[#allocation3 + $0x8c] sm:$0xf] 0
        %389 = vst [vmem:[#allocation3 + $0x90] sm:$0xf] 0
        %390 = vst [vmem:[#allocation3 + $0x94] sm:$0xf] 0
        %391 = vst [vmem:[#allocation3 + $0x98] sm:$0xf] 0
        %392 = vst [vmem:[#allocation3 + $0x9c] sm:$0xf] 0
        %393 = vst [vmem:[#allocation3 + $0xa0] sm:$0xf] 0
        %394 = vst [vmem:[#allocation3 + $0xa4] sm:$0xf] 0
        %395 = vst [vmem:[#allocation3 + $0xa8] sm:$0xf] 0
        %396 = vst [vmem:[#allocation3 + $0xac] sm:$0xf] 0
        %397 = vst [vmem:[#allocation3 + $0xb0] sm:$0xf] 0
        %398 = vst [vmem:[#allocation3 + $0xb4] sm:$0xf] 0
        %399 = vst [vmem:[#allocation3 + $0xb8] sm:$0xf] 0
        %400 = vst [vmem:[#allocation3 + $0xbc] sm:$0xf] 0
        %401 = vst [vmem:[#allocation3 + $0xc0] sm:$0xf] 0
        %402 = vst [vmem:[#allocation3 + $0xc4] sm:$0xf] 0
        %403 = vst [vmem:[#allocation3 + $0xc8] sm:$0xf] 0
        %404 = vst [vmem:[#allocation3 + $0xcc] sm:$0xf] 0
        %405 = vst [vmem:[#allocation3 + $0xd0] sm:$0xf] 0
        %406 = vst [vmem:[#allocation3 + $0xd4] sm:$0xf] 0
        %v407 = vld [vmem:[%s254] sm:$0xff]
        %v408 = vld [vmem:[%s254 + $0x8] sm:$0xff]
        %v409 = vld [vmem:[%s254 + $0x10] sm:$0xff]
        %v410 = vld [vmem:[%s254 + $0x18] sm:$0xff]
        %v411 = vld [vmem:[%s254 + $0x20] sm:$0xff]
        %v412 = vld [vmem:[%s254 + $0x28] sm:$0xff]
        %v413 = vld [vmem:[%s254 + $0x30] sm:$0xff]
        %v414 = vld [vmem:[%s254 + $0x38] sm:$0xff]
        %v415 = vld [vmem:[%s254 + $0x40] sm:$0xff]
        %v416 = vld [vmem:[%s254 + $0x48] sm:$0xff]
        %v417 = vld [vmem:[%s254 + $0x50] sm:$0xff]
        %v418 = vld [vmem:[%s254 + $0x58] sm:$0xff]
        %v419 = vld [vmem:[%s254 + $0x60] sm:$0xff]
        %v420 = vld [vmem:[%s254 + $0x68] sm:$0xff]
        %v421 = vld [vmem:[%s254 + $0x70] sm:$0xff]
        %v422 = vld [vmem:[%s254 + $0x78] sm:$0xff]
        %v423 = vld [vmem:[%s254 + $0x80] sm:$0xff]
        %v424 = vld [vmem:[%s254 + $0x88] sm:$0xff]
        %v425 = vld [vmem:[%s254 + $0x90] sm:$0xff]
        %v426 = vld [vmem:[%s254 + $0x98] sm:$0xff]
        %v427 = vld [vmem:[%s254 + $0xa0] sm:$0xff]
        %v428 = vld [vmem:[%s254 + $0xa8] sm:$0xff]
        %v429 = vld [vmem:[%s254 + $0xb0] sm:$0xff]
        %v430 = vld [vmem:[%s254 + $0xb8] sm:$0xff]
        %v431 = vld [vmem:[%s254 + $0xc0] sm:$0xff]
        %v432 = vld [vmem:[%s254 + $0xc8] sm:$0xff]
        %v433 = vld [vmem:[%s254 + $0xd0] sm:$0xff]
        %v434 = vld [vmem:[%s254 + $0xd8] sm:$0xff]
        %v435 = vld [vmem:[%s254 + $0xe0] sm:$0xff]
        %v436 = vld [vmem:[%s254 + $0xe8] sm:$0xff]
        %v437 = vld [vmem:[%s254 + $0xf0] sm:$0xff]
        %v438 = vld [vmem:[%s254 + $0xf8] sm:$0xff]
        %v439 = vpack.c.bf16 %v408, %v407
        %v440 = vpack.c.bf16 %v410, %v409
        %v441 = vpack.c.bf16 %v412, %v411
        %v442 = vpack.c.bf16 %v414, %v413
        %v443 = vpack.c.bf16 %v416, %v415
        %v444 = vpack.c.bf16 %v418, %v417
        %v445 = vpack.c.bf16 %v420, %v419
        %v446 = vpack.c.bf16 %v422, %v421
        %v447 = vpack.c.bf16 %v424, %v423
        %v448 = vpack.c.bf16 %v426, %v425
        %v449 = vpack.c.bf16 %v428, %v427
        %v450 = vpack.c.bf16 %v430, %v429
        %v451 = vpack.c.bf16 %v432, %v431
        %v452 = vpack.c.bf16 %v434, %v433
        %v453 = vpack.c.bf16 %v436, %v435
        %v454 = vpack.c.bf16 %v438, %v437
        %v471 = vunpack.c.l.b16 %v439
        %v472 = vunpack.c.h.b16 %v439
        %v473 = vunpack.c.l.b16 %v440
        %v474 = vunpack.c.h.b16 %v440
        %v475 = vunpack.c.l.b16 %v441
        %v476 = vunpack.c.h.b16 %v441
        %v477 = vunpack.c.l.b16 %v442
        %v478 = vunpack.c.h.b16 %v442
        %v479 = vunpack.c.l.b16 %v443
        %v480 = vunpack.c.h.b16 %v443
        %v481 = vunpack.c.l.b16 %v444
        %v482 = vunpack.c.h.b16 %v444
        %v483 = vunpack.c.l.b16 %v445
        %v484 = vunpack.c.h.b16 %v445
        %v485 = vunpack.c.l.b16 %v446
        %v486 = vunpack.c.h.b16 %v446
        %v487 = vunpack.c.l.b16 %v447
        %v488 = vunpack.c.h.b16 %v447
        %v489 = vunpack.c.l.b16 %v448
        %v490 = vunpack.c.h.b16 %v448
        %v491 = vunpack.c.l.b16 %v449
        %v492 = vunpack.c.h.b16 %v449
        %v493 = vunpack.c.l.b16 %v450
        %v494 = vunpack.c.h.b16 %v450
        %v495 = vunpack.c.l.b16 %v451
        %v496 = vunpack.c.h.b16 %v451
        %v497 = vunpack.c.l.b16 %v452
        %v498 = vunpack.c.h.b16 %v452
        %v499 = vunpack.c.l.b16 %v453
        %v500 = vunpack.c.h.b16 %v453
        %v501 = vunpack.c.l.b16 %v454
        %v502 = vunpack.c.h.b16 %v454
        %v503 = vpack.c.b16 %v471, %v471
        %v504 = vpack.c.b16 %v472, %v472
        %v505 = vpack.c.b16 %v473, %v473
        %v506 = vpack.c.b16 %v474, %v474
        %v507 = vpack.c.b16 %v475, %v475
        %v508 = vpack.c.b16 %v476, %v476
        %v509 = vpack.c.b16 %v477, %v477
        %v510 = vpack.c.b16 %v478, %v478
        %v511 = vpack.c.b16 %v479, %v479
        %v512 = vpack.c.b16 %v480, %v480
        %v513 = vpack.c.b16 %v481, %v481
        %v514 = vpack.c.b16 %v482, %v482
        %v515 = vpack.c.b16 %v483, %v483
        %v516 = vpack.c.b16 %v484, %v484
        %v517 = vpack.c.b16 %v485, %v485
        %v518 = vpack.c.b16 %v486, %v486
        %v519 = vpack.c.b16 %v487, %v487
        %v520 = vpack.c.b16 %v488, %v488
        %v521 = vpack.c.b16 %v489, %v489
        %v522 = vpack.c.b16 %v490, %v490
        %v523 = vpack.c.b16 %v491, %v491
        %v524 = vpack.c.b16 %v492, %v492
        %v525 = vpack.c.b16 %v493, %v493
        %v526 = vpack.c.b16 %v494, %v494
        %v527 = vpack.c.b16 %v495, %v495
        %v528 = vpack.c.b16 %v496, %v496
        %v529 = vpack.c.b16 %v497, %v497
        %v530 = vpack.c.b16 %v498, %v498
        %v531 = vpack.c.b16 %v499, %v499
        %v532 = vpack.c.b16 %v500, %v500
        %v533 = vpack.c.b16 %v501, %v501
        %v534 = vpack.c.b16 %v502, %v502
        %vm535 = vsmask.f32 256
        %vm536 = vsmask.f32 4368
        %vm537 = vmor %vm535, %vm536
        %v539 = vshrl.u32 %v503, 16
        %v541 = vrot.slane %v539, 7
        %v542 = vshll.u32 %v503, 16
        %v544 = vor.u32 %v541, %v542
        %v545 = vrot.slane %v541, 4
        %v547 = vshrl.u32 %v504, 16
        %v549 = vrot.slane %v547, 7
        %v550 = vshll.u32 %v504, 16
        %v552 = vor.u32 %v549, %v550
        %v553 = vsel %vm537, %v545, %v552
        %v554 = vrot.slane %v549, 4
        %v556 = vshrl.u32 %v505, 16
        %v558 = vrot.slane %v556, 7
        %v559 = vshll.u32 %v505, 16
        %v561 = vor.u32 %v558, %v559
        %v562 = vrot.slane %v558, 4
        %v564 = vshrl.u32 %v506, 16
        %v566 = vrot.slane %v564, 7
        %v567 = vshll.u32 %v506, 16
        %v569 = vor.u32 %v566, %v567
        %v570 = vsel %vm537, %v562, %v569
        %v571 = vrot.slane %v566, 4
        %v573 = vshrl.u32 %v507, 16
        %v575 = vrot.slane %v573, 7
        %v576 = vshll.u32 %v507, 16
        %v578 = vor.u32 %v575, %v576
        %v579 = vrot.slane %v575, 4
        %v581 = vshrl.u32 %v508, 16
        %v583 = vrot.slane %v581, 7
        %v584 = vshll.u32 %v508, 16
        %v586 = vor.u32 %v583, %v584
        %v587 = vsel %vm537, %v579, %v586
        %v588 = vrot.slane %v583, 4
        %v590 = vshrl.u32 %v509, 16
        %v592 = vrot.slane %v590, 7
        %v593 = vshll.u32 %v509, 16
        %v595 = vor.u32 %v592, %v593
        %v596 = vrot.slane %v592, 4
        %v598 = vshrl.u32 %v510, 16
        %v600 = vrot.slane %v598, 7
        %v601 = vshll.u32 %v510, 16
        %v603 = vor.u32 %v600, %v601
        %v604 = vsel %vm537, %v596, %v603
        %v605 = vrot.slane %v600, 4
        %v607 = vshrl.u32 %v511, 16
        %v609 = vrot.slane %v607, 7
        %v610 = vshll.u32 %v511, 16
        %v612 = vor.u32 %v609, %v610
        %v613 = vrot.slane %v609, 4
        %v615 = vshrl.u32 %v512, 16
        %v617 = vrot.slane %v615, 7
        %v618 = vshll.u32 %v512, 16
        %v620 = vor.u32 %v617, %v618
        %v621 = vsel %vm537, %v613, %v620
        %v622 = vrot.slane %v617, 4
        %v624 = vshrl.u32 %v513, 16
        %v626 = vrot.slane %v624, 7
        %v627 = vshll.u32 %v513, 16
        %v629 = vor.u32 %v626, %v627
        %v630 = vrot.slane %v626, 4
        %v632 = vshrl.u32 %v514, 16
        %v634 = vrot.slane %v632, 7
        %v635 = vshll.u32 %v514, 16
        %v637 = vor.u32 %v634, %v635
        %v638 = vsel %vm537, %v630, %v637
        %v639 = vrot.slane %v634, 4
        %v641 = vshrl.u32 %v515, 16
        %v643 = vrot.slane %v641, 7
        %v644 = vshll.u32 %v515, 16
        %v646 = vor.u32 %v643, %v644
        %v647 = vrot.slane %v643, 4
        %v649 = vshrl.u32 %v516, 16
        %v651 = vrot.slane %v649, 7
        %v652 = vshll.u32 %v516, 16
        %v654 = vor.u32 %v651, %v652
        %v655 = vsel %vm537, %v647, %v654
        %v656 = vrot.slane %v651, 4
        %v658 = vshrl.u32 %v517, 16
        %v660 = vrot.slane %v658, 7
        %v661 = vshll.u32 %v517, 16
        %v663 = vor.u32 %v660, %v661
        %v664 = vrot.slane %v660, 4
        %v666 = vshrl.u32 %v518, 16
        %v668 = vrot.slane %v666, 7
        %v669 = vshll.u32 %v518, 16
        %v671 = vor.u32 %v668, %v669
        %v672 = vsel %vm537, %v664, %v671
        %v673 = vrot.slane %v668, 4
        %v675 = vshrl.u32 %v519, 16
        %v677 = vrot.slane %v675, 7
        %v678 = vshll.u32 %v519, 16
        %v680 = vor.u32 %v677, %v678
        %v681 = vrot.slane %v677, 4
        %v683 = vshrl.u32 %v520, 16
        %v685 = vrot.slane %v683, 7
        %v686 = vshll.u32 %v520, 16
        %v688 = vor.u32 %v685, %v686
        %v689 = vsel %vm537, %v681, %v688
        %v690 = vrot.slane %v685, 4
        %v692 = vshrl.u32 %v521, 16
        %v694 = vrot.slane %v692, 7
        %v695 = vshll.u32 %v521, 16
        %v697 = vor.u32 %v694, %v695
        %v698 = vrot.slane %v694, 4
        %v700 = vshrl.u32 %v522, 16
        %v702 = vrot.slane %v700, 7
        %v703 = vshll.u32 %v522, 16
        %v705 = vor.u32 %v702, %v703
        %v706 = vsel %vm537, %v698, %v705
        %v707 = vrot.slane %v702, 4
        %v709 = vshrl.u32 %v523, 16
        %v711 = vrot.slane %v709, 7
        %v712 = vshll.u32 %v523, 16
        %v714 = vor.u32 %v711, %v712
        %v715 = vrot.slane %v711, 4
        %v717 = vshrl.u32 %v524, 16
        %v719 = vrot.slane %v717, 7
        %v720 = vshll.u32 %v524, 16
        %v722 = vor.u32 %v719, %v720
        %v723 = vsel %vm537, %v715, %v722
        %v724 = vrot.slane %v719, 4
        %v726 = vshrl.u32 %v525, 16
        %v728 = vrot.slane %v726, 7
        %v729 = vshll.u32 %v525, 16
        %v731 = vor.u32 %v728, %v729
        %v732 = vrot.slane %v728, 4
        %v734 = vshrl.u32 %v526, 16
        %v736 = vrot.slane %v734, 7
        %v737 = vshll.u32 %v526, 16
        %v739 = vor.u32 %v736, %v737
        %v740 = vsel %vm537, %v732, %v739
        %v741 = vrot.slane %v736, 4
        %v743 = vshrl.u32 %v527, 16
        %v745 = vrot.slane %v743, 7
        %v746 = vshll.u32 %v527, 16
        %v748 = vor.u32 %v745, %v746
        %v749 = vrot.slane %v745, 4
        %v751 = vshrl.u32 %v528, 16
        %v753 = vrot.slane %v751, 7
        %v754 = vshll.u32 %v528, 16
        %v756 = vor.u32 %v753, %v754
        %v757 = vsel %vm537, %v749, %v756
        %v758 = vrot.slane %v753, 4
        %v760 = vshrl.u32 %v529, 16
        %v762 = vrot.slane %v760, 7
        %v763 = vshll.u32 %v529, 16
        %v765 = vor.u32 %v762, %v763
        %v766 = vrot.slane %v762, 4
        %v768 = vshrl.u32 %v530, 16
        %v770 = vrot.slane %v768, 7
        %v771 = vshll.u32 %v530, 16
        %v773 = vor.u32 %v770, %v771
        %v774 = vsel %vm537, %v766, %v773
        %v775 = vrot.slane %v770, 4
        %v777 = vshrl.u32 %v531, 16
        %v779 = vrot.slane %v777, 7
        %v780 = vshll.u32 %v531, 16
        %v782 = vor.u32 %v779, %v780
        %v783 = vrot.slane %v779, 4
        %v785 = vshrl.u32 %v532, 16
        %v787 = vrot.slane %v785, 7
        %v788 = vshll.u32 %v532, 16
        %v790 = vor.u32 %v787, %v788
        %v791 = vsel %vm537, %v783, %v790
        %v792 = vrot.slane %v787, 4
        %v794 = vshrl.u32 %v533, 16
        %v796 = vrot.slane %v794, 7
        %v797 = vshll.u32 %v533, 16
        %v799 = vor.u32 %v796, %v797
        %v800 = vrot.slane %v796, 4
        %v802 = vshrl.u32 %v534, 16
        %v804 = vrot.slane %v802, 7
        %v805 = vshll.u32 %v534, 16
        %v807 = vor.u32 %v804, %v805
        %v808 = vsel %vm537, %v800, %v807
        %v809 = vrot.slane %v804, 4
        %s858 = scalar_lea.vmem [#allocation2], 12
        %vm859 = vcmask 27648
        %vm860 = vsmask.f32 7938
        %vm861 = vmand %vm859, %vm860
        %v862 = vld [vmem:[%s858] sm:$0xf]
        %v863 = vsel %vm861, %v544, %v862
        %864 = vst [vmem:[%s858] sm:$0xf] %v863
        %865 = vst.msk [vmem:[%s858 + $0x4] sm:$0xf] %vm298, %v553
        %vm866 = vcmask 24576
        %vm867 = vmand %vm866, %vm535
        %v868 = vld [vmem:[%s858 + $0x8] sm:$0x1]
        %v869 = vsel %vm867, %v554, %v868
        %870 = vst [vmem:[%s858 + $0x8] sm:$0x1] %v869
        %v871 = vld [vmem:[%s858 + $0xc] sm:$0xf]
        %v872 = vsel %vm861, %v561, %v871
        %873 = vst [vmem:[%s858 + $0xc] sm:$0xf] %v872
        %874 = vst.msk [vmem:[%s858 + $0x10] sm:$0xf] %vm298, %v570
        %v875 = vld [vmem:[%s858 + $0x14] sm:$0x1]
        %v876 = vsel %vm867, %v571, %v875
        %877 = vst [vmem:[%s858 + $0x14] sm:$0x1] %v876
        %v878 = vld [vmem:[%s858 + $0x18] sm:$0xf]
        %v879 = vsel %vm861, %v578, %v878
        %880 = vst [vmem:[%s858 + $0x18] sm:$0xf] %v879
        %881 = vst.msk [vmem:[%s858 + $0x1c] sm:$0xf] %vm298, %v587
        %v882 = vld [vmem:[%s858 + $0x20] sm:$0x1]
        %v883 = vsel %vm867, %v588, %v882
        %884 = vst [vmem:[%s858 + $0x20] sm:$0x1] %v883
        %v885 = vld [vmem:[%s858 + $0x24] sm:$0xf]
        %v886 = vsel %vm861, %v595, %v885
        %887 = vst [vmem:[%s858 + $0x24] sm:$0xf] %v886
        %888 = vst.msk [vmem:[%s858 + $0x28] sm:$0xf] %vm298, %v604
        %v889 = vld [vmem:[%s858 + $0x2c] sm:$0x1]
        %v890 = vsel %vm867, %v605, %v889
        %891 = vst [vmem:[%s858 + $0x2c] sm:$0x1] %v890
        %v892 = vld [vmem:[%s858 + $0x30] sm:$0xf]
        %v893 = vsel %vm861, %v612, %v892
        %894 = vst [vmem:[%s858 + $0x30] sm:$0xf] %v893
        %895 = vst.msk [vmem:[%s858 + $0x34] sm:$0xf] %vm298, %v621
        %v896 = vld [vmem:[%s858 + $0x38] sm:$0x1]
        %v897 = vsel %vm867, %v622, %v896
        %898 = vst [vmem:[%s858 + $0x38] sm:$0x1] %v897
        %v899 = vld [vmem:[%s858 + $0x3c] sm:$0xf]
        %v900 = vsel %vm861, %v629, %v899
        %901 = vst [vmem:[%s858 + $0x3c] sm:$0xf] %v900
        %902 = vst.msk [vmem:[%s858 + $0x40] sm:$0xf] %vm298, %v638
        %v903 = vld [vmem:[%s858 + $0x44] sm:$0x1]
        %v904 = vsel %vm867, %v639, %v903
        %905 = vst [vmem:[%s858 + $0x44] sm:$0x1] %v904
        %v906 = vld [vmem:[%s858 + $0x48] sm:$0xf]
        %v907 = vsel %vm861, %v646, %v906
        %908 = vst [vmem:[%s858 + $0x48] sm:$0xf] %v907
        %909 = vst.msk [vmem:[%s858 + $0x4c] sm:$0xf] %vm298, %v655
        %v910 = vld [vmem:[%s858 + $0x50] sm:$0x1]
        %v911 = vsel %vm867, %v656, %v910
        %912 = vst [vmem:[%s858 + $0x50] sm:$0x1] %v911
        %v913 = vld [vmem:[%s858 + $0x54] sm:$0xf]
        %v914 = vsel %vm861, %v663, %v913
        %915 = vst [vmem:[%s858 + $0x54] sm:$0xf] %v914
        %916 = vst.msk [vmem:[%s858 + $0x58] sm:$0xf] %vm298, %v672
        %v917 = vld [vmem:[%s858 + $0x5c] sm:$0x1]
        %v918 = vsel %vm867, %v673, %v917
        %919 = vst [vmem:[%s858 + $0x5c] sm:$0x1] %v918
        %v920 = vld [vmem:[%s858 + $0x60] sm:$0xf]
        %v921 = vsel %vm861, %v680, %v920
        %922 = vst [vmem:[%s858 + $0x60] sm:$0xf] %v921
        %923 = vst.msk [vmem:[%s858 + $0x64] sm:$0xf] %vm298, %v689
        %v924 = vld [vmem:[%s858 + $0x68] sm:$0x1]
        %v925 = vsel %vm867, %v690, %v924
        %926 = vst [vmem:[%s858 + $0x68] sm:$0x1] %v925
        %v927 = vld [vmem:[%s858 + $0x6c] sm:$0xf]
        %v928 = vsel %vm861, %v697, %v927
        %929 = vst [vmem:[%s858 + $0x6c] sm:$0xf] %v928
        %930 = vst.msk [vmem:[%s858 + $0x70] sm:$0xf] %vm298, %v706
        %v931 = vld [vmem:[%s858 + $0x74] sm:$0x1]
        %v932 = vsel %vm867, %v707, %v931
        %933 = vst [vmem:[%s858 + $0x74] sm:$0x1] %v932
        %v934 = vld [vmem:[%s858 + $0x78] sm:$0xf]
        %v935 = vsel %vm861, %v714, %v934
        %936 = vst [vmem:[%s858 + $0x78] sm:$0xf] %v935
        %937 = vst.msk [vmem:[%s858 + $0x7c] sm:$0xf] %vm298, %v723
        %v938 = vld [vmem:[%s858 + $0x80] sm:$0x1]
        %v939 = vsel %vm867, %v724, %v938
        %940 = vst [vmem:[%s858 + $0x80] sm:$0x1] %v939
        %v941 = vld [vmem:[%s858 + $0x84] sm:$0xf]
        %v942 = vsel %vm861, %v731, %v941
        %943 = vst [vmem:[%s858 + $0x84] sm:$0xf] %v942
        %944 = vst.msk [vmem:[%s858 + $0x88] sm:$0xf] %vm298, %v740
        %v945 = vld [vmem:[%s858 + $0x8c] sm:$0x1]
        %v946 = vsel %vm867, %v741, %v945
        %947 = vst [vmem:[%s858 + $0x8c] sm:$0x1] %v946
        %v948 = vld [vmem:[%s858 + $0x90] sm:$0xf]
        %v949 = vsel %vm861, %v748, %v948
        %950 = vst [vmem:[%s858 + $0x90] sm:$0xf] %v949
        %951 = vst.msk [vmem:[%s858 + $0x94] sm:$0xf] %vm298, %v757
        %v952 = vld [vmem:[%s858 + $0x98] sm:$0x1]
        %v953 = vsel %vm867, %v758, %v952
        %954 = vst [vmem:[%s858 + $0x98] sm:$0x1] %v953
        %v955 = vld [vmem:[%s858 + $0x9c] sm:$0xf]
        %v956 = vsel %vm861, %v765, %v955
        %957 = vst [vmem:[%s858 + $0x9c] sm:$0xf] %v956
        %958 = vst.msk [vmem:[%s858 + $0xa0] sm:$0xf] %vm298, %v774
        %v959 = vld [vmem:[%s858 + $0xa4] sm:$0x1]
        %v960 = vsel %vm867, %v775, %v959
        %961 = vst [vmem:[%s858 + $0xa4] sm:$0x1] %v960
        %v962 = vld [vmem:[%s858 + $0xa8] sm:$0xf]
        %v963 = vsel %vm861, %v782, %v962
        %964 = vst [vmem:[%s858 + $0xa8] sm:$0xf] %v963
        %965 = vst.msk [vmem:[%s858 + $0xac] sm:$0xf] %vm298, %v791
        %v966 = vld [vmem:[%s858 + $0xb0] sm:$0x1]
        %v967 = vsel %vm867, %v792, %v966
        %968 = vst [vmem:[%s858 + $0xb0] sm:$0x1] %v967
        %v969 = vld [vmem:[%s858 + $0xb4] sm:$0xf]
        %v970 = vsel %vm861, %v799, %v969
        %971 = vst [vmem:[%s858 + $0xb4] sm:$0xf] %v970
        %972 = vst.msk [vmem:[%s858 + $0xb8] sm:$0xf] %vm298, %v808
        %v973 = vld [vmem:[%s858 + $0xbc] sm:$0x1]
        %v974 = vsel %vm867, %v809, %v973
        %975 = vst [vmem:[%s858 + $0xbc] sm:$0x1] %v974
        %v976 = vld [vmem:[#allocation2] sm:$0xf]
        %v977 = vld [vmem:[#allocation2 + $0x4] sm:$0xf]
        %v978 = vld [vmem:[#allocation2 + $0xc] sm:$0xf]
        %v979 = vld [vmem:[#allocation2 + $0x10] sm:$0xf]
        %v980 = vld [vmem:[#allocation2 + $0x18] sm:$0xf]
        %v981 = vld [vmem:[#allocation2 + $0x1c] sm:$0xf]
        %v982 = vld [vmem:[#allocation2 + $0x24] sm:$0xf]
        %v983 = vld [vmem:[#allocation2 + $0x28] sm:$0xf]
        %v984 = vld [vmem:[#allocation2 + $0x30] sm:$0xf]
        %v985 = vld [vmem:[#allocation2 + $0x34] sm:$0xf]
        %v986 = vld [vmem:[#allocation2 + $0x3c] sm:$0xf]
        %v987 = vld [vmem:[#allocation2 + $0x40] sm:$0xf]
        %v988 = vld [vmem:[#allocation2 + $0x48] sm:$0xf]
        %v989 = vld [vmem:[#allocation2 + $0x4c] sm:$0xf]
        %v990 = vld [vmem:[#allocation2 + $0x54] sm:$0xf]
        %v991 = vld [vmem:[#allocation2 + $0x58] sm:$0xf]
        %v992 = vld [vmem:[#allocation2 + $0x60] sm:$0xf]
        %v993 = vld [vmem:[#allocation2 + $0x64] sm:$0xf]
        %v994 = vld [vmem:[#allocation2 + $0x6c] sm:$0xf]
        %v995 = vld [vmem:[#allocation2 + $0x70] sm:$0xf]
        %v996 = vld [vmem:[#allocation2 + $0x78] sm:$0xf]
        %v997 = vld [vmem:[#allocation2 + $0x7c] sm:$0xf]
        %v998 = vld [vmem:[#allocation2 + $0x84] sm:$0xf]
        %v999 = vld [vmem:[#allocation2 + $0x88] sm:$0xf]
        %v1000 = vld [vmem:[#allocation2 + $0x90] sm:$0xf]
        %v1001 = vld [vmem:[#allocation2 + $0x94] sm:$0xf]
        %v1002 = vld [vmem:[#allocation2 + $0x9c] sm:$0xf]
        %v1003 = vld [vmem:[#allocation2 + $0xa0] sm:$0xf]
        %v1004 = vld [vmem:[#allocation2 + $0xa8] sm:$0xf]
        %v1005 = vld [vmem:[#allocation2 + $0xac] sm:$0xf]
        %v1006 = vld [vmem:[#allocation2 + $0xb4] sm:$0xf]
        %v1007 = vld [vmem:[#allocation2 + $0xb8] sm:$0xf]
        %v1008 = vld [vmem:[#allocation2 + $0x8] sm:$0x1]
        %v1009 = vld [vmem:[#allocation2 + $0x14] sm:$0x1]
        %v1010 = vld [vmem:[#allocation2 + $0x20] sm:$0x1]
        %v1011 = vld [vmem:[#allocation2 + $0x2c] sm:$0x1]
        %v1012 = vld [vmem:[#allocation2 + $0x38] sm:$0x1]
        %v1013 = vld [vmem:[#allocation2 + $0x44] sm:$0x1]
        %v1014 = vld [vmem:[#allocation2 + $0x50] sm:$0x1]
        %v1015 = vld [vmem:[#allocation2 + $0x5c] sm:$0x1]
        %v1016 = vld [vmem:[#allocation2 + $0x68] sm:$0x1]
        %v1017 = vld [vmem:[#allocation2 + $0x74] sm:$0x1]
        %v1018 = vld [vmem:[#allocation2 + $0x80] sm:$0x1]
        %v1019 = vld [vmem:[#allocation2 + $0x8c] sm:$0x1]
        %v1020 = vld [vmem:[#allocation2 + $0x98] sm:$0x1]
        %v1021 = vld [vmem:[#allocation2 + $0xa4] sm:$0x1]
        %v1022 = vld [vmem:[#allocation2 + $0xb0] sm:$0x1]
        %v1023 = vld [vmem:[#allocation2 + $0xbc] sm:$0x1]
        %v1024 = vld [vmem:[#allocation2] sm:$0xe]
        %v1025 = vld [vmem:[#allocation2 + $0xc] sm:$0xe]
        %v1026 = vld [vmem:[#allocation2 + $0x18] sm:$0xe]
        %v1027 = vld [vmem:[#allocation2 + $0x24] sm:$0xe]
        %v1028 = vld [vmem:[#allocation2 + $0x30] sm:$0xe]
        %v1029 = vld [vmem:[#allocation2 + $0x3c] sm:$0xe]
        %v1030 = vld [vmem:[#allocation2 + $0x48] sm:$0xe]
        %v1031 = vld [vmem:[#allocation2 + $0x54] sm:$0xe]
        %v1032 = vld [vmem:[#allocation2 + $0x60] sm:$0xe]
        %v1033 = vld [vmem:[#allocation2 + $0x6c] sm:$0xe]
        %v1034 = vld [vmem:[#allocation2 + $0x78] sm:$0xe]
        %v1035 = vld [vmem:[#allocation2 + $0x84] sm:$0xe]
        %v1036 = vld [vmem:[#allocation2 + $0x90] sm:$0xe]
        %v1037 = vld [vmem:[#allocation2 + $0x9c] sm:$0xe]
        %v1038 = vld [vmem:[#allocation2 + $0xa8] sm:$0xe]
        %v1039 = vld [vmem:[#allocation2 + $0xb4] sm:$0xe]
        %v1040 = vld [vmem:[%s858] sm:$0xf]
        %v1041 = vld [vmem:[%s858 + $0x4] sm:$0xf]
        %v1042 = vld [vmem:[%s858 + $0xc] sm:$0xf]
        %v1043 = vld [vmem:[%s858 + $0x10] sm:$0xf]
        %v1044 = vld [vmem:[%s858 + $0x18] sm:$0xf]
        %v1045 = vld [vmem:[%s858 + $0x1c] sm:$0xf]
        %v1046 = vld [vmem:[%s858 + $0x24] sm:$0xf]
        %v1047 = vld [vmem:[%s858 + $0x28] sm:$0xf]
        %v1048 = vld [vmem:[%s858 + $0x30] sm:$0xf]
        %v1049 = vld [vmem:[%s858 + $0x34] sm:$0xf]
        %v1050 = vld [vmem:[%s858 + $0x3c] sm:$0xf]
        %v1051 = vld [vmem:[%s858 + $0x40] sm:$0xf]
        %v1052 = vld [vmem:[%s858 + $0x48] sm:$0xf]
        %v1053 = vld [vmem:[%s858 + $0x4c] sm:$0xf]
        %v1054 = vld [vmem:[%s858 + $0x54] sm:$0xf]
        %v1055 = vld [vmem:[%s858 + $0x58] sm:$0xf]
        %v1056 = vld [vmem:[%s858 + $0x60] sm:$0xf]
        %v1057 = vld [vmem:[%s858 + $0x64] sm:$0xf]
        %v1058 = vld [vmem:[%s858 + $0x6c] sm:$0xf]
        %v1059 = vld [vmem:[%s858 + $0x70] sm:$0xf]
        %v1060 = vld [vmem:[%s858 + $0x78] sm:$0xf]
        %v1061 = vld [vmem:[%s858 + $0x7c] sm:$0xf]
        %v1062 = vld [vmem:[%s858 + $0x84] sm:$0xf]
        %v1063 = vld [vmem:[%s858 + $0x88] sm:$0xf]
        %v1064 = vld [vmem:[%s858 + $0x90] sm:$0xf]
        %v1065 = vld [vmem:[%s858 + $0x94] sm:$0xf]
        %v1066 = vld [vmem:[%s858 + $0x9c] sm:$0xf]
        %v1067 = vld [vmem:[%s858 + $0xa0] sm:$0xf]
        %v1068 = vld [vmem:[%s858 + $0xa8] sm:$0xf]
        %v1069 = vld [vmem:[%s858 + $0xac] sm:$0xf]
        %v1070 = vld [vmem:[%s858 + $0xb4] sm:$0xf]
        %v1071 = vld [vmem:[%s858 + $0xb8] sm:$0xf]
        %v1072 = vld [vmem:[%s858 + $0x8] sm:$0x1]
        %v1073 = vld [vmem:[%s858 + $0x14] sm:$0x1]
        %v1074 = vld [vmem:[%s858 + $0x20] sm:$0x1]
        %v1075 = vld [vmem:[%s858 + $0x2c] sm:$0x1]
        %v1076 = vld [vmem:[%s858 + $0x38] sm:$0x1]
        %v1077 = vld [vmem:[%s858 + $0x44] sm:$0x1]
        %v1078 = vld [vmem:[%s858 + $0x50] sm:$0x1]
        %v1079 = vld [vmem:[%s858 + $0x5c] sm:$0x1]
        %v1080 = vld [vmem:[%s858 + $0x68] sm:$0x1]
        %v1081 = vld [vmem:[%s858 + $0x74] sm:$0x1]
        %v1082 = vld [vmem:[%s858 + $0x80] sm:$0x1]
        %v1083 = vld [vmem:[%s858 + $0x8c] sm:$0x1]
        %v1084 = vld [vmem:[%s858 + $0x98] sm:$0x1]
        %v1085 = vld [vmem:[%s858 + $0xa4] sm:$0x1]
        %v1086 = vld [vmem:[%s858 + $0xb0] sm:$0x1]
        %v1087 = vld [vmem:[%s858 + $0xbc] sm:$0x1]
        %v1088 = vld [vmem:[%s858] sm:$0xe]
        %v1089 = vld [vmem:[%s858 + $0xc] sm:$0xe]
        %v1090 = vld [vmem:[%s858 + $0x18] sm:$0xe]
        %v1091 = vld [vmem:[%s858 + $0x24] sm:$0xe]
        %v1092 = vld [vmem:[%s858 + $0x30] sm:$0xe]
        %v1093 = vld [vmem:[%s858 + $0x3c] sm:$0xe]
        %v1094 = vld [vmem:[%s858 + $0x48] sm:$0xe]
        %v1095 = vld [vmem:[%s858 + $0x54] sm:$0xe]
        %v1096 = vld [vmem:[%s858 + $0x60] sm:$0xe]
        %v1097 = vld [vmem:[%s858 + $0x6c] sm:$0xe]
        %v1098 = vld [vmem:[%s858 + $0x78] sm:$0xe]
        %v1099 = vld [vmem:[%s858 + $0x84] sm:$0xe]
        %v1100 = vld [vmem:[%s858 + $0x90] sm:$0xe]
        %v1101 = vld [vmem:[%s858 + $0x9c] sm:$0xe]
        %v1102 = vld [vmem:[%s858 + $0xa8] sm:$0xe]
        %v1103 = vld [vmem:[%s858 + $0xb4] sm:$0xe]
        %s1104 = scalar_lea.vmem [#allocation2], 24
        %v1105 = vld [vmem:[%s1104] sm:$0xf]
        %v1106 = vld [vmem:[%s1104 + $0x4] sm:$0xf]
        %v1107 = vld [vmem:[%s1104 + $0xc] sm:$0xf]
        %v1108 = vld [vmem:[%s1104 + $0x10] sm:$0xf]
        %v1109 = vld [vmem:[%s1104 + $0x18] sm:$0xf]
        %v1110 = vld [vmem:[%s1104 + $0x1c] sm:$0xf]
        %v1111 = vld [vmem:[%s1104 + $0x24] sm:$0xf]
        %v1112 = vld [vmem:[%s1104 + $0x28] sm:$0xf]
        %v1113 = vld [vmem:[%s1104 + $0x30] sm:$0xf]
        %v1114 = vld [vmem:[%s1104 + $0x34] sm:$0xf]
        %v1115 = vld [vmem:[%s1104 + $0x3c] sm:$0xf]
        %v1116 = vld [vmem:[%s1104 + $0x40] sm:$0xf]
        %v1117 = vld [vmem:[%s1104 + $0x48] sm:$0xf]
        %v1118 = vld [vmem:[%s1104 + $0x4c] sm:$0xf]
        %v1119 = vld [vmem:[%s1104 + $0x54] sm:$0xf]
        %v1120 = vld [vmem:[%s1104 + $0x58] sm:$0xf]
        %v1121 = vld [vmem:[%s1104 + $0x60] sm:$0xf]
        %v1122 = vld [vmem:[%s1104 + $0x64] sm:$0xf]
        %v1123 = vld [vmem:[%s1104 + $0x6c] sm:$0xf]
        %v1124 = vld [vmem:[%s1104 + $0x70] sm:$0xf]
        %v1125 = vld [vmem:[%s1104 + $0x78] sm:$0xf]
        %v1126 = vld [vmem:[%s1104 + $0x7c] sm:$0xf]
        %v1127 = vld [vmem:[%s1104 + $0x84] sm:$0xf]
        %v1128 = vld [vmem:[%s1104 + $0x88] sm:$0xf]
        %v1129 = vld [vmem:[%s1104 + $0x90] sm:$0xf]
        %v1130 = vld [vmem:[%s1104 + $0x94] sm:$0xf]
        %v1131 = vld [vmem:[%s1104 + $0x9c] sm:$0xf]
        %v1132 = vld [vmem:[%s1104 + $0xa0] sm:$0xf]
        %v1133 = vld [vmem:[%s1104 + $0xa8] sm:$0xf]
        %v1134 = vld [vmem:[%s1104 + $0xac] sm:$0xf]
        %v1135 = vld [vmem:[%s1104 + $0xb4] sm:$0xf]
        %v1136 = vld [vmem:[%s1104 + $0xb8] sm:$0xf]
        %v1137 = vld [vmem:[%s1104 + $0x8] sm:$0x1]
        %v1138 = vld [vmem:[%s1104 + $0x14] sm:$0x1]
        %v1139 = vld [vmem:[%s1104 + $0x20] sm:$0x1]
        %v1140 = vld [vmem:[%s1104 + $0x2c] sm:$0x1]
        %v1141 = vld [vmem:[%s1104 + $0x38] sm:$0x1]
        %v1142 = vld [vmem:[%s1104 + $0x44] sm:$0x1]
        %v1143 = vld [vmem:[%s1104 + $0x50] sm:$0x1]
        %v1144 = vld [vmem:[%s1104 + $0x5c] sm:$0x1]
        %v1145 = vld [vmem:[%s1104 + $0x68] sm:$0x1]
        %v1146 = vld [vmem:[%s1104 + $0x74] sm:$0x1]
        %v1147 = vld [vmem:[%s1104 + $0x80] sm:$0x1]
        %v1148 = vld [vmem:[%s1104 + $0x8c] sm:$0x1]
        %v1149 = vld [vmem:[%s1104 + $0x98] sm:$0x1]
        %v1150 = vld [vmem:[%s1104 + $0xa4] sm:$0x1]
        %v1151 = vld [vmem:[%s1104 + $0xb0] sm:$0x1]
        %v1152 = vld [vmem:[%s1104 + $0xbc] sm:$0x1]
        %v1153 = vld [vmem:[%s1104] sm:$0xe]
        %v1154 = vld [vmem:[%s1104 + $0xc] sm:$0xe]
        %v1155 = vld [vmem:[%s1104 + $0x18] sm:$0xe]
        %v1156 = vld [vmem:[%s1104 + $0x24] sm:$0xe]
        %v1157 = vld [vmem:[%s1104 + $0x30] sm:$0xe]
        %v1158 = vld [vmem:[%s1104 + $0x3c] sm:$0xe]
        %v1159 = vld [vmem:[%s1104 + $0x48] sm:$0xe]
        %v1160 = vld [vmem:[%s1104 + $0x54] sm:$0xe]
        %v1161 = vld [vmem:[%s1104 + $0x60] sm:$0xe]
        %v1162 = vld [vmem:[%s1104 + $0x6c] sm:$0xe]
        %v1163 = vld [vmem:[%s1104 + $0x78] sm:$0xe]
        %v1164 = vld [vmem:[%s1104 + $0x84] sm:$0xe]
        %v1165 = vld [vmem:[%s1104 + $0x90] sm:$0xe]
        %v1166 = vld [vmem:[%s1104 + $0x9c] sm:$0xe]
        %v1167 = vld [vmem:[%s1104 + $0xa8] sm:$0xe]
        %v1168 = vld [vmem:[%s1104 + $0xb4] sm:$0xe]
        %v1201 = vunpack.c.l.b16 %v976
        %v1202 = vunpack.c.l.b16 %v977
        %v1203 = vunpack.c.l.b16 %v978
        %v1204 = vunpack.c.l.b16 %v979
        %v1205 = vunpack.c.l.b16 %v980
        %v1206 = vunpack.c.l.b16 %v981
        %v1207 = vunpack.c.l.b16 %v982
        %v1208 = vunpack.c.l.b16 %v983
        %v1209 = vunpack.c.l.b16 %v984
        %v1210 = vunpack.c.l.b16 %v985
        %v1211 = vunpack.c.l.b16 %v986
        %v1212 = vunpack.c.l.b16 %v987
        %v1213 = vunpack.c.l.b16 %v988
        %v1214 = vunpack.c.l.b16 %v989
        %v1215 = vunpack.c.l.b16 %v990
        %v1216 = vunpack.c.l.b16 %v991
        %v1217 = vunpack.c.l.b16 %v992
        %v1218 = vunpack.c.l.b16 %v993
        %v1219 = vunpack.c.l.b16 %v994
        %v1220 = vunpack.c.l.b16 %v995
        %v1221 = vunpack.c.l.b16 %v996
        %v1222 = vunpack.c.l.b16 %v997
        %v1223 = vunpack.c.l.b16 %v998
        %v1224 = vunpack.c.l.b16 %v999
        %v1225 = vunpack.c.l.b16 %v1000
        %v1226 = vunpack.c.l.b16 %v1001
        %v1227 = vunpack.c.l.b16 %v1002
        %v1228 = vunpack.c.l.b16 %v1003
        %v1229 = vunpack.c.l.b16 %v1004
        %v1230 = vunpack.c.l.b16 %v1005
        %v1231 = vunpack.c.l.b16 %v1006
        %v1232 = vunpack.c.l.b16 %v1007
        %v1233 = vpack.c.b16 %v1202, %v1201
        %v1234 = vpack.c.b16 %v1204, %v1203
        %v1235 = vpack.c.b16 %v1206, %v1205
        %v1236 = vpack.c.b16 %v1208, %v1207
        %v1237 = vpack.c.b16 %v1210, %v1209
        %v1238 = vpack.c.b16 %v1212, %v1211
        %v1239 = vpack.c.b16 %v1214, %v1213
        %v1240 = vpack.c.b16 %v1216, %v1215
        %v1241 = vpack.c.b16 %v1218, %v1217
        %v1242 = vpack.c.b16 %v1220, %v1219
        %v1243 = vpack.c.b16 %v1222, %v1221
        %v1244 = vpack.c.b16 %v1224, %v1223
        %v1245 = vpack.c.b16 %v1226, %v1225
        %v1246 = vpack.c.b16 %v1228, %v1227
        %v1247 = vpack.c.b16 %v1230, %v1229
        %v1248 = vpack.c.b16 %v1232, %v1231
        %v1265 = vunpack.c.l.b16 %v1008
        %v1266 = vunpack.c.l.b16 %v1009
        %v1267 = vunpack.c.l.b16 %v1010
        %v1268 = vunpack.c.l.b16 %v1011
        %v1269 = vunpack.c.l.b16 %v1012
        %v1270 = vunpack.c.l.b16 %v1013
        %v1271 = vunpack.c.l.b16 %v1014
        %v1272 = vunpack.c.l.b16 %v1015
        %v1273 = vunpack.c.l.b16 %v1016
        %v1274 = vunpack.c.l.b16 %v1017
        %v1275 = vunpack.c.l.b16 %v1018
        %v1276 = vunpack.c.l.b16 %v1019
        %v1277 = vunpack.c.l.b16 %v1020
        %v1278 = vunpack.c.l.b16 %v1021
        %v1279 = vunpack.c.l.b16 %v1022
        %v1280 = vunpack.c.l.b16 %v1023
        %v1281 = vpack.c.b16 %v1265, %v1265
        %v1282 = vpack.c.b16 %v1266, %v1266
        %v1283 = vpack.c.b16 %v1267, %v1267
        %v1284 = vpack.c.b16 %v1268, %v1268
        %v1285 = vpack.c.b16 %v1269, %v1269
        %v1286 = vpack.c.b16 %v1270, %v1270
        %v1287 = vpack.c.b16 %v1271, %v1271
        %v1288 = vpack.c.b16 %v1272, %v1272
        %v1289 = vpack.c.b16 %v1273, %v1273
        %v1290 = vpack.c.b16 %v1274, %v1274
        %v1291 = vpack.c.b16 %v1275, %v1275
        %v1292 = vpack.c.b16 %v1276, %v1276
        %v1293 = vpack.c.b16 %v1277, %v1277
        %v1294 = vpack.c.b16 %v1278, %v1278
        %v1295 = vpack.c.b16 %v1279, %v1279
        %v1296 = vpack.c.b16 %v1280, %v1280
        %vm1297 = vsmask.f32 7424
        %v1299 = vshrl.u32 %v1233, 16
        %v1301 = vshll.u32 %v1233, 16
        %v1303 = vrot.slane %v1301, 1
        %v1304 = vor.u32 %v1299, %v1303
        %v1306 = vshll.u32 %v1281, 16
        %v1308 = vrot.slane %v1306, 1
        %v1309 = vsel %vm1297, %v1304, %v1308
        %v1311 = vshrl.u32 %v1234, 16
        %v1313 = vshll.u32 %v1234, 16
        %v1315 = vrot.slane %v1313, 1
        %v1316 = vor.u32 %v1311, %v1315
        %v1318 = vshll.u32 %v1282, 16
        %v1320 = vrot.slane %v1318, 1
        %v1321 = vsel %vm1297, %v1316, %v1320
        %v1323 = vshrl.u32 %v1235, 16
        %v1325 = vshll.u32 %v1235, 16
        %v1327 = vrot.slane %v1325, 1
        %v1328 = vor.u32 %v1323, %v1327
        %v1330 = vshll.u32 %v1283, 16
        %v1332 = vrot.slane %v1330, 1
        %v1333 = vsel %vm1297, %v1328, %v1332
        %v1335 = vshrl.u32 %v1236, 16
        %v1337 = vshll.u32 %v1236, 16
        %v1339 = vrot.slane %v1337, 1
        %v1340 = vor.u32 %v1335, %v1339
        %v1342 = vshll.u32 %v1284, 16
        %v1344 = vrot.slane %v1342, 1
        %v1345 = vsel %vm1297, %v1340, %v1344
        %v1347 = vshrl.u32 %v1237, 16
        %v1349 = vshll.u32 %v1237, 16
        %v1351 = vrot.slane %v1349, 1
        %v1352 = vor.u32 %v1347, %v1351
        %v1354 = vshll.u32 %v1285, 16
        %v1356 = vrot.slane %v1354, 1
        %v1357 = vsel %vm1297, %v1352, %v1356
        %v1359 = vshrl.u32 %v1238, 16
        %v1361 = vshll.u32 %v1238, 16
        %v1363 = vrot.slane %v1361, 1
        %v1364 = vor.u32 %v1359, %v1363
        %v1366 = vshll.u32 %v1286, 16
        %v1368 = vrot.slane %v1366, 1
        %v1369 = vsel %vm1297, %v1364, %v1368
        %v1371 = vshrl.u32 %v1239, 16
        %v1373 = vshll.u32 %v1239, 16
        %v1375 = vrot.slane %v1373, 1
        %v1376 = vor.u32 %v1371, %v1375
        %v1378 = vshll.u32 %v1287, 16
        %v1380 = vrot.slane %v1378, 1
        %v1381 = vsel %vm1297, %v1376, %v1380
        %v1383 = vshrl.u32 %v1240, 16
        %v1385 = vshll.u32 %v1240, 16
        %v1387 = vrot.slane %v1385, 1
        %v1388 = vor.u32 %v1383, %v1387
        %v1390 = vshll.u32 %v1288, 16
        %v1392 = vrot.slane %v1390, 1
        %v1393 = vsel %vm1297, %v1388, %v1392
        %v1395 = vshrl.u32 %v1241, 16
        %v1397 = vshll.u32 %v1241, 16
        %v1399 = vrot.slane %v1397, 1
        %v1400 = vor.u32 %v1395, %v1399
        %v1402 = vshll.u32 %v1289, 16
        %v1404 = vrot.slane %v1402, 1
        %v1405 = vsel %vm1297, %v1400, %v1404
        %v1407 = vshrl.u32 %v1242, 16
        %v1409 = vshll.u32 %v1242, 16
        %v1411 = vrot.slane %v1409, 1
        %v1412 = vor.u32 %v1407, %v1411
        %v1414 = vshll.u32 %v1290, 16
        %v1416 = vrot.slane %v1414, 1
        %v1417 = vsel %vm1297, %v1412, %v1416
        %v1419 = vshrl.u32 %v1243, 16
        %v1421 = vshll.u32 %v1243, 16
        %v1423 = vrot.slane %v1421, 1
        %v1424 = vor.u32 %v1419, %v1423
        %v1426 = vshll.u32 %v1291, 16
        %v1428 = vrot.slane %v1426, 1
        %v1429 = vsel %vm1297, %v1424, %v1428
        %v1431 = vshrl.u32 %v1244, 16
        %v1433 = vshll.u32 %v1244, 16
        %v1435 = vrot.slane %v1433, 1
        %v1436 = vor.u32 %v1431, %v1435
        %v1438 = vshll.u32 %v1292, 16
        %v1440 = vrot.slane %v1438, 1
        %v1441 = vsel %vm1297, %v1436, %v1440
        %v1443 = vshrl.u32 %v1245, 16
        %v1445 = vshll.u32 %v1245, 16
        %v1447 = vrot.slane %v1445, 1
        %v1448 = vor.u32 %v1443, %v1447
        %v1450 = vshll.u32 %v1293, 16
        %v1452 = vrot.slane %v1450, 1
        %v1453 = vsel %vm1297, %v1448, %v1452
        %v1455 = vshrl.u32 %v1246, 16
        %v1457 = vshll.u32 %v1246, 16
        %v1459 = vrot.slane %v1457, 1
        %v1460 = vor.u32 %v1455, %v1459
        %v1462 = vshll.u32 %v1294, 16
        %v1464 = vrot.slane %v1462, 1
        %v1465 = vsel %vm1297, %v1460, %v1464
        %v1467 = vshrl.u32 %v1247, 16
        %v1469 = vshll.u32 %v1247, 16
        %v1471 = vrot.slane %v1469, 1
        %v1472 = vor.u32 %v1467, %v1471
        %v1474 = vshll.u32 %v1295, 16
        %v1476 = vrot.slane %v1474, 1
        %v1477 = vsel %vm1297, %v1472, %v1476
        %v1479 = vshrl.u32 %v1248, 16
        %v1481 = vshll.u32 %v1248, 16
        %v1483 = vrot.slane %v1481, 1
        %v1484 = vor.u32 %v1479, %v1483
        %v1486 = vshll.u32 %v1296, 16
        %v1488 = vrot.slane %v1486, 1
        %v1489 = vsel %vm1297, %v1484, %v1488
        %1490 = vrot.lane.b32.xlu0 %v1309, 4
        %v1491 = vpop.permute.xlu0 %1490
        %1492 = vrot.lane.b32.xlu0 %v1321, 4
        %v1493 = vpop.permute.xlu0 %1492
        %1494 = vrot.lane.b32.xlu0 %v1333, 4
        %v1495 = vpop.permute.xlu0 %1494
        %1496 = vrot.lane.b32.xlu0 %v1345, 4
        %v1497 = vpop.permute.xlu0 %1496
        %1498 = vrot.lane.b32.xlu0 %v1357, 4
        %v1499 = vpop.permute.xlu0 %1498
        %1500 = vrot.lane.b32.xlu0 %v1369, 4
        %v1501 = vpop.permute.xlu0 %1500
        %1502 = vrot.lane.b32.xlu0 %v1381, 4
        %v1503 = vpop.permute.xlu0 %1502
        %1504 = vrot.lane.b32.xlu0 %v1393, 4
        %v1505 = vpop.permute.xlu0 %1504
        %1506 = vrot.lane.b32.xlu0 %v1405, 4
        %v1507 = vpop.permute.xlu0 %1506
        %1508 = vrot.lane.b32.xlu0 %v1417, 4
        %v1509 = vpop.permute.xlu0 %1508
        %1510 = vrot.lane.b32.xlu0 %v1429, 4
        %v1511 = vpop.permute.xlu0 %1510
        %1512 = vrot.lane.b32.xlu0 %v1441, 4
        %v1513 = vpop.permute.xlu0 %1512
        %1514 = vrot.lane.b32.xlu0 %v1453, 4
        %v1515 = vpop.permute.xlu0 %1514
        %1516 = vrot.lane.b32.xlu0 %v1465, 4
        %v1517 = vpop.permute.xlu0 %1516
        %1518 = vrot.lane.b32.xlu0 %v1477, 4
        %v1519 = vpop.permute.xlu0 %1518
        %1520 = vrot.lane.b32.xlu0 %v1489, 4
        %v1521 = vpop.permute.xlu0 %1520
        %v1538 = vunpack.c.l.b16 %v1024
        %v1539 = vunpack.c.l.b16 %v1025
        %v1540 = vunpack.c.l.b16 %v1026
        %v1541 = vunpack.c.l.b16 %v1027
        %v1542 = vunpack.c.l.b16 %v1028
        %v1543 = vunpack.c.l.b16 %v1029
        %v1544 = vunpack.c.l.b16 %v1030
        %v1545 = vunpack.c.l.b16 %v1031
        %v1546 = vunpack.c.l.b16 %v1032
        %v1547 = vunpack.c.l.b16 %v1033
        %v1548 = vunpack.c.l.b16 %v1034
        %v1549 = vunpack.c.l.b16 %v1035
        %v1550 = vunpack.c.l.b16 %v1036
        %v1551 = vunpack.c.l.b16 %v1037
        %v1552 = vunpack.c.l.b16 %v1038
        %v1553 = vunpack.c.l.b16 %v1039
        %v1554 = vpack.c.b16 %v1202, %v1538
        %v1555 = vpack.c.b16 %v1204, %v1539
        %v1556 = vpack.c.b16 %v1206, %v1540
        %v1557 = vpack.c.b16 %v1208, %v1541
        %v1558 = vpack.c.b16 %v1210, %v1542
        %v1559 = vpack.c.b16 %v1212, %v1543
        %v1560 = vpack.c.b16 %v1214, %v1544
        %v1561 = vpack.c.b16 %v1216, %v1545
        %v1562 = vpack.c.b16 %v1218, %v1546
        %v1563 = vpack.c.b16 %v1220, %v1547
        %v1564 = vpack.c.b16 %v1222, %v1548
        %v1565 = vpack.c.b16 %v1224, %v1549
        %v1566 = vpack.c.b16 %v1226, %v1550
        %v1567 = vpack.c.b16 %v1228, %v1551
        %v1568 = vpack.c.b16 %v1230, %v1552
        %v1569 = vpack.c.b16 %v1232, %v1553
        %vm1570 = vcmask 1046528
        %v1571 = vrot.slane %v1554, 1
        %v1572 = vrot.slane %v1281, 1
        %v1573 = vsel %vm1570, %v1571, %v1572
        %v1574 = vrot.slane %v1555, 1
        %v1575 = vrot.slane %v1282, 1
        %v1576 = vsel %vm1570, %v1574, %v1575
        %v1577 = vrot.slane %v1556, 1
        %v1578 = vrot.slane %v1283, 1
        %v1579 = vsel %vm1570, %v1577, %v1578
        %v1580 = vrot.slane %v1557, 1
        %v1581 = vrot.slane %v1284, 1
        %v1582 = vsel %vm1570, %v1580, %v1581
        %v1583 = vrot.slane %v1558, 1
        %v1584 = vrot.slane %v1285, 1
        %v1585 = vsel %vm1570, %v1583, %v1584
        %v1586 = vrot.slane %v1559, 1
        %v1587 = vrot.slane %v1286, 1
        %v1588 = vsel %vm1570, %v1586, %v1587
        %v1589 = vrot.slane %v1560, 1
        %v1590 = vrot.slane %v1287, 1
        %v1591 = vsel %vm1570, %v1589, %v1590
        %v1592 = vrot.slane %v1561, 1
        %v1593 = vrot.slane %v1288, 1
        %v1594 = vsel %vm1570, %v1592, %v1593
        %v1595 = vrot.slane %v1562, 1
        %v1596 = vrot.slane %v1289, 1
        %v1597 = vsel %vm1570, %v1595, %v1596
        %v1598 = vrot.slane %v1563, 1
        %v1599 = vrot.slane %v1290, 1
        %v1600 = vsel %vm1570, %v1598, %v1599
        %v1601 = vrot.slane %v1564, 1
        %v1602 = vrot.slane %v1291, 1
        %v1603 = vsel %vm1570, %v1601, %v1602
        %v1604 = vrot.slane %v1565, 1
        %v1605 = vrot.slane %v1292, 1
        %v1606 = vsel %vm1570, %v1604, %v1605
        %v1607 = vrot.slane %v1566, 1
        %v1608 = vrot.slane %v1293, 1
        %v1609 = vsel %vm1570, %v1607, %v1608
        %v1610 = vrot.slane %v1567, 1
        %v1611 = vrot.slane %v1294, 1
        %v1612 = vsel %vm1570, %v1610, %v1611
        %v1613 = vrot.slane %v1568, 1
        %v1614 = vrot.slane %v1295, 1
        %v1615 = vsel %vm1570, %v1613, %v1614
        %v1616 = vrot.slane %v1569, 1
        %v1617 = vrot.slane %v1296, 1
        %v1618 = vsel %vm1570, %v1616, %v1617
        %1619 = vrot.lane.b32.xlu0 %v1573, 8
        %v1620 = vpop.permute.xlu0 %1619
        %1621 = vrot.lane.b32.xlu0 %v1576, 8
        %v1622 = vpop.permute.xlu0 %1621
        %1623 = vrot.lane.b32.xlu0 %v1579, 8
        %v1624 = vpop.permute.xlu0 %1623
        %1625 = vrot.lane.b32.xlu0 %v1582, 8
        %v1626 = vpop.permute.xlu0 %1625
        %1627 = vrot.lane.b32.xlu0 %v1585, 8
        %v1628 = vpop.permute.xlu0 %1627
        %1629 = vrot.lane.b32.xlu0 %v1588, 8
        %v1630 = vpop.permute.xlu0 %1629
        %1631 = vrot.lane.b32.xlu0 %v1591, 8
        %v1632 = vpop.permute.xlu0 %1631
        %1633 = vrot.lane.b32.xlu0 %v1594, 8
        %v1634 = vpop.permute.xlu0 %1633
        %1635 = vrot.lane.b32.xlu0 %v1597, 8
        %v1636 = vpop.permute.xlu0 %1635
        %1637 = vrot.lane.b32.xlu0 %v1600, 8
        %v1638 = vpop.permute.xlu0 %1637
        %1639 = vrot.lane.b32.xlu0 %v1603, 8
        %v1640 = vpop.permute.xlu0 %1639
        %1641 = vrot.lane.b32.xlu0 %v1606, 8
        %v1642 = vpop.permute.xlu0 %1641
        %1643 = vrot.lane.b32.xlu0 %v1609, 8
        %v1644 = vpop.permute.xlu0 %1643
        %1645 = vrot.lane.b32.xlu0 %v1612, 8
        %v1646 = vpop.permute.xlu0 %1645
        %1647 = vrot.lane.b32.xlu0 %v1615, 8
        %v1648 = vpop.permute.xlu0 %1647
        %1649 = vrot.lane.b32.xlu0 %v1618, 8
        %v1650 = vpop.permute.xlu0 %1649
        %v1683 = vunpack.c.l.b16 %v1040
        %v1684 = vunpack.c.l.b16 %v1041
        %v1685 = vunpack.c.l.b16 %v1042
        %v1686 = vunpack.c.l.b16 %v1043
        %v1687 = vunpack.c.l.b16 %v1044
        %v1688 = vunpack.c.l.b16 %v1045
        %v1689 = vunpack.c.l.b16 %v1046
        %v1690 = vunpack.c.l.b16 %v1047
        %v1691 = vunpack.c.l.b16 %v1048
        %v1692 = vunpack.c.l.b16 %v1049
        %v1693 = vunpack.c.l.b16 %v1050
        %v1694 = vunpack.c.l.b16 %v1051
        %v1695 = vunpack.c.l.b16 %v1052
        %v1696 = vunpack.c.l.b16 %v1053
        %v1697 = vunpack.c.l.b16 %v1054
        %v1698 = vunpack.c.l.b16 %v1055
        %v1699 = vunpack.c.l.b16 %v1056
        %v1700 = vunpack.c.l.b16 %v1057
        %v1701 = vunpack.c.l.b16 %v1058
        %v1702 = vunpack.c.l.b16 %v1059
        %v1703 = vunpack.c.l.b16 %v1060
        %v1704 = vunpack.c.l.b16 %v1061
        %v1705 = vunpack.c.l.b16 %v1062
        %v1706 = vunpack.c.l.b16 %v1063
        %v1707 = vunpack.c.l.b16 %v1064
        %v1708 = vunpack.c.l.b16 %v1065
        %v1709 = vunpack.c.l.b16 %v1066
        %v1710 = vunpack.c.l.b16 %v1067
        %v1711 = vunpack.c.l.b16 %v1068
        %v1712 = vunpack.c.l.b16 %v1069
        %v1713 = vunpack.c.l.b16 %v1070
        %v1714 = vunpack.c.l.b16 %v1071
        %v1715 = vpack.c.b16 %v1684, %v1683
        %v1716 = vpack.c.b16 %v1686, %v1685
        %v1717 = vpack.c.b16 %v1688, %v1687
        %v1718 = vpack.c.b16 %v1690, %v1689
        %v1719 = vpack.c.b16 %v1692, %v1691
        %v1720 = vpack.c.b16 %v1694, %v1693
        %v1721 = vpack.c.b16 %v1696, %v1695
        %v1722 = vpack.c.b16 %v1698, %v1697
        %v1723 = vpack.c.b16 %v1700, %v1699
        %v1724 = vpack.c.b16 %v1702, %v1701
        %v1725 = vpack.c.b16 %v1704, %v1703
        %v1726 = vpack.c.b16 %v1706, %v1705
        %v1727 = vpack.c.b16 %v1708, %v1707
        %v1728 = vpack.c.b16 %v1710, %v1709
        %v1729 = vpack.c.b16 %v1712, %v1711
        %v1730 = vpack.c.b16 %v1714, %v1713
        %1731 = vrot.lane.b32.xlu0 %v1715, 12
        %v1732 = vpop.permute.xlu0 %1731
        %1733 = vrot.lane.b32.xlu0 %v1716, 12
        %v1734 = vpop.permute.xlu0 %1733
        %1735 = vrot.lane.b32.xlu0 %v1717, 12
        %v1736 = vpop.permute.xlu0 %1735
        %1737 = vrot.lane.b32.xlu0 %v1718, 12
        %v1738 = vpop.permute.xlu0 %1737
        %1739 = vrot.lane.b32.xlu0 %v1719, 12
        %v1740 = vpop.permute.xlu0 %1739
        %1741 = vrot.lane.b32.xlu0 %v1720, 12
        %v1742 = vpop.permute.xlu0 %1741
        %1743 = vrot.lane.b32.xlu0 %v1721, 12
        %v1744 = vpop.permute.xlu0 %1743
        %1745 = vrot.lane.b32.xlu0 %v1722, 12
        %v1746 = vpop.permute.xlu0 %1745
        %1747 = vrot.lane.b32.xlu0 %v1723, 12
        %v1748 = vpop.permute.xlu0 %1747
        %1749 = vrot.lane.b32.xlu0 %v1724, 12
        %v1750 = vpop.permute.xlu0 %1749
        %1751 = vrot.lane.b32.xlu0 %v1725, 12
        %v1752 = vpop.permute.xlu0 %1751
        %1753 = vrot.lane.b32.xlu0 %v1726, 12
        %v1754 = vpop.permute.xlu0 %1753
        %1755 = vrot.lane.b32.xlu0 %v1727, 12
        %v1756 = vpop.permute.xlu0 %1755
        %1757 = vrot.lane.b32.xlu0 %v1728, 12
        %v1758 = vpop.permute.xlu0 %1757
        %1759 = vrot.lane.b32.xlu0 %v1729, 12
        %v1760 = vpop.permute.xlu0 %1759
        %1761 = vrot.lane.b32.xlu0 %v1730, 12
        %v1762 = vpop.permute.xlu0 %1761
        %v1779 = vunpack.c.l.b16 %v1072
        %v1780 = vunpack.c.l.b16 %v1073
        %v1781 = vunpack.c.l.b16 %v1074
        %v1782 = vunpack.c.l.b16 %v1075
        %v1783 = vunpack.c.l.b16 %v1076
        %v1784 = vunpack.c.l.b16 %v1077
        %v1785 = vunpack.c.l.b16 %v1078
        %v1786 = vunpack.c.l.b16 %v1079
        %v1787 = vunpack.c.l.b16 %v1080
        %v1788 = vunpack.c.l.b16 %v1081
        %v1789 = vunpack.c.l.b16 %v1082
        %v1790 = vunpack.c.l.b16 %v1083
        %v1791 = vunpack.c.l.b16 %v1084
        %v1792 = vunpack.c.l.b16 %v1085
        %v1793 = vunpack.c.l.b16 %v1086
        %v1794 = vunpack.c.l.b16 %v1087
        %v1795 = vpack.c.b16 %v1779, %v1779
        %v1796 = vpack.c.b16 %v1780, %v1780
        %v1797 = vpack.c.b16 %v1781, %v1781
        %v1798 = vpack.c.b16 %v1782, %v1782
        %v1799 = vpack.c.b16 %v1783, %v1783
        %v1800 = vpack.c.b16 %v1784, %v1784
        %v1801 = vpack.c.b16 %v1785, %v1785
        %v1802 = vpack.c.b16 %v1786, %v1786
        %v1803 = vpack.c.b16 %v1787, %v1787
        %v1804 = vpack.c.b16 %v1788, %v1788
        %v1805 = vpack.c.b16 %v1789, %v1789
        %v1806 = vpack.c.b16 %v1790, %v1790
        %v1807 = vpack.c.b16 %v1791, %v1791
        %v1808 = vpack.c.b16 %v1792, %v1792
        %v1809 = vpack.c.b16 %v1793, %v1793
        %v1810 = vpack.c.b16 %v1794, %v1794
        %v1812 = vshrl.u32 %v1715, 16
        %v1814 = vshll.u32 %v1715, 16
        %v1816 = vrot.slane %v1814, 1
        %v1817 = vor.u32 %v1812, %v1816
        %v1819 = vshll.u32 %v1795, 16
        %v1821 = vrot.slane %v1819, 1
        %v1822 = vsel %vm1297, %v1817, %v1821
        %v1824 = vshrl.u32 %v1716, 16
        %v1826 = vshll.u32 %v1716, 16
        %v1828 = vrot.slane %v1826, 1
        %v1829 = vor.u32 %v1824, %v1828
        %v1831 = vshll.u32 %v1796, 16
        %v1833 = vrot.slane %v1831, 1
        %v1834 = vsel %vm1297, %v1829, %v1833
        %v1836 = vshrl.u32 %v1717, 16
        %v1838 = vshll.u32 %v1717, 16
        %v1840 = vrot.slane %v1838, 1
        %v1841 = vor.u32 %v1836, %v1840
        %v1843 = vshll.u32 %v1797, 16
        %v1845 = vrot.slane %v1843, 1
        %v1846 = vsel %vm1297, %v1841, %v1845
        %v1848 = vshrl.u32 %v1718, 16
        %v1850 = vshll.u32 %v1718, 16
        %v1852 = vrot.slane %v1850, 1
        %v1853 = vor.u32 %v1848, %v1852
        %v1855 = vshll.u32 %v1798, 16
        %v1857 = vrot.slane %v1855, 1
        %v1858 = vsel %vm1297, %v1853, %v1857
        %v1860 = vshrl.u32 %v1719, 16
        %v1862 = vshll.u32 %v1719, 16
        %v1864 = vrot.slane %v1862, 1
        %v1865 = vor.u32 %v1860, %v1864
        %v1867 = vshll.u32 %v1799, 16
        %v1869 = vrot.slane %v1867, 1
        %v1870 = vsel %vm1297, %v1865, %v1869
        %v1872 = vshrl.u32 %v1720, 16
        %v1874 = vshll.u32 %v1720, 16
        %v1876 = vrot.slane %v1874, 1
        %v1877 = vor.u32 %v1872, %v1876
        %v1879 = vshll.u32 %v1800, 16
        %v1881 = vrot.slane %v1879, 1
        %v1882 = vsel %vm1297, %v1877, %v1881
        %v1884 = vshrl.u32 %v1721, 16
        %v1886 = vshll.u32 %v1721, 16
        %v1888 = vrot.slane %v1886, 1
        %v1889 = vor.u32 %v1884, %v1888
        %v1891 = vshll.u32 %v1801, 16
        %v1893 = vrot.slane %v1891, 1
        %v1894 = vsel %vm1297, %v1889, %v1893
        %v1896 = vshrl.u32 %v1722, 16
        %v1898 = vshll.u32 %v1722, 16
        %v1900 = vrot.slane %v1898, 1
        %v1901 = vor.u32 %v1896, %v1900
        %v1903 = vshll.u32 %v1802, 16
        %v1905 = vrot.slane %v1903, 1
        %v1906 = vsel %vm1297, %v1901, %v1905
        %v1908 = vshrl.u32 %v1723, 16
        %v1910 = vshll.u32 %v1723, 16
        %v1912 = vrot.slane %v1910, 1
        %v1913 = vor.u32 %v1908, %v1912
        %v1915 = vshll.u32 %v1803, 16
        %v1917 = vrot.slane %v1915, 1
        %v1918 = vsel %vm1297, %v1913, %v1917
        %v1920 = vshrl.u32 %v1724, 16
        %v1922 = vshll.u32 %v1724, 16
        %v1924 = vrot.slane %v1922, 1
        %v1925 = vor.u32 %v1920, %v1924
        %v1927 = vshll.u32 %v1804, 16
        %v1929 = vrot.slane %v1927, 1
        %v1930 = vsel %vm1297, %v1925, %v1929
        %v1932 = vshrl.u32 %v1725, 16
        %v1934 = vshll.u32 %v1725, 16
        %v1936 = vrot.slane %v1934, 1
        %v1937 = vor.u32 %v1932, %v1936
        %v1939 = vshll.u32 %v1805, 16
        %v1941 = vrot.slane %v1939, 1
        %v1942 = vsel %vm1297, %v1937, %v1941
        %v1944 = vshrl.u32 %v1726, 16
        %v1946 = vshll.u32 %v1726, 16
        %v1948 = vrot.slane %v1946, 1
        %v1949 = vor.u32 %v1944, %v1948
        %v1951 = vshll.u32 %v1806, 16
        %v1953 = vrot.slane %v1951, 1
        %v1954 = vsel %vm1297, %v1949, %v1953
        %v1956 = vshrl.u32 %v1727, 16
        %v1958 = vshll.u32 %v1727, 16
        %v1960 = vrot.slane %v1958, 1
        %v1961 = vor.u32 %v1956, %v1960
        %v1963 = vshll.u32 %v1807, 16
        %v1965 = vrot.slane %v1963, 1
        %v1966 = vsel %vm1297, %v1961, %v1965
        %v1968 = vshrl.u32 %v1728, 16
        %v1970 = vshll.u32 %v1728, 16
        %v1972 = vrot.slane %v1970, 1
        %v1973 = vor.u32 %v1968, %v1972
        %v1975 = vshll.u32 %v1808, 16
        %v1977 = vrot.slane %v1975, 1
        %v1978 = vsel %vm1297, %v1973, %v1977
        %v1980 = vshrl.u32 %v1729, 16
        %v1982 = vshll.u32 %v1729, 16
        %v1984 = vrot.slane %v1982, 1
        %v1985 = vor.u32 %v1980, %v1984
        %v1987 = vshll.u32 %v1809, 16
        %v1989 = vrot.slane %v1987, 1
        %v1990 = vsel %vm1297, %v1985, %v1989
        %v1992 = vshrl.u32 %v1730, 16
        %v1994 = vshll.u32 %v1730, 16
        %v1996 = vrot.slane %v1994, 1
        %v1997 = vor.u32 %v1992, %v1996
        %v1999 = vshll.u32 %v1810, 16
        %v2001 = vrot.slane %v1999, 1
        %v2002 = vsel %vm1297, %v1997, %v2001
        %2003 = vrot.lane.b32.xlu0 %v1822, 16
        %v2004 = vpop.permute.xlu0 %2003
        %2005 = vrot.lane.b32.xlu0 %v1834, 16
        %v2006 = vpop.permute.xlu0 %2005
        %2007 = vrot.lane.b32.xlu0 %v1846, 16
        %v2008 = vpop.permute.xlu0 %2007
        %2009 = vrot.lane.b32.xlu0 %v1858, 16
        %v2010 = vpop.permute.xlu0 %2009
        %2011 = vrot.lane.b32.xlu0 %v1870, 16
        %v2012 = vpop.permute.xlu0 %2011
        %2013 = vrot.lane.b32.xlu0 %v1882, 16
        %v2014 = vpop.permute.xlu0 %2013
        %2015 = vrot.lane.b32.xlu0 %v1894, 16
        %v2016 = vpop.permute.xlu0 %2015
        %2017 = vrot.lane.b32.xlu0 %v1906, 16
        %v2018 = vpop.permute.xlu0 %2017
        %2019 = vrot.lane.b32.xlu0 %v1918, 16
        %v2020 = vpop.permute.xlu0 %2019
        %2021 = vrot.lane.b32.xlu0 %v1930, 16
        %v2022 = vpop.permute.xlu0 %2021
        %2023 = vrot.lane.b32.xlu0 %v1942, 16
        %v2024 = vpop.permute.xlu0 %2023
        %2025 = vrot.lane.b32.xlu0 %v1954, 16
        %v2026 = vpop.permute.xlu0 %2025
        %2027 = vrot.lane.b32.xlu0 %v1966, 16
        %v2028 = vpop.permute.xlu0 %2027
        %2029 = vrot.lane.b32.xlu0 %v1978, 16
        %v2030 = vpop.permute.xlu0 %2029
        %2031 = vrot.lane.b32.xlu0 %v1990, 16
        %v2032 = vpop.permute.xlu0 %2031
        %2033 = vrot.lane.b32.xlu0 %v2002, 16
        %v2034 = vpop.permute.xlu0 %2033
        %v2051 = vunpack.c.l.b16 %v1088
        %v2052 = vunpack.c.l.b16 %v1089
        %v2053 = vunpack.c.l.b16 %v1090
        %v2054 = vunpack.c.l.b16 %v1091
        %v2055 = vunpack.c.l.b16 %v1092
        %v2056 = vunpack.c.l.b16 %v1093
        %v2057 = vunpack.c.l.b16 %v1094
        %v2058 = vunpack.c.l.b16 %v1095
        %v2059 = vunpack.c.l.b16 %v1096
        %v2060 = vunpack.c.l.b16 %v1097
        %v2061 = vunpack.c.l.b16 %v1098
        %v2062 = vunpack.c.l.b16 %v1099
        %v2063 = vunpack.c.l.b16 %v1100
        %v2064 = vunpack.c.l.b16 %v1101
        %v2065 = vunpack.c.l.b16 %v1102
        %v2066 = vunpack.c.l.b16 %v1103
        %v2067 = vpack.c.b16 %v1684, %v2051
        %v2068 = vpack.c.b16 %v1686, %v2052
        %v2069 = vpack.c.b16 %v1688, %v2053
        %v2070 = vpack.c.b16 %v1690, %v2054
        %v2071 = vpack.c.b16 %v1692, %v2055
        %v2072 = vpack.c.b16 %v1694, %v2056
        %v2073 = vpack.c.b16 %v1696, %v2057
        %v2074 = vpack.c.b16 %v1698, %v2058
        %v2075 = vpack.c.b16 %v1700, %v2059
        %v2076 = vpack.c.b16 %v1702, %v2060
        %v2077 = vpack.c.b16 %v1704, %v2061
        %v2078 = vpack.c.b16 %v1706, %v2062
        %v2079 = vpack.c.b16 %v1708, %v2063
        %v2080 = vpack.c.b16 %v1710, %v2064
        %v2081 = vpack.c.b16 %v1712, %v2065
        %v2082 = vpack.c.b16 %v1714, %v2066
        %v2083 = vrot.slane %v2067, 1
        %v2084 = vrot.slane %v1795, 1
        %v2085 = vsel %vm1570, %v2083, %v2084
        %v2086 = vrot.slane %v2068, 1
        %v2087 = vrot.slane %v1796, 1
        %v2088 = vsel %vm1570, %v2086, %v2087
        %v2089 = vrot.slane %v2069, 1
        %v2090 = vrot.slane %v1797, 1
        %v2091 = vsel %vm1570, %v2089, %v2090
        %v2092 = vrot.slane %v2070, 1
        %v2093 = vrot.slane %v1798, 1
        %v2094 = vsel %vm1570, %v2092, %v2093
        %v2095 = vrot.slane %v2071, 1
        %v2096 = vrot.slane %v1799, 1
        %v2097 = vsel %vm1570, %v2095, %v2096
        %v2098 = vrot.slane %v2072, 1
        %v2099 = vrot.slane %v1800, 1
        %v2100 = vsel %vm1570, %v2098, %v2099
        %v2101 = vrot.slane %v2073, 1
        %v2102 = vrot.slane %v1801, 1
        %v2103 = vsel %vm1570, %v2101, %v2102
        %v2104 = vrot.slane %v2074, 1
        %v2105 = vrot.slane %v1802, 1
        %v2106 = vsel %vm1570, %v2104, %v2105
        %v2107 = vrot.slane %v2075, 1
        %v2108 = vrot.slane %v1803, 1
        %v2109 = vsel %vm1570, %v2107, %v2108
        %v2110 = vrot.slane %v2076, 1
        %v2111 = vrot.slane %v1804, 1
        %v2112 = vsel %vm1570, %v2110, %v2111
        %v2113 = vrot.slane %v2077, 1
        %v2114 = vrot.slane %v1805, 1
        %v2115 = vsel %vm1570, %v2113, %v2114
        %v2116 = vrot.slane %v2078, 1
        %v2117 = vrot.slane %v1806, 1
        %v2118 = vsel %vm1570, %v2116, %v2117
        %v2119 = vrot.slane %v2079, 1
        %v2120 = vrot.slane %v1807, 1
        %v2121 = vsel %vm1570, %v2119, %v2120
        %v2122 = vrot.slane %v2080, 1
        %v2123 = vrot.slane %v1808, 1
        %v2124 = vsel %vm1570, %v2122, %v2123
        %v2125 = vrot.slane %v2081, 1
        %v2126 = vrot.slane %v1809, 1
        %v2127 = vsel %vm1570, %v2125, %v2126
        %v2128 = vrot.slane %v2082, 1
        %v2129 = vrot.slane %v1810, 1
        %v2130 = vsel %vm1570, %v2128, %v2129
        %2131 = vrot.lane.b32.xlu0 %v2085, 20
        %v2132 = vpop.permute.xlu0 %2131
        %2133 = vrot.lane.b32.xlu0 %v2088, 20
        %v2134 = vpop.permute.xlu0 %2133
        %2135 = vrot.lane.b32.xlu0 %v2091, 20
        %v2136 = vpop.permute.xlu0 %2135
        %2137 = vrot.lane.b32.xlu0 %v2094, 20
        %v2138 = vpop.permute.xlu0 %2137
        %2139 = vrot.lane.b32.xlu0 %v2097, 20
        %v2140 = vpop.permute.xlu0 %2139
        %2141 = vrot.lane.b32.xlu0 %v2100, 20
        %v2142 = vpop.permute.xlu0 %2141
        %2143 = vrot.lane.b32.xlu0 %v2103, 20
        %v2144 = vpop.permute.xlu0 %2143
        %2145 = vrot.lane.b32.xlu0 %v2106, 20
        %v2146 = vpop.permute.xlu0 %2145
        %2147 = vrot.lane.b32.xlu0 %v2109, 20
        %v2148 = vpop.permute.xlu0 %2147
        %2149 = vrot.lane.b32.xlu0 %v2112, 20
        %v2150 = vpop.permute.xlu0 %2149
        %2151 = vrot.lane.b32.xlu0 %v2115, 20
        %v2152 = vpop.permute.xlu0 %2151
        %2153 = vrot.lane.b32.xlu0 %v2118, 20
        %v2154 = vpop.permute.xlu0 %2153
        %2155 = vrot.lane.b32.xlu0 %v2121, 20
        %v2156 = vpop.permute.xlu0 %2155
        %2157 = vrot.lane.b32.xlu0 %v2124, 20
        %v2158 = vpop.permute.xlu0 %2157
        %2159 = vrot.lane.b32.xlu0 %v2127, 20
        %v2160 = vpop.permute.xlu0 %2159
        %2161 = vrot.lane.b32.xlu0 %v2130, 20
        %v2162 = vpop.permute.xlu0 %2161
        %v2195 = vunpack.c.l.b16 %v1105
        %v2196 = vunpack.c.l.b16 %v1106
        %v2197 = vunpack.c.l.b16 %v1107
        %v2198 = vunpack.c.l.b16 %v1108
        %v2199 = vunpack.c.l.b16 %v1109
        %v2200 = vunpack.c.l.b16 %v1110
        %v2201 = vunpack.c.l.b16 %v1111
        %v2202 = vunpack.c.l.b16 %v1112
        %v2203 = vunpack.c.l.b16 %v1113
        %v2204 = vunpack.c.l.b16 %v1114
        %v2205 = vunpack.c.l.b16 %v1115
        %v2206 = vunpack.c.l.b16 %v1116
        %v2207 = vunpack.c.l.b16 %v1117
        %v2208 = vunpack.c.l.b16 %v1118
        %v2209 = vunpack.c.l.b16 %v1119
        %v2210 = vunpack.c.l.b16 %v1120
        %v2211 = vunpack.c.l.b16 %v1121
        %v2212 = vunpack.c.l.b16 %v1122
        %v2213 = vunpack.c.l.b16 %v1123
        %v2214 = vunpack.c.l.b16 %v1124
        %v2215 = vunpack.c.l.b16 %v1125
        %v2216 = vunpack.c.l.b16 %v1126
        %v2217 = vunpack.c.l.b16 %v1127
        %v2218 = vunpack.c.l.b16 %v1128
        %v2219 = vunpack.c.l.b16 %v1129
        %v2220 = vunpack.c.l.b16 %v1130
        %v2221 = vunpack.c.l.b16 %v1131
        %v2222 = vunpack.c.l.b16 %v1132
        %v2223 = vunpack.c.l.b16 %v1133
        %v2224 = vunpack.c.l.b16 %v1134
        %v2225 = vunpack.c.l.b16 %v1135
        %v2226 = vunpack.c.l.b16 %v1136
        %v2227 = vpack.c.b16 %v2196, %v2195
        %v2228 = vpack.c.b16 %v2198, %v2197
        %v2229 = vpack.c.b16 %v2200, %v2199
        %v2230 = vpack.c.b16 %v2202, %v2201
        %v2231 = vpack.c.b16 %v2204, %v2203
        %v2232 = vpack.c.b16 %v2206, %v2205
        %v2233 = vpack.c.b16 %v2208, %v2207
        %v2234 = vpack.c.b16 %v2210, %v2209
        %v2235 = vpack.c.b16 %v2212, %v2211
        %v2236 = vpack.c.b16 %v2214, %v2213
        %v2237 = vpack.c.b16 %v2216, %v2215
        %v2238 = vpack.c.b16 %v2218, %v2217
        %v2239 = vpack.c.b16 %v2220, %v2219
        %v2240 = vpack.c.b16 %v2222, %v2221
        %v2241 = vpack.c.b16 %v2224, %v2223
        %v2242 = vpack.c.b16 %v2226, %v2225
        %2243 = vrot.lane.b32.xlu0 %v2227, 24
        %v2244 = vpop.permute.xlu0 %2243
        %2245 = vrot.lane.b32.xlu0 %v2228, 24
        %v2246 = vpop.permute.xlu0 %2245
        %2247 = vrot.lane.b32.xlu0 %v2229, 24
        %v2248 = vpop.permute.xlu0 %2247
        %2249 = vrot.lane.b32.xlu0 %v2230, 24
        %v2250 = vpop.permute.xlu0 %2249
        %2251 = vrot.lane.b32.xlu0 %v2231, 24
        %v2252 = vpop.permute.xlu0 %2251
        %2253 = vrot.lane.b32.xlu0 %v2232, 24
        %v2254 = vpop.permute.xlu0 %2253
        %2255 = vrot.lane.b32.xlu0 %v2233, 24
        %v2256 = vpop.permute.xlu0 %2255
        %2257 = vrot.lane.b32.xlu0 %v2234, 24
        %v2258 = vpop.permute.xlu0 %2257
        %2259 = vrot.lane.b32.xlu0 %v2235, 24
        %v2260 = vpop.permute.xlu0 %2259
        %2261 = vrot.lane.b32.xlu0 %v2236, 24
        %v2262 = vpop.permute.xlu0 %2261
        %2263 = vrot.lane.b32.xlu0 %v2237, 24
        %v2264 = vpop.permute.xlu0 %2263
        %2265 = vrot.lane.b32.xlu0 %v2238, 24
        %v2266 = vpop.permute.xlu0 %2265
        %2267 = vrot.lane.b32.xlu0 %v2239, 24
        %v2268 = vpop.permute.xlu0 %2267
        %2269 = vrot.lane.b32.xlu0 %v2240, 24
        %v2270 = vpop.permute.xlu0 %2269
        %2271 = vrot.lane.b32.xlu0 %v2241, 24
        %v2272 = vpop.permute.xlu0 %2271
        %2273 = vrot.lane.b32.xlu0 %v2242, 24
        %v2274 = vpop.permute.xlu0 %2273
        %v2291 = vunpack.c.l.b16 %v1137
        %v2292 = vunpack.c.l.b16 %v1138
        %v2293 = vunpack.c.l.b16 %v1139
        %v2294 = vunpack.c.l.b16 %v1140
        %v2295 = vunpack.c.l.b16 %v1141
        %v2296 = vunpack.c.l.b16 %v1142
        %v2297 = vunpack.c.l.b16 %v1143
        %v2298 = vunpack.c.l.b16 %v1144
        %v2299 = vunpack.c.l.b16 %v1145
        %v2300 = vunpack.c.l.b16 %v1146
        %v2301 = vunpack.c.l.b16 %v1147
        %v2302 = vunpack.c.l.b16 %v1148
        %v2303 = vunpack.c.l.b16 %v1149
        %v2304 = vunpack.c.l.b16 %v1150
        %v2305 = vunpack.c.l.b16 %v1151
        %v2306 = vunpack.c.l.b16 %v1152
        %v2307 = vpack.c.b16 %v2291, %v2291
        %v2308 = vpack.c.b16 %v2292, %v2292
        %v2309 = vpack.c.b16 %v2293, %v2293
        %v2310 = vpack.c.b16 %v2294, %v2294
        %v2311 = vpack.c.b16 %v2295, %v2295
        %v2312 = vpack.c.b16 %v2296, %v2296
        %v2313 = vpack.c.b16 %v2297, %v2297
        %v2314 = vpack.c.b16 %v2298, %v2298
        %v2315 = vpack.c.b16 %v2299, %v2299
        %v2316 = vpack.c.b16 %v2300, %v2300
        %v2317 = vpack.c.b16 %v2301, %v2301
        %v2318 = vpack.c.b16 %v2302, %v2302
        %v2319 = vpack.c.b16 %v2303, %v2303
        %v2320 = vpack.c.b16 %v2304, %v2304
        %v2321 = vpack.c.b16 %v2305, %v2305
        %v2322 = vpack.c.b16 %v2306, %v2306
        %v2324 = vshrl.u32 %v2227, 16
        %v2326 = vshll.u32 %v2227, 16
        %v2328 = vrot.slane %v2326, 1
        %v2329 = vor.u32 %v2324, %v2328
        %v2331 = vshll.u32 %v2307, 16
        %v2333 = vrot.slane %v2331, 1
        %v2334 = vsel %vm1297, %v2329, %v2333
        %v2336 = vshrl.u32 %v2228, 16
        %v2338 = vshll.u32 %v2228, 16
        %v2340 = vrot.slane %v2338, 1
        %v2341 = vor.u32 %v2336, %v2340
        %v2343 = vshll.u32 %v2308, 16
        %v2345 = vrot.slane %v2343, 1
        %v2346 = vsel %vm1297, %v2341, %v2345
        %v2348 = vshrl.u32 %v2229, 16
        %v2350 = vshll.u32 %v2229, 16
        %v2352 = vrot.slane %v2350, 1
        %v2353 = vor.u32 %v2348, %v2352
        %v2355 = vshll.u32 %v2309, 16
        %v2357 = vrot.slane %v2355, 1
        %v2358 = vsel %vm1297, %v2353, %v2357
        %v2360 = vshrl.u32 %v2230, 16
        %v2362 = vshll.u32 %v2230, 16
        %v2364 = vrot.slane %v2362, 1
        %v2365 = vor.u32 %v2360, %v2364
        %v2367 = vshll.u32 %v2310, 16
        %v2369 = vrot.slane %v2367, 1
        %v2370 = vsel %vm1297, %v2365, %v2369
        %v2372 = vshrl.u32 %v2231, 16
        %v2374 = vshll.u32 %v2231, 16
        %v2376 = vrot.slane %v2374, 1
        %v2377 = vor.u32 %v2372, %v2376
        %v2379 = vshll.u32 %v2311, 16
        %v2381 = vrot.slane %v2379, 1
        %v2382 = vsel %vm1297, %v2377, %v2381
        %v2384 = vshrl.u32 %v2232, 16
        %v2386 = vshll.u32 %v2232, 16
        %v2388 = vrot.slane %v2386, 1
        %v2389 = vor.u32 %v2384, %v2388
        %v2391 = vshll.u32 %v2312, 16
        %v2393 = vrot.slane %v2391, 1
        %v2394 = vsel %vm1297, %v2389, %v2393
        %v2396 = vshrl.u32 %v2233, 16
        %v2398 = vshll.u32 %v2233, 16
        %v2400 = vrot.slane %v2398, 1
        %v2401 = vor.u32 %v2396, %v2400
        %v2403 = vshll.u32 %v2313, 16
        %v2405 = vrot.slane %v2403, 1
        %v2406 = vsel %vm1297, %v2401, %v2405
        %v2408 = vshrl.u32 %v2234, 16
        %v2410 = vshll.u32 %v2234, 16
        %v2412 = vrot.slane %v2410, 1
        %v2413 = vor.u32 %v2408, %v2412
        %v2415 = vshll.u32 %v2314, 16
        %v2417 = vrot.slane %v2415, 1
        %v2418 = vsel %vm1297, %v2413, %v2417
        %v2420 = vshrl.u32 %v2235, 16
        %v2422 = vshll.u32 %v2235, 16
        %v2424 = vrot.slane %v2422, 1
        %v2425 = vor.u32 %v2420, %v2424
        %v2427 = vshll.u32 %v2315, 16
        %v2429 = vrot.slane %v2427, 1
        %v2430 = vsel %vm1297, %v2425, %v2429
        %v2432 = vshrl.u32 %v2236, 16
        %v2434 = vshll.u32 %v2236, 16
        %v2436 = vrot.slane %v2434, 1
        %v2437 = vor.u32 %v2432, %v2436
        %v2439 = vshll.u32 %v2316, 16
        %v2441 = vrot.slane %v2439, 1
        %v2442 = vsel %vm1297, %v2437, %v2441
        %v2444 = vshrl.u32 %v2237, 16
        %v2446 = vshll.u32 %v2237, 16
        %v2448 = vrot.slane %v2446, 1
        %v2449 = vor.u32 %v2444, %v2448
        %v2451 = vshll.u32 %v2317, 16
        %v2453 = vrot.slane %v2451, 1
        %v2454 = vsel %vm1297, %v2449, %v2453
        %v2456 = vshrl.u32 %v2238, 16
        %v2458 = vshll.u32 %v2238, 16
        %v2460 = vrot.slane %v2458, 1
        %v2461 = vor.u32 %v2456, %v2460
        %v2463 = vshll.u32 %v2318, 16
        %v2465 = vrot.slane %v2463, 1
        %v2466 = vsel %vm1297, %v2461, %v2465
        %v2468 = vshrl.u32 %v2239, 16
        %v2470 = vshll.u32 %v2239, 16
        %v2472 = vrot.slane %v2470, 1
        %v2473 = vor.u32 %v2468, %v2472
        %v2475 = vshll.u32 %v2319, 16
        %v2477 = vrot.slane %v2475, 1
        %v2478 = vsel %vm1297, %v2473, %v2477
        %v2480 = vshrl.u32 %v2240, 16
        %v2482 = vshll.u32 %v2240, 16
        %v2484 = vrot.slane %v2482, 1
        %v2485 = vor.u32 %v2480, %v2484
        %v2487 = vshll.u32 %v2320, 16
        %v2489 = vrot.slane %v2487, 1
        %v2490 = vsel %vm1297, %v2485, %v2489
        %v2492 = vshrl.u32 %v2241, 16
        %v2494 = vshll.u32 %v2241, 16
        %v2496 = vrot.slane %v2494, 1
        %v2497 = vor.u32 %v2492, %v2496
        %v2499 = vshll.u32 %v2321, 16
        %v2501 = vrot.slane %v2499, 1
        %v2502 = vsel %vm1297, %v2497, %v2501
        %v2504 = vshrl.u32 %v2242, 16
        %v2506 = vshll.u32 %v2242, 16
        %v2508 = vrot.slane %v2506, 1
        %v2509 = vor.u32 %v2504, %v2508
        %v2511 = vshll.u32 %v2322, 16
        %v2513 = vrot.slane %v2511, 1
        %v2514 = vsel %vm1297, %v2509, %v2513
        %2515 = vrot.lane.b32.xlu0 %v2334, 28
        %v2516 = vpop.permute.xlu0 %2515
        %2517 = vrot.lane.b32.xlu0 %v2346, 28
        %v2518 = vpop.permute.xlu0 %2517
        %2519 = vrot.lane.b32.xlu0 %v2358, 28
        %v2520 = vpop.permute.xlu0 %2519
        %2521 = vrot.lane.b32.xlu0 %v2370, 28
        %v2522 = vpop.permute.xlu0 %2521
        %2523 = vrot.lane.b32.xlu0 %v2382, 28
        %v2524 = vpop.permute.xlu0 %2523
        %2525 = vrot.lane.b32.xlu0 %v2394, 28
        %v2526 = vpop.permute.xlu0 %2525
        %2527 = vrot.lane.b32.xlu0 %v2406, 28
        %v2528 = vpop.permute.xlu0 %2527
        %2529 = vrot.lane.b32.xlu0 %v2418, 28
        %v2530 = vpop.permute.xlu0 %2529
        %2531 = vrot.lane.b32.xlu0 %v2430, 28
        %v2532 = vpop.permute.xlu0 %2531
        %2533 = vrot.lane.b32.xlu0 %v2442, 28
        %v2534 = vpop.permute.xlu0 %2533
        %2535 = vrot.lane.b32.xlu0 %v2454, 28
        %v2536 = vpop.permute.xlu0 %2535
        %2537 = vrot.lane.b32.xlu0 %v2466, 28
        %v2538 = vpop.permute.xlu0 %2537
        %2539 = vrot.lane.b32.xlu0 %v2478, 28
        %v2540 = vpop.permute.xlu0 %2539
        %2541 = vrot.lane.b32.xlu0 %v2490, 28
        %v2542 = vpop.permute.xlu0 %2541
        %2543 = vrot.lane.b32.xlu0 %v2502, 28
        %v2544 = vpop.permute.xlu0 %2543
        %2545 = vrot.lane.b32.xlu0 %v2514, 28
        %v2546 = vpop.permute.xlu0 %2545
        %v2563 = vunpack.c.l.b16 %v1153
        %v2564 = vunpack.c.l.b16 %v1154
        %v2565 = vunpack.c.l.b16 %v1155
        %v2566 = vunpack.c.l.b16 %v1156
        %v2567 = vunpack.c.l.b16 %v1157
        %v2568 = vunpack.c.l.b16 %v1158
        %v2569 = vunpack.c.l.b16 %v1159
        %v2570 = vunpack.c.l.b16 %v1160
        %v2571 = vunpack.c.l.b16 %v1161
        %v2572 = vunpack.c.l.b16 %v1162
        %v2573 = vunpack.c.l.b16 %v1163
        %v2574 = vunpack.c.l.b16 %v1164
        %v2575 = vunpack.c.l.b16 %v1165
        %v2576 = vunpack.c.l.b16 %v1166
        %v2577 = vunpack.c.l.b16 %v1167
        %v2578 = vunpack.c.l.b16 %v1168
        %v2579 = vpack.c.b16 %v2196, %v2563
        %v2580 = vpack.c.b16 %v2198, %v2564
        %v2581 = vpack.c.b16 %v2200, %v2565
        %v2582 = vpack.c.b16 %v2202, %v2566
        %v2583 = vpack.c.b16 %v2204, %v2567
        %v2584 = vpack.c.b16 %v2206, %v2568
        %v2585 = vpack.c.b16 %v2208, %v2569
        %v2586 = vpack.c.b16 %v2210, %v2570
        %v2587 = vpack.c.b16 %v2212, %v2571
        %v2588 = vpack.c.b16 %v2214, %v2572
        %v2589 = vpack.c.b16 %v2216, %v2573
        %v2590 = vpack.c.b16 %v2218, %v2574
        %v2591 = vpack.c.b16 %v2220, %v2575
        %v2592 = vpack.c.b16 %v2222, %v2576
        %v2593 = vpack.c.b16 %v2224, %v2577
        %v2594 = vpack.c.b16 %v2226, %v2578
        %v2595 = vrot.slane %v2579, 1
        %v2596 = vrot.slane %v2307, 1
        %v2597 = vsel %vm1570, %v2595, %v2596
        %v2598 = vrot.slane %v2580, 1
        %v2599 = vrot.slane %v2308, 1
        %v2600 = vsel %vm1570, %v2598, %v2599
        %v2601 = vrot.slane %v2581, 1
        %v2602 = vrot.slane %v2309, 1
        %v2603 = vsel %vm1570, %v2601, %v2602
        %v2604 = vrot.slane %v2582, 1
        %v2605 = vrot.slane %v2310, 1
        %v2606 = vsel %vm1570, %v2604, %v2605
        %v2607 = vrot.slane %v2583, 1
        %v2608 = vrot.slane %v2311, 1
        %v2609 = vsel %vm1570, %v2607, %v2608
        %v2610 = vrot.slane %v2584, 1
        %v2611 = vrot.slane %v2312, 1
        %v2612 = vsel %vm1570, %v2610, %v2611
        %v2613 = vrot.slane %v2585, 1
        %v2614 = vrot.slane %v2313, 1
        %v2615 = vsel %vm1570, %v2613, %v2614
        %v2616 = vrot.slane %v2586, 1
        %v2617 = vrot.slane %v2314, 1
        %v2618 = vsel %vm1570, %v2616, %v2617
        %v2619 = vrot.slane %v2587, 1
        %v2620 = vrot.slane %v2315, 1
        %v2621 = vsel %vm1570, %v2619, %v2620
        %v2622 = vrot.slane %v2588, 1
        %v2623 = vrot.slane %v2316, 1
        %v2624 = vsel %vm1570, %v2622, %v2623
        %v2625 = vrot.slane %v2589, 1
        %v2626 = vrot.slane %v2317, 1
        %v2627 = vsel %vm1570, %v2625, %v2626
        %v2628 = vrot.slane %v2590, 1
        %v2629 = vrot.slane %v2318, 1
        %v2630 = vsel %vm1570, %v2628, %v2629
        %v2631 = vrot.slane %v2591, 1
        %v2632 = vrot.slane %v2319, 1
        %v2633 = vsel %vm1570, %v2631, %v2632
        %v2634 = vrot.slane %v2592, 1
        %v2635 = vrot.slane %v2320, 1
        %v2636 = vsel %vm1570, %v2634, %v2635
        %v2637 = vrot.slane %v2593, 1
        %v2638 = vrot.slane %v2321, 1
        %v2639 = vsel %vm1570, %v2637, %v2638
        %v2640 = vrot.slane %v2594, 1
        %v2641 = vrot.slane %v2322, 1
        %v2642 = vsel %vm1570, %v2640, %v2641
        %2643 = vrot.lane.b32.xlu0 %v2597, 32
        %v2644 = vpop.permute.xlu0 %2643
        %2645 = vrot.lane.b32.xlu0 %v2600, 32
        %v2646 = vpop.permute.xlu0 %2645
        %2647 = vrot.lane.b32.xlu0 %v2603, 32
        %v2648 = vpop.permute.xlu0 %2647
        %2649 = vrot.lane.b32.xlu0 %v2606, 32
        %v2650 = vpop.permute.xlu0 %2649
        %2651 = vrot.lane.b32.xlu0 %v2609, 32
        %v2652 = vpop.permute.xlu0 %2651
        %2653 = vrot.lane.b32.xlu0 %v2612, 32
        %v2654 = vpop.permute.xlu0 %2653
        %2655 = vrot.lane.b32.xlu0 %v2615, 32
        %v2656 = vpop.permute.xlu0 %2655
        %2657 = vrot.lane.b32.xlu0 %v2618, 32
        %v2658 = vpop.permute.xlu0 %2657
        %2659 = vrot.lane.b32.xlu0 %v2621, 32
        %v2660 = vpop.permute.xlu0 %2659
        %2661 = vrot.lane.b32.xlu0 %v2624, 32
        %v2662 = vpop.permute.xlu0 %2661
        %2663 = vrot.lane.b32.xlu0 %v2627, 32
        %v2664 = vpop.permute.xlu0 %2663
        %2665 = vrot.lane.b32.xlu0 %v2630, 32
        %v2666 = vpop.permute.xlu0 %2665
        %2667 = vrot.lane.b32.xlu0 %v2633, 32
        %v2668 = vpop.permute.xlu0 %2667
        %2669 = vrot.lane.b32.xlu0 %v2636, 32
        %v2670 = vpop.permute.xlu0 %2669
        %2671 = vrot.lane.b32.xlu0 %v2639, 32
        %v2672 = vpop.permute.xlu0 %2671
        %2673 = vrot.lane.b32.xlu0 %v2642, 32
        %v2674 = vpop.permute.xlu0 %2673
        %vm2675 = vcmask 31744
        %v2677 = vsel %vm2675, %v1233, %v1491
        %v2679 = vsel %vm2675, %v1234, %v1493
        %v2681 = vsel %vm2675, %v1235, %v1495
        %v2683 = vsel %vm2675, %v1236, %v1497
        %v2685 = vsel %vm2675, %v1237, %v1499
        %v2687 = vsel %vm2675, %v1238, %v1501
        %v2689 = vsel %vm2675, %v1239, %v1503
        %v2691 = vsel %vm2675, %v1240, %v1505
        %v2693 = vsel %vm2675, %v1241, %v1507
        %v2695 = vsel %vm2675, %v1242, %v1509
        %v2697 = vsel %vm2675, %v1243, %v1511
        %v2699 = vsel %vm2675, %v1244, %v1513
        %v2701 = vsel %vm2675, %v1245, %v1515
        %v2703 = vsel %vm2675, %v1246, %v1517
        %v2705 = vsel %vm2675, %v1247, %v1519
        %v2707 = vsel %vm2675, %v1248, %v1521
        %vm2708 = vcmask 64512
        %v2710 = vsel %vm2708, %v2677, %v1620
        %v2712 = vsel %vm2708, %v2679, %v1622
        %v2714 = vsel %vm2708, %v2681, %v1624
        %v2716 = vsel %vm2708, %v2683, %v1626
        %v2718 = vsel %vm2708, %v2685, %v1628
        %v2720 = vsel %vm2708, %v2687, %v1630
        %v2722 = vsel %vm2708, %v2689, %v1632
        %v2724 = vsel %vm2708, %v2691, %v1634
        %v2726 = vsel %vm2708, %v2693, %v1636
        %v2728 = vsel %vm2708, %v2695, %v1638
        %v2730 = vsel %vm2708, %v2697, %v1640
        %v2732 = vsel %vm2708, %v2699, %v1642
        %v2734 = vsel %vm2708, %v2701, %v1644
        %v2736 = vsel %vm2708, %v2703, %v1646
        %v2738 = vsel %vm2708, %v2705, %v1648
        %v2740 = vsel %vm2708, %v2707, %v1650
        %vm2741 = vcmask 97280
        %v2743 = vsel %vm2741, %v2710, %v1732
        %v2745 = vsel %vm2741, %v2712, %v1734
        %v2747 = vsel %vm2741, %v2714, %v1736
        %v2749 = vsel %vm2741, %v2716, %v1738
        %v2751 = vsel %vm2741, %v2718, %v1740
        %v2753 = vsel %vm2741, %v2720, %v1742
        %v2755 = vsel %vm2741, %v2722, %v1744
        %v2757 = vsel %vm2741, %v2724, %v1746
        %v2759 = vsel %vm2741, %v2726, %v1748
        %v2761 = vsel %vm2741, %v2728, %v1750
        %v2763 = vsel %vm2741, %v2730, %v1752
        %v2765 = vsel %vm2741, %v2732, %v1754
        %v2767 = vsel %vm2741, %v2734, %v1756
        %v2769 = vsel %vm2741, %v2736, %v1758
        %v2771 = vsel %vm2741, %v2738, %v1760
        %v2773 = vsel %vm2741, %v2740, %v1762
        %vm2774 = vcmask 130048
        %v2776 = vsel %vm2774, %v2743, %v2004
        %v2778 = vsel %vm2774, %v2745, %v2006
        %v2780 = vsel %vm2774, %v2747, %v2008
        %v2782 = vsel %vm2774, %v2749, %v2010
        %v2784 = vsel %vm2774, %v2751, %v2012
        %v2786 = vsel %vm2774, %v2753, %v2014
        %v2788 = vsel %vm2774, %v2755, %v2016
        %v2790 = vsel %vm2774, %v2757, %v2018
        %v2792 = vsel %vm2774, %v2759, %v2020
        %v2794 = vsel %vm2774, %v2761, %v2022
        %v2796 = vsel %vm2774, %v2763, %v2024
        %v2798 = vsel %vm2774, %v2765, %v2026
        %v2800 = vsel %vm2774, %v2767, %v2028
        %v2802 = vsel %vm2774, %v2769, %v2030
        %v2804 = vsel %vm2774, %v2771, %v2032
        %v2806 = vsel %vm2774, %v2773, %v2034
        %vm2807 = vcmask 162816
        %v2809 = vsel %vm2807, %v2776, %v2132
        %v2811 = vsel %vm2807, %v2778, %v2134
        %v2813 = vsel %vm2807, %v2780, %v2136
        %v2815 = vsel %vm2807, %v2782, %v2138
        %v2817 = vsel %vm2807, %v2784, %v2140
        %v2819 = vsel %vm2807, %v2786, %v2142
        %v2821 = vsel %vm2807, %v2788, %v2144
        %v2823 = vsel %vm2807, %v2790, %v2146
        %v2825 = vsel %vm2807, %v2792, %v2148
        %v2827 = vsel %vm2807, %v2794, %v2150
        %v2829 = vsel %vm2807, %v2796, %v2152
        %v2831 = vsel %vm2807, %v2798, %v2154
        %v2833 = vsel %vm2807, %v2800, %v2156
        %v2835 = vsel %vm2807, %v2802, %v2158
        %v2837 = vsel %vm2807, %v2804, %v2160
        %v2839 = vsel %vm2807, %v2806, %v2162
        %vm2840 = vcmask 195584
        %v2842 = vsel %vm2840, %v2809, %v2244
        %v2844 = vsel %vm2840, %v2811, %v2246
        %v2846 = vsel %vm2840, %v2813, %v2248
        %v2848 = vsel %vm2840, %v2815, %v2250
        %v2850 = vsel %vm2840, %v2817, %v2252
        %v2852 = vsel %vm2840, %v2819, %v2254
        %v2854 = vsel %vm2840, %v2821, %v2256
        %v2856 = vsel %vm2840, %v2823, %v2258
        %v2858 = vsel %vm2840, %v2825, %v2260
        %v2860 = vsel %vm2840, %v2827, %v2262
        %v2862 = vsel %vm2840, %v2829, %v2264
        %v2864 = vsel %vm2840, %v2831, %v2266
        %v2866 = vsel %vm2840, %v2833, %v2268
        %v2868 = vsel %vm2840, %v2835, %v2270
        %v2870 = vsel %vm2840, %v2837, %v2272
        %v2872 = vsel %vm2840, %v2839, %v2274
        %vm2873 = vcmask 228352
        %v2875 = vsel %vm2873, %v2842, %v2516
        %v2877 = vsel %vm2873, %v2844, %v2518
        %v2879 = vsel %vm2873, %v2846, %v2520
        %v2881 = vsel %vm2873, %v2848, %v2522
        %v2883 = vsel %vm2873, %v2850, %v2524
        %v2885 = vsel %vm2873, %v2852, %v2526
        %v2887 = vsel %vm2873, %v2854, %v2528
        %v2889 = vsel %vm2873, %v2856, %v2530
        %v2891 = vsel %vm2873, %v2858, %v2532
        %v2893 = vsel %vm2873, %v2860, %v2534
        %v2895 = vsel %vm2873, %v2862, %v2536
        %v2897 = vsel %vm2873, %v2864, %v2538
        %v2899 = vsel %vm2873, %v2866, %v2540
        %v2901 = vsel %vm2873, %v2868, %v2542
        %v2903 = vsel %vm2873, %v2870, %v2544
        %v2905 = vsel %vm2873, %v2872, %v2546
        %vm2906 = vcmask 261120
        %v2908 = vsel %vm2906, %v2875, %v2644
        %v2910 = vsel %vm2906, %v2877, %v2646
        %v2912 = vsel %vm2906, %v2879, %v2648
        %v2914 = vsel %vm2906, %v2881, %v2650
        %v2916 = vsel %vm2906, %v2883, %v2652
        %v2918 = vsel %vm2906, %v2885, %v2654
        %v2920 = vsel %vm2906, %v2887, %v2656
        %v2922 = vsel %vm2906, %v2889, %v2658
        %v2924 = vsel %vm2906, %v2891, %v2660
        %v2926 = vsel %vm2906, %v2893, %v2662
        %v2928 = vsel %vm2906, %v2895, %v2664
        %v2930 = vsel %vm2906, %v2897, %v2666
        %v2932 = vsel %vm2906, %v2899, %v2668
        %v2934 = vsel %vm2906, %v2901, %v2670
        %v2936 = vsel %vm2906, %v2903, %v2672
        %v2938 = vsel %vm2906, %v2905, %v2674
        %v2939 = vld [vmem:[#allocation7] sm:$0xf]
        %v2940 = vld [vmem:[#allocation7 + $0x4] sm:$0xf]
        %v2941 = vld [vmem:[#allocation7 + $0x8] sm:$0xf]
        %v2942 = vld [vmem:[#allocation7 + $0xc] sm:$0xf]
        %v2943 = vld [vmem:[#allocation7 + $0x10] sm:$0x3]
        %v2944 = vld [vmem:[#allocation9] sm:$0x1]
        %v2946 = vlaneseq
        %v2947 = vshrl.u32 %v2946, 7
        %v2948 = vsub.s32 0, %v2947
        %v2949 = vrot.slane %v2944, %v2948
        %v2956 = vunpack.c.l.b16 %v2939
        %v2957 = vunpack.c.l.b16 %v2940
        %v2958 = vunpack.c.l.b16 %v2941
        %v2959 = vunpack.c.l.b16 %v2942
        %v2960 = vunpack.c.l.b16 %v2943
        %v2961 = vpack.c.b16 %v2957, %v2956
        %v2962 = vpack.c.b16 %v2959, %v2958
        %v2963 = vpack.c.b16 %v2960, %v2960
        %vm2966 = vcmask 293888
        %v2967 = vsel %vm2966, %v2908, 0
        %v2969 = vsel %vm2966, %v2910, 0
        %v2971 = vsel %vm2966, %v2912, 0
        %v2973 = vsel %vm2966, %v2914, 0
        %v2975 = vsel %vm2966, %v2916, 0
        %v2977 = vsel %vm2966, %v2918, 0
        %v2979 = vsel %vm2966, %v2920, 0
        %v2981 = vsel %vm2966, %v2922, 0
        %v2983 = vsel %vm2966, %v2924, 0
        %v2985 = vsel %vm2966, %v2926, 0
        %v2987 = vsel %vm2966, %v2928, 0
        %v2989 = vsel %vm2966, %v2930, 0
        %v2991 = vsel %vm2966, %v2932, 0
        %v2993 = vsel %vm2966, %v2934, 0
        %v2995 = vsel %vm2966, %v2936, 0
        %v2997 = vsel %vm2966, %v2938, 0
        %vm2999 = vcmask 1041408
        %v3001 = vsel %vm2999, %v2963, 0
        %3003 = vmatprep.subr.bf16.mxu0 0
        %3004 = vmatpush1.bf16.msra.mxu0 %v2961
        %3005 = vmatprep.subr.bf16.mxu0 0
        %3006 = vmatpush1.bf16.msra.mxu0 %v2962
        %3007 = vmatprep.subr.bf16.mxu0 0
        %3008 = vmatpush1.bf16.msra.mxu0 %v3001
        %3009 = vmatprep.subr.bf16.mxu0 0
        %3010 = vmatpush1.bf16.msra.mxu0 0
        %3011 = vmatprep.subr.bf16.mxu0 0
        %3012 = vmatpush1.bf16.msra.mxu0 0
        %3013 = vmatprep.subr.bf16.mxu0 0
        %3014 = vmatpush1.bf16.msra.mxu0 0
        %3015 = vmatprep.subr.bf16.mxu0 0
        %3016 = vmatpush1.bf16.msra.mxu0 0
        %3017 = vmatprep.subr.bf16.mxu0 0
        %3018 = vmatpush1.bf16.msra.mxu0 0
        %3019 = vmatprep.subr.bf16.mxu0 0
        %3020 = vmatpush1.bf16.msra.mxu0 0
        %3021 = vmatprep.subr.bf16.mxu0 0
        %3022 = vmatpush1.bf16.msra.mxu0 0
        %3023 = vmatprep.subr.bf16.mxu0 0
        %3024 = vmatpush1.bf16.msra.mxu0 0
        %3025 = vmatprep.subr.bf16.mxu0 0
        %3026 = vmatpush1.bf16.msra.mxu0 0
        %3027 = vmatprep.subr.bf16.mxu0 0
        %3028 = vmatpush1.bf16.msra.mxu0 0
        %3029 = vmatprep.subr.bf16.mxu0 0
        %3030 = vmatpush1.bf16.msra.mxu0 0
        %3031 = vmatprep.subr.bf16.mxu0 0
        %3032 = vmatpush1.bf16.msra.mxu0 0
        %3033 = vmatprep.subr.bf16.mxu0 0
        %3034 = vmatpush1.bf16.msra.mxu0 0
        %3035 = vmatprep.mubr.bf16.mxu0 0
        %3036 = vmatmul.mubr.bf16.gmra.mrb[0].mxu0 %v2967
        %v3037 = vpop.f32.mrb[0].mxu0
        %v3038 = vadd.f32 %v2949, %v3037
        %v3039 = vpop.f32.mrb[0].mxu0
        %v3040 = vpop.f32.mrb[0].mxu0
        %v3041 = vadd.f32 %v2949, %v3040
        %v3042 = vpop.f32.mrb[0].mxu0
        %3043 = vmatprep.mubr.bf16.mxu0 0
        %3044 = vmatmul.mubr.bf16.gmra.mrb[0].mxu0 %v2969
        %v3045 = vpop.f32.mrb[0].mxu0
        %v3046 = vadd.f32 %v2949, %v3045
        %v3047 = vpop.f32.mrb[0].mxu0
        %v3048 = vpop.f32.mrb[0].mxu0
        %v3049 = vadd.f32 %v2949, %v3048
        %v3050 = vpop.f32.mrb[0].mxu0
        %3051 = vmatprep.mubr.bf16.mxu0 0
        %3052 = vmatmul.mubr.bf16.gmra.mrb[0].mxu0 %v2971
        %v3053 = vpop.f32.mrb[0].mxu0
        %v3054 = vadd.f32 %v2949, %v3053
        %v3055 = vpop.f32.mrb[0].mxu0
        %v3056 = vpop.f32.mrb[0].mxu0
        %v3057 = vadd.f32 %v2949, %v3056
        %v3058 = vpop.f32.mrb[0].mxu0
        %3059 = vmatprep.mubr.bf16.mxu0 0
        %3060 = vmatmul.mubr.bf16.gmra.mrb[0].mxu0 %v2973
        %v3061 = vpop.f32.mrb[0].mxu0
        %v3062 = vadd.f32 %v2949, %v3061
        %v3063 = vpop.f32.mrb[0].mxu0
        %v3064 = vpop.f32.mrb[0].mxu0
        %v3065 = vadd.f32 %v2949, %v3064
        %v3066 = vpop.f32.mrb[0].mxu0
        %3067 = vmatprep.mubr.bf16.mxu0 0
        %3068 = vmatmul.mubr.bf16.gmra.mrb[0].mxu0 %v2975
        %v3069 = vpop.f32.mrb[0].mxu0
        %v3070 = vadd.f32 %v2949, %v3069
        %v3071 = vpop.f32.mrb[0].mxu0
        %v3072 = vpop.f32.mrb[0].mxu0
        %v3073 = vadd.f32 %v2949, %v3072
        %v3074 = vpop.f32.mrb[0].mxu0
        %3075 = vmatprep.mubr.bf16.mxu0 0
        %3076 = vmatmul.mubr.bf16.gmra.mrb[0].mxu0 %v2977
        %v3077 = vpop.f32.mrb[0].mxu0
        %v3078 = vadd.f32 %v2949, %v3077
        %v3079 = vpop.f32.mrb[0].mxu0
        %v3080 = vpop.f32.mrb[0].mxu0
        %v3081 = vadd.f32 %v2949, %v3080
        %v3082 = vpop.f32.mrb[0].mxu0
        %3083 = vmatprep.mubr.bf16.mxu0 0
        %3084 = vmatmul.mubr.bf16.gmra.mrb[0].mxu0 %v2979
        %v3085 = vpop.f32.mrb[0].mxu0
        %v3086 = vadd.f32 %v2949, %v3085
        %v3087 = vpop.f32.mrb[0].mxu0
        %v3088 = vpop.f32.mrb[0].mxu0
        %v3089 = vadd.f32 %v2949, %v3088
        %v3090 = vpop.f32.mrb[0].mxu0
        %3091 = vmatprep.mubr.bf16.mxu0 0
        %3092 = vmatmul.mubr.bf16.gmra.mrb[0].mxu0 %v2981
        %v3093 = vpop.f32.mrb[0].mxu0
        %v3094 = vadd.f32 %v2949, %v3093
        %v3095 = vpop.f32.mrb[0].mxu0
        %v3096 = vpop.f32.mrb[0].mxu0
        %v3097 = vadd.f32 %v2949, %v3096
        %v3098 = vpop.f32.mrb[0].mxu0
        %3099 = vmatprep.mubr.bf16.mxu0 0
        %3100 = vmatmul.mubr.bf16.gmra.mrb[0].mxu0 %v2983
        %v3101 = vpop.f32.mrb[0].mxu0
        %v3102 = vadd.f32 %v2949, %v3101
        %v3103 = vpop.f32.mrb[0].mxu0
        %v3104 = vpop.f32.mrb[0].mxu0
        %v3105 = vadd.f32 %v2949, %v3104
        %v3106 = vpop.f32.mrb[0].mxu0
        %3107 = vmatprep.mubr.bf16.mxu0 0
        %3108 = vmatmul.mubr.bf16.gmra.mrb[0].mxu0 %v2985
        %v3109 = vpop.f32.mrb[0].mxu0
        %v3110 = vadd.f32 %v2949, %v3109
        %v3111 = vpop.f32.mrb[0].mxu0
        %v3112 = vpop.f32.mrb[0].mxu0
        %v3113 = vadd.f32 %v2949, %v3112
        %v3114 = vpop.f32.mrb[0].mxu0
        %3115 = vmatprep.mubr.bf16.mxu0 0
        %3116 = vmatmul.mubr.bf16.gmra.mrb[0].mxu0 %v2987
        %v3117 = vpop.f32.mrb[0].mxu0
        %v3118 = vadd.f32 %v2949, %v3117
        %v3119 = vpop.f32.mrb[0].mxu0
        %v3120 = vpop.f32.mrb[0].mxu0
        %v3121 = vadd.f32 %v2949, %v3120
        %v3122 = vpop.f32.mrb[0].mxu0
        %3123 = vmatprep.mubr.bf16.mxu0 0
        %3124 = vmatmul.mubr.bf16.gmra.mrb[0].mxu0 %v2989
        %v3125 = vpop.f32.mrb[0].mxu0
        %v3126 = vadd.f32 %v2949, %v3125
        %v3127 = vpop.f32.mrb[0].mxu0
        %v3128 = vpop.f32.mrb[0].mxu0
        %v3129 = vadd.f32 %v2949, %v3128
        %v3130 = vpop.f32.mrb[0].mxu0
        %3131 = vmatprep.mubr.bf16.mxu0 0
        %3132 = vmatmul.mubr.bf16.gmra.mrb[0].mxu0 %v2991
        %v3133 = vpop.f32.mrb[0].mxu0
        %v3134 = vadd.f32 %v2949, %v3133
        %v3135 = vpop.f32.mrb[0].mxu0
        %v3136 = vpop.f32.mrb[0].mxu0
        %v3137 = vadd.f32 %v2949, %v3136
        %v3138 = vpop.f32.mrb[0].mxu0
        %3139 = vmatprep.mubr.bf16.mxu0 0
        %3140 = vmatmul.mubr.bf16.gmra.mrb[0].mxu0 %v2993
        %v3141 = vpop.f32.mrb[0].mxu0
        %v3142 = vadd.f32 %v2949, %v3141
        %v3143 = vpop.f32.mrb[0].mxu0
        %v3144 = vpop.f32.mrb[0].mxu0
        %v3145 = vadd.f32 %v2949, %v3144
        %v3146 = vpop.f32.mrb[0].mxu0
        %3147 = vmatprep.mubr.bf16.mxu0 0
        %3148 = vmatmul.mubr.bf16.gmra.mrb[0].mxu0 %v2995
        %v3149 = vpop.f32.mrb[0].mxu0
        %v3150 = vadd.f32 %v2949, %v3149
        %v3151 = vpop.f32.mrb[0].mxu0
        %v3152 = vpop.f32.mrb[0].mxu0
        %v3153 = vadd.f32 %v2949, %v3152
        %v3154 = vpop.f32.mrb[0].mxu0
        %3155 = vmatprep.mubr.bf16.mxu0 0
        %3156 = vmatmul.mubr.bf16.gmra.mrb[0].mxu0 %v2997
        %v3157 = vpop.f32.mrb[0].mxu0
        %v3158 = vadd.f32 %v2949, %v3157
        %v3159 = vpop.f32.mrb[0].mxu0
        %v3160 = vpop.f32.mrb[0].mxu0
        %v3161 = vadd.f32 %v2949, %v3160
        %v3162 = vpop.f32.mrb[0].mxu0
        %3163 = vdwg.mxu0
        %v3164 = vmax.f32 %v3038, 0.0
        %v3165 = vmax.f32 %v3041, 0.0
        %v3166 = vmax.f32 %v3046, 0.0
        %v3167 = vmax.f32 %v3049, 0.0
        %v3168 = vmax.f32 %v3054, 0.0
        %v3169 = vmax.f32 %v3057, 0.0
        %v3170 = vmax.f32 %v3062, 0.0
        %v3171 = vmax.f32 %v3065, 0.0
        %v3172 = vmax.f32 %v3070, 0.0
        %v3173 = vmax.f32 %v3073, 0.0
        %v3174 = vmax.f32 %v3078, 0.0
        %v3175 = vmax.f32 %v3081, 0.0
        %v3176 = vmax.f32 %v3086, 0.0
        %v3177 = vmax.f32 %v3089, 0.0
        %v3178 = vmax.f32 %v3094, 0.0
        %v3179 = vmax.f32 %v3097, 0.0
        %v3180 = vmax.f32 %v3102, 0.0
        %v3181 = vmax.f32 %v3105, 0.0
        %v3182 = vmax.f32 %v3110, 0.0
        %v3183 = vmax.f32 %v3113, 0.0
        %v3184 = vmax.f32 %v3118, 0.0
        %v3185 = vmax.f32 %v3121, 0.0
        %v3186 = vmax.f32 %v3126, 0.0
        %v3187 = vmax.f32 %v3129, 0.0
        %v3188 = vmax.f32 %v3134, 0.0
        %v3189 = vmax.f32 %v3137, 0.0
        %v3190 = vmax.f32 %v3142, 0.0
        %v3191 = vmax.f32 %v3145, 0.0
        %v3192 = vmax.f32 %v3150, 0.0
        %v3193 = vmax.f32 %v3153, 0.0
        %v3194 = vmax.f32 %v3158, 0.0
        %v3195 = vmax.f32 %v3161, 0.0
        %v3196 = vpack.c.bf16 %v3165, %v3164
        %v3197 = vpack.c.bf16 %v3167, %v3166
        %v3198 = vpack.c.bf16 %v3169, %v3168
        %v3199 = vpack.c.bf16 %v3171, %v3170
        %v3200 = vpack.c.bf16 %v3173, %v3172
        %v3201 = vpack.c.bf16 %v3175, %v3174
        %v3202 = vpack.c.bf16 %v3177, %v3176
        %v3203 = vpack.c.bf16 %v3179, %v3178
        %v3204 = vpack.c.bf16 %v3181, %v3180
        %v3205 = vpack.c.bf16 %v3183, %v3182
        %v3206 = vpack.c.bf16 %v3185, %v3184
        %v3207 = vpack.c.bf16 %v3187, %v3186
        %v3208 = vpack.c.bf16 %v3189, %v3188
        %v3209 = vpack.c.bf16 %v3191, %v3190
        %v3210 = vpack.c.bf16 %v3193, %v3192
        %v3211 = vpack.c.bf16 %v3195, %v3194
        %v3228 = vunpack.c.l.b16 %v3196
        %v3229 = vunpack.c.h.b16 %v3196
        %v3230 = vunpack.c.l.b16 %v3197
        %v3231 = vunpack.c.h.b16 %v3197
        %v3232 = vunpack.c.l.b16 %v3198
        %v3233 = vunpack.c.h.b16 %v3198
        %v3234 = vunpack.c.l.b16 %v3199
        %v3235 = vunpack.c.h.b16 %v3199
        %v3236 = vunpack.c.l.b16 %v3200
        %v3237 = vunpack.c.h.b16 %v3200
        %v3238 = vunpack.c.l.b16 %v3201
        %v3239 = vunpack.c.h.b16 %v3201
        %v3240 = vunpack.c.l.b16 %v3202
        %v3241 = vunpack.c.h.b16 %v3202
        %v3242 = vunpack.c.l.b16 %v3203
        %v3243 = vunpack.c.h.b16 %v3203
        %v3244 = vunpack.c.l.b16 %v3204
        %v3245 = vunpack.c.h.b16 %v3204
        %v3246 = vunpack.c.l.b16 %v3205
        %v3247 = vunpack.c.h.b16 %v3205
        %v3248 = vunpack.c.l.b16 %v3206
        %v3249 = vunpack.c.h.b16 %v3206
        %v3250 = vunpack.c.l.b16 %v3207
        %v3251 = vunpack.c.h.b16 %v3207
        %v3252 = vunpack.c.l.b16 %v3208
        %v3253 = vunpack.c.h.b16 %v3208
        %v3254 = vunpack.c.l.b16 %v3209
        %v3255 = vunpack.c.h.b16 %v3209
        %v3256 = vunpack.c.l.b16 %v3210
        %v3257 = vunpack.c.h.b16 %v3210
        %v3258 = vunpack.c.l.b16 %v3211
        %v3259 = vunpack.c.h.b16 %v3211
        %v3260 = vpack.c.b16 %v3228, %v3228
        %v3261 = vpack.c.b16 %v3229, %v3229
        %v3262 = vpack.c.b16 %v3230, %v3230
        %v3263 = vpack.c.b16 %v3231, %v3231
        %v3264 = vpack.c.b16 %v3232, %v3232
        %v3265 = vpack.c.b16 %v3233, %v3233
        %v3266 = vpack.c.b16 %v3234, %v3234
        %v3267 = vpack.c.b16 %v3235, %v3235
        %v3268 = vpack.c.b16 %v3236, %v3236
        %v3269 = vpack.c.b16 %v3237, %v3237
        %v3270 = vpack.c.b16 %v3238, %v3238
        %v3271 = vpack.c.b16 %v3239, %v3239
        %v3272 = vpack.c.b16 %v3240, %v3240
        %v3273 = vpack.c.b16 %v3241, %v3241
        %v3274 = vpack.c.b16 %v3242, %v3242
        %v3275 = vpack.c.b16 %v3243, %v3243
        %v3276 = vpack.c.b16 %v3244, %v3244
        %v3277 = vpack.c.b16 %v3245, %v3245
        %v3278 = vpack.c.b16 %v3246, %v3246
        %v3279 = vpack.c.b16 %v3247, %v3247
        %v3280 = vpack.c.b16 %v3248, %v3248
        %v3281 = vpack.c.b16 %v3249, %v3249
        %v3282 = vpack.c.b16 %v3250, %v3250
        %v3283 = vpack.c.b16 %v3251, %v3251
        %v3284 = vpack.c.b16 %v3252, %v3252
        %v3285 = vpack.c.b16 %v3253, %v3253
        %v3286 = vpack.c.b16 %v3254, %v3254
        %v3287 = vpack.c.b16 %v3255, %v3255
        %v3288 = vpack.c.b16 %v3256, %v3256
        %v3289 = vpack.c.b16 %v3257, %v3257
        %v3290 = vpack.c.b16 %v3258, %v3258
        %v3291 = vpack.c.b16 %v3259, %v3259
        %v3293 = vshrl.u32 %v3260, 16
        %v3295 = vrot.slane %v3293, 7
        %v3296 = vshll.u32 %v3260, 16
        %v3298 = vor.u32 %v3295, %v3296
        %v3299 = vrot.slane %v3295, 4
        %v3301 = vshrl.u32 %v3261, 16
        %v3303 = vrot.slane %v3301, 7
        %v3304 = vshll.u32 %v3261, 16
        %v3306 = vor.u32 %v3303, %v3304
        %v3307 = vsel %vm537, %v3299, %v3306
        %v3308 = vrot.slane %v3303, 4
        %v3310 = vshrl.u32 %v3262, 16
        %v3312 = vrot.slane %v3310, 7
        %v3313 = vshll.u32 %v3262, 16
        %v3315 = vor.u32 %v3312, %v3313
        %v3316 = vrot.slane %v3312, 4
        %v3318 = vshrl.u32 %v3263, 16
        %v3320 = vrot.slane %v3318, 7
        %v3321 = vshll.u32 %v3263, 16
        %v3323 = vor.u32 %v3320, %v3321
        %v3324 = vsel %vm537, %v3316, %v3323
        %v3325 = vrot.slane %v3320, 4
        %v3327 = vshrl.u32 %v3264, 16
        %v3329 = vrot.slane %v3327, 7
        %v3330 = vshll.u32 %v3264, 16
        %v3332 = vor.u32 %v3329, %v3330
        %v3333 = vrot.slane %v3329, 4
        %v3335 = vshrl.u32 %v3265, 16
        %v3337 = vrot.slane %v3335, 7
        %v3338 = vshll.u32 %v3265, 16
        %v3340 = vor.u32 %v3337, %v3338
        %v3341 = vsel %vm537, %v3333, %v3340
        %v3342 = vrot.slane %v3337, 4
        %v3344 = vshrl.u32 %v3266, 16
        %v3346 = vrot.slane %v3344, 7
        %v3347 = vshll.u32 %v3266, 16
        %v3349 = vor.u32 %v3346, %v3347
        %v3350 = vrot.slane %v3346, 4
        %v3352 = vshrl.u32 %v3267, 16
        %v3354 = vrot.slane %v3352, 7
        %v3355 = vshll.u32 %v3267, 16
        %v3357 = vor.u32 %v3354, %v3355
        %v3358 = vsel %vm537, %v3350, %v3357
        %v3359 = vrot.slane %v3354, 4
        %v3361 = vshrl.u32 %v3268, 16
        %v3363 = vrot.slane %v3361, 7
        %v3364 = vshll.u32 %v3268, 16
        %v3366 = vor.u32 %v3363, %v3364
        %v3367 = vrot.slane %v3363, 4
        %v3369 = vshrl.u32 %v3269, 16
        %v3371 = vrot.slane %v3369, 7
        %v3372 = vshll.u32 %v3269, 16
        %v3374 = vor.u32 %v3371, %v3372
        %v3375 = vsel %vm537, %v3367, %v3374
        %v3376 = vrot.slane %v3371, 4
        %v3378 = vshrl.u32 %v3270, 16
        %v3380 = vrot.slane %v3378, 7
        %v3381 = vshll.u32 %v3270, 16
        %v3383 = vor.u32 %v3380, %v3381
        %v3384 = vrot.slane %v3380, 4
        %v3386 = vshrl.u32 %v3271, 16
        %v3388 = vrot.slane %v3386, 7
        %v3389 = vshll.u32 %v3271, 16
        %v3391 = vor.u32 %v3388, %v3389
        %v3392 = vsel %vm537, %v3384, %v3391
        %v3393 = vrot.slane %v3388, 4
        %v3395 = vshrl.u32 %v3272, 16
        %v3397 = vrot.slane %v3395, 7
        %v3398 = vshll.u32 %v3272, 16
        %v3400 = vor.u32 %v3397, %v3398
        %v3401 = vrot.slane %v3397, 4
        %v3403 = vshrl.u32 %v3273, 16
        %v3405 = vrot.slane %v3403, 7
        %v3406 = vshll.u32 %v3273, 16
        %v3408 = vor.u32 %v3405, %v3406
        %v3409 = vsel %vm537, %v3401, %v3408
        %v3410 = vrot.slane %v3405, 4
        %v3412 = vshrl.u32 %v3274, 16
        %v3414 = vrot.slane %v3412, 7
        %v3415 = vshll.u32 %v3274, 16
        %v3417 = vor.u32 %v3414, %v3415
        %v3418 = vrot.slane %v3414, 4
        %v3420 = vshrl.u32 %v3275, 16
        %v3422 = vrot.slane %v3420, 7
        %v3423 = vshll.u32 %v3275, 16
        %v3425 = vor.u32 %v3422, %v3423
        %v3426 = vsel %vm537, %v3418, %v3425
        %v3427 = vrot.slane %v3422, 4
        %v3429 = vshrl.u32 %v3276, 16
        %v3431 = vrot.slane %v3429, 7
        %v3432 = vshll.u32 %v3276, 16
        %v3434 = vor.u32 %v3431, %v3432
        %v3435 = vrot.slane %v3431, 4
        %v3437 = vshrl.u32 %v3277, 16
        %v3439 = vrot.slane %v3437, 7
        %v3440 = vshll.u32 %v3277, 16
        %v3442 = vor.u32 %v3439, %v3440
        %v3443 = vsel %vm537, %v3435, %v3442
        %v3444 = vrot.slane %v3439, 4
        %v3446 = vshrl.u32 %v3278, 16
        %v3448 = vrot.slane %v3446, 7
        %v3449 = vshll.u32 %v3278, 16
        %v3451 = vor.u32 %v3448, %v3449
        %v3452 = vrot.slane %v3448, 4
        %v3454 = vshrl.u32 %v3279, 16
        %v3456 = vrot.slane %v3454, 7
        %v3457 = vshll.u32 %v3279, 16
        %v3459 = vor.u32 %v3456, %v3457
        %v3460 = vsel %vm537, %v3452, %v3459
        %v3461 = vrot.slane %v3456, 4
        %v3463 = vshrl.u32 %v3280, 16
        %v3465 = vrot.slane %v3463, 7
        %v3466 = vshll.u32 %v3280, 16
        %v3468 = vor.u32 %v3465, %v3466
        %v3469 = vrot.slane %v3465, 4
        %v3471 = vshrl.u32 %v3281, 16
        %v3473 = vrot.slane %v3471, 7
        %v3474 = vshll.u32 %v3281, 16
        %v3476 = vor.u32 %v3473, %v3474
        %v3477 = vsel %vm537, %v3469, %v3476
        %v3478 = vrot.slane %v3473, 4
        %v3480 = vshrl.u32 %v3282, 16
        %v3482 = vrot.slane %v3480, 7
        %v3483 = vshll.u32 %v3282, 16
        %v3485 = vor.u32 %v3482, %v3483
        %v3486 = vrot.slane %v3482, 4
        %v3488 = vshrl.u32 %v3283, 16
        %v3490 = vrot.slane %v3488, 7
        %v3491 = vshll.u32 %v3283, 16
        %v3493 = vor.u32 %v3490, %v3491
        %v3494 = vsel %vm537, %v3486, %v3493
        %v3495 = vrot.slane %v3490, 4
        %v3497 = vshrl.u32 %v3284, 16
        %v3499 = vrot.slane %v3497, 7
        %v3500 = vshll.u32 %v3284, 16
        %v3502 = vor.u32 %v3499, %v3500
        %v3503 = vrot.slane %v3499, 4
        %v3505 = vshrl.u32 %v3285, 16
        %v3507 = vrot.slane %v3505, 7
        %v3508 = vshll.u32 %v3285, 16
        %v3510 = vor.u32 %v3507, %v3508
        %v3511 = vsel %vm537, %v3503, %v3510
        %v3512 = vrot.slane %v3507, 4
        %v3514 = vshrl.u32 %v3286, 16
        %v3516 = vrot.slane %v3514, 7
        %v3517 = vshll.u32 %v3286, 16
        %v3519 = vor.u32 %v3516, %v3517
        %v3520 = vrot.slane %v3516, 4
        %v3522 = vshrl.u32 %v3287, 16
        %v3524 = vrot.slane %v3522, 7
        %v3525 = vshll.u32 %v3287, 16
        %v3527 = vor.u32 %v3524, %v3525
        %v3528 = vsel %vm537, %v3520, %v3527
        %v3529 = vrot.slane %v3524, 4
        %v3531 = vshrl.u32 %v3288, 16
        %v3533 = vrot.slane %v3531, 7
        %v3534 = vshll.u32 %v3288, 16
        %v3536 = vor.u32 %v3533, %v3534
        %v3537 = vrot.slane %v3533, 4
        %v3539 = vshrl.u32 %v3289, 16
        %v3541 = vrot.slane %v3539, 7
        %v3542 = vshll.u32 %v3289, 16
        %v3544 = vor.u32 %v3541, %v3542
        %v3545 = vsel %vm537, %v3537, %v3544
        %v3546 = vrot.slane %v3541, 4
        %v3548 = vshrl.u32 %v3290, 16
        %v3550 = vrot.slane %v3548, 7
        %v3551 = vshll.u32 %v3290, 16
        %v3553 = vor.u32 %v3550, %v3551
        %v3554 = vrot.slane %v3550, 4
        %v3556 = vshrl.u32 %v3291, 16
        %v3558 = vrot.slane %v3556, 7
        %v3559 = vshll.u32 %v3291, 16
        %v3561 = vor.u32 %v3558, %v3559
        %v3562 = vsel %vm537, %v3554, %v3561
        %v3563 = vrot.slane %v3558, 4
        %s3612 = scalar_lea.vmem [#allocation3], 12
        %vm3613 = vcmask 1043456
        %vm3614 = vmand %vm3613, %vm860
        %v3615 = vld [vmem:[%s3612] sm:$0xf]
        %v3616 = vsel %vm3614, %v3298, %v3615
        %3617 = vst [vmem:[%s3612] sm:$0xf] %v3616
        %3618 = vst [vmem:[%s3612 + $0x4] sm:$0xf] %v3307
        %vm3619 = vcmask 1040384
        %vm3620 = vmand %vm3619, %vm535
        %v3621 = vld [vmem:[%s3612 + $0x8] sm:$0x1]
        %v3622 = vsel %vm3620, %v3308, %v3621
        %3623 = vst [vmem:[%s3612 + $0x8] sm:$0x1] %v3622
        %v3624 = vld [vmem:[%s3612 + $0xc] sm:$0xf]
        %v3625 = vsel %vm3614, %v3315, %v3624
        %3626 = vst [vmem:[%s3612 + $0xc] sm:$0xf] %v3625
        %3627 = vst [vmem:[%s3612 + $0x10] sm:$0xf] %v3324
        %v3628 = vld [vmem:[%s3612 + $0x14] sm:$0x1]
        %v3629 = vsel %vm3620, %v3325, %v3628
        %3630 = vst [vmem:[%s3612 + $0x14] sm:$0x1] %v3629
        %v3631 = vld [vmem:[%s3612 + $0x18] sm:$0xf]
        %v3632 = vsel %vm3614, %v3332, %v3631
        %3633 = vst [vmem:[%s3612 + $0x18] sm:$0xf] %v3632
        %3634 = vst [vmem:[%s3612 + $0x1c] sm:$0xf] %v3341
        %v3635 = vld [vmem:[%s3612 + $0x20] sm:$0x1]
        %v3636 = vsel %vm3620, %v3342, %v3635
        %3637 = vst [vmem:[%s3612 + $0x20] sm:$0x1] %v3636
        %v3638 = vld [vmem:[%s3612 + $0x24] sm:$0xf]
        %v3639 = vsel %vm3614, %v3349, %v3638
        %3640 = vst [vmem:[%s3612 + $0x24] sm:$0xf] %v3639
        %3641 = vst [vmem:[%s3612 + $0x28] sm:$0xf] %v3358
        %v3642 = vld [vmem:[%s3612 + $0x2c] sm:$0x1]
        %v3643 = vsel %vm3620, %v3359, %v3642
        %3644 = vst [vmem:[%s3612 + $0x2c] sm:$0x1] %v3643
        %v3645 = vld [vmem:[%s3612 + $0x30] sm:$0xf]
        %v3646 = vsel %vm3614, %v3366, %v3645
        %3647 = vst [vmem:[%s3612 + $0x30] sm:$0xf] %v3646
        %3648 = vst [vmem:[%s3612 + $0x34] sm:$0xf] %v3375
        %v3649 = vld [vmem:[%s3612 + $0x38] sm:$0x1]
        %v3650 = vsel %vm3620, %v3376, %v3649
        %3651 = vst [vmem:[%s3612 + $0x38] sm:$0x1] %v3650
        %v3652 = vld [vmem:[%s3612 + $0x3c] sm:$0xf]
        %v3653 = vsel %vm3614, %v3383, %v3652
        %3654 = vst [vmem:[%s3612 + $0x3c] sm:$0xf] %v3653
        %3655 = vst [vmem:[%s3612 + $0x40] sm:$0xf] %v3392
        %v3656 = vld [vmem:[%s3612 + $0x44] sm:$0x1]
        %v3657 = vsel %vm3620, %v3393, %v3656
        %3658 = vst [vmem:[%s3612 + $0x44] sm:$0x1] %v3657
        %v3659 = vld [vmem:[%s3612 + $0x48] sm:$0xf]
        %v3660 = vsel %vm3614, %v3400, %v3659
        %3661 = vst [vmem:[%s3612 + $0x48] sm:$0xf] %v3660
        %3662 = vst [vmem:[%s3612 + $0x4c] sm:$0xf] %v3409
        %v3663 = vld [vmem:[%s3612 + $0x50] sm:$0x1]
        %v3664 = vsel %vm3620, %v3410, %v3663
        %3665 = vst [vmem:[%s3612 + $0x50] sm:$0x1] %v3664
        %v3666 = vld [vmem:[%s3612 + $0x54] sm:$0xf]
        %v3667 = vsel %vm3614, %v3417, %v3666
        %3668 = vst [vmem:[%s3612 + $0x54] sm:$0xf] %v3667
        %3669 = vst [vmem:[%s3612 + $0x58] sm:$0xf] %v3426
        %v3670 = vld [vmem:[%s3612 + $0x5c] sm:$0x1]
        %v3671 = vsel %vm3620, %v3427, %v3670
        %3672 = vst [vmem:[%s3612 + $0x5c] sm:$0x1] %v3671
        %v3673 = vld [vmem:[%s3612 + $0x60] sm:$0xf]
        %v3674 = vsel %vm3614, %v3434, %v3673
        %3675 = vst [vmem:[%s3612 + $0x60] sm:$0xf] %v3674
        %3676 = vst [vmem:[%s3612 + $0x64] sm:$0xf] %v3443
        %v3677 = vld [vmem:[%s3612 + $0x68] sm:$0x1]
        %v3678 = vsel %vm3620, %v3444, %v3677
        %3679 = vst [vmem:[%s3612 + $0x68] sm:$0x1] %v3678
        %v3680 = vld [vmem:[%s3612 + $0x6c] sm:$0xf]
        %v3681 = vsel %vm3614, %v3451, %v3680
        %3682 = vst [vmem:[%s3612 + $0x6c] sm:$0xf] %v3681
        %3683 = vst [vmem:[%s3612 + $0x70] sm:$0xf] %v3460
        %v3684 = vld [vmem:[%s3612 + $0x74] sm:$0x1]
        %v3685 = vsel %vm3620, %v3461, %v3684
        %3686 = vst [vmem:[%s3612 + $0x74] sm:$0x1] %v3685
        %v3687 = vld [vmem:[%s3612 + $0x78] sm:$0xf]
        %v3688 = vsel %vm3614, %v3468, %v3687
        %3689 = vst [vmem:[%s3612 + $0x78] sm:$0xf] %v3688
        %3690 = vst [vmem:[%s3612 + $0x7c] sm:$0xf] %v3477
        %v3691 = vld [vmem:[%s3612 + $0x80] sm:$0x1]
        %v3692 = vsel %vm3620, %v3478, %v3691
        %3693 = vst [vmem:[%s3612 + $0x80] sm:$0x1] %v3692
        %v3694 = vld [vmem:[%s3612 + $0x84] sm:$0xf]
        %v3695 = vsel %vm3614, %v3485, %v3694
        %3696 = vst [vmem:[%s3612 + $0x84] sm:$0xf] %v3695
        %3697 = vst [vmem:[%s3612 + $0x88] sm:$0xf] %v3494
        %v3698 = vld [vmem:[%s3612 + $0x8c] sm:$0x1]
        %v3699 = vsel %vm3620, %v3495, %v3698
        %3700 = vst [vmem:[%s3612 + $0x8c] sm:$0x1] %v3699
        %v3701 = vld [vmem:[%s3612 + $0x90] sm:$0xf]
        %v3702 = vsel %vm3614, %v3502, %v3701
        %3703 = vst [vmem:[%s3612 + $0x90] sm:$0xf] %v3702
        %3704 = vst [vmem:[%s3612 + $0x94] sm:$0xf] %v3511
        %v3705 = vld [vmem:[%s3612 + $0x98] sm:$0x1]
        %v3706 = vsel %vm3620, %v3512, %v3705
        %3707 = vst [vmem:[%s3612 + $0x98] sm:$0x1] %v3706
        %v3708 = vld [vmem:[%s3612 + $0x9c] sm:$0xf]
        %v3709 = vsel %vm3614, %v3519, %v3708
        %3710 = vst [vmem:[%s3612 + $0x9c] sm:$0xf] %v3709
        %3711 = vst [vmem:[%s3612 + $0xa0] sm:$0xf] %v3528
        %v3712 = vld [vmem:[%s3612 + $0xa4] sm:$0x1]
        %v3713 = vsel %vm3620, %v3529, %v3712
        %3714 = vst [vmem:[%s3612 + $0xa4] sm:$0x1] %v3713
        %v3715 = vld [vmem:[%s3612 + $0xa8] sm:$0xf]
        %v3716 = vsel %vm3614, %v3536, %v3715
        %3717 = vst [vmem:[%s3612 + $0xa8] sm:$0xf] %v3716
        %3718 = vst [vmem:[%s3612 + $0xac] sm:$0xf] %v3545
        %v3719 = vld [vmem:[%s3612 + $0xb0] sm:$0x1]
        %v3720 = vsel %vm3620, %v3546, %v3719
        %3721 = vst [vmem:[%s3612 + $0xb0] sm:$0x1] %v3720
        %v3722 = vld [vmem:[%s3612 + $0xb4] sm:$0xf]
        %v3723 = vsel %vm3614, %v3553, %v3722
        %3724 = vst [vmem:[%s3612 + $0xb4] sm:$0xf] %v3723
        %3725 = vst [vmem:[%s3612 + $0xb8] sm:$0xf] %v3562
        %v3726 = vld [vmem:[%s3612 + $0xbc] sm:$0x1]
        %v3727 = vsel %vm3620, %v3563, %v3726
        %3728 = vst [vmem:[%s3612 + $0xbc] sm:$0x1] %v3727
        %v3729 = vld [vmem:[#allocation3] sm:$0xf]
        %v3730 = vld [vmem:[#allocation3 + $0x4] sm:$0xf]
        %v3731 = vld [vmem:[#allocation3 + $0xc] sm:$0xf]
        %v3732 = vld [vmem:[#allocation3 + $0x10] sm:$0xf]
        %v3733 = vld [vmem:[#allocation3 + $0x18] sm:$0xf]
        %v3734 = vld [vmem:[#allocation3 + $0x1c] sm:$0xf]
        %v3735 = vld [vmem:[#allocation3 + $0x24] sm:$0xf]
        %v3736 = vld [vmem:[#allocation3 + $0x28] sm:$0xf]
        %v3737 = vld [vmem:[#allocation3 + $0x30] sm:$0xf]
        %v3738 = vld [vmem:[#allocation3 + $0x34] sm:$0xf]
        %v3739 = vld [vmem:[#allocation3 + $0x3c] sm:$0xf]
        %v3740 = vld [vmem:[#allocation3 + $0x40] sm:$0xf]
        %v3741 = vld [vmem:[#allocation3 + $0x48] sm:$0xf]
        %v3742 = vld [vmem:[#allocation3 + $0x4c] sm:$0xf]
        %v3743 = vld [vmem:[#allocation3 + $0x54] sm:$0xf]
        %v3744 = vld [vmem:[#allocation3 + $0x58] sm:$0xf]
        %v3745 = vld [vmem:[#allocation3 + $0x60] sm:$0xf]
        %v3746 = vld [vmem:[#allocation3 + $0x64] sm:$0xf]
        %v3747 = vld [vmem:[#allocation3 + $0x6c] sm:$0xf]
        %v3748 = vld [vmem:[#allocation3 + $0x70] sm:$0xf]
        %v3749 = vld [vmem:[#allocation3 + $0x78] sm:$0xf]
        %v3750 = vld [vmem:[#allocation3 + $0x7c] sm:$0xf]
        %v3751 = vld [vmem:[#allocation3 + $0x84] sm:$0xf]
        %v3752 = vld [vmem:[#allocation3 + $0x88] sm:$0xf]
        %v3753 = vld [vmem:[#allocation3 + $0x90] sm:$0xf]
        %v3754 = vld [vmem:[#allocation3 + $0x94] sm:$0xf]
        %v3755 = vld [vmem:[#allocation3 + $0x9c] sm:$0xf]
        %v3756 = vld [vmem:[#allocation3 + $0xa0] sm:$0xf]
        %v3757 = vld [vmem:[#allocation3 + $0xa8] sm:$0xf]
        %v3758 = vld [vmem:[#allocation3 + $0xac] sm:$0xf]
        %v3759 = vld [vmem:[#allocation3 + $0xb4] sm:$0xf]
        %v3760 = vld [vmem:[#allocation3 + $0xb8] sm:$0xf]
        %v3761 = vld [vmem:[#allocation3 + $0x8] sm:$0x1]
        %v3762 = vld [vmem:[#allocation3 + $0x14] sm:$0x1]
        %v3763 = vld [vmem:[#allocation3 + $0x20] sm:$0x1]
        %v3764 = vld [vmem:[#allocation3 + $0x2c] sm:$0x1]
        %v3765 = vld [vmem:[#allocation3 + $0x38] sm:$0x1]
        %v3766 = vld [vmem:[#allocation3 + $0x44] sm:$0x1]
        %v3767 = vld [vmem:[#allocation3 + $0x50] sm:$0x1]
        %v3768 = vld [vmem:[#allocation3 + $0x5c] sm:$0x1]
        %v3769 = vld [vmem:[#allocation3 + $0x68] sm:$0x1]
        %v3770 = vld [vmem:[#allocation3 + $0x74] sm:$0x1]
        %v3771 = vld [vmem:[#allocation3 + $0x80] sm:$0x1]
        %v3772 = vld [vmem:[#allocation3 + $0x8c] sm:$0x1]
        %v3773 = vld [vmem:[#allocation3 + $0x98] sm:$0x1]
        %v3774 = vld [vmem:[#allocation3 + $0xa4] sm:$0x1]
        %v3775 = vld [vmem:[#allocation3 + $0xb0] sm:$0x1]
        %v3776 = vld [vmem:[#allocation3 + $0xbc] sm:$0x1]
        %v3777 = vld [vmem:[#allocation3] sm:$0xe]
        %v3778 = vld [vmem:[#allocation3 + $0xc] sm:$0xe]
        %v3779 = vld [vmem:[#allocation3 + $0x18] sm:$0xe]
        %v3780 = vld [vmem:[#allocation3 + $0x24] sm:$0xe]
        %v3781 = vld [vmem:[#allocation3 + $0x30] sm:$0xe]
        %v3782 = vld [vmem:[#allocation3 + $0x3c] sm:$0xe]
        %v3783 = vld [vmem:[#allocation3 + $0x48] sm:$0xe]
        %v3784 = vld [vmem:[#allocation3 + $0x54] sm:$0xe]
        %v3785 = vld [vmem:[#allocation3 + $0x60] sm:$0xe]
        %v3786 = vld [vmem:[#allocation3 + $0x6c] sm:$0xe]
        %v3787 = vld [vmem:[#allocation3 + $0x78] sm:$0xe]
        %v3788 = vld [vmem:[#allocation3 + $0x84] sm:$0xe]
        %v3789 = vld [vmem:[#allocation3 + $0x90] sm:$0xe]
        %v3790 = vld [vmem:[#allocation3 + $0x9c] sm:$0xe]
        %v3791 = vld [vmem:[#allocation3 + $0xa8] sm:$0xe]
        %v3792 = vld [vmem:[#allocation3 + $0xb4] sm:$0xe]
        %v3793 = vld [vmem:[%s3612] sm:$0xf]
        %v3794 = vld [vmem:[%s3612 + $0x4] sm:$0xf]
        %v3795 = vld [vmem:[%s3612 + $0xc] sm:$0xf]
        %v3796 = vld [vmem:[%s3612 + $0x10] sm:$0xf]
        %v3797 = vld [vmem:[%s3612 + $0x18] sm:$0xf]
        %v3798 = vld [vmem:[%s3612 + $0x1c] sm:$0xf]
        %v3799 = vld [vmem:[%s3612 + $0x24] sm:$0xf]
        %v3800 = vld [vmem:[%s3612 + $0x28] sm:$0xf]
        %v3801 = vld [vmem:[%s3612 + $0x30] sm:$0xf]
        %v3802 = vld [vmem:[%s3612 + $0x34] sm:$0xf]
        %v3803 = vld [vmem:[%s3612 + $0x3c] sm:$0xf]
        %v3804 = vld [vmem:[%s3612 + $0x40] sm:$0xf]
        %v3805 = vld [vmem:[%s3612 + $0x48] sm:$0xf]
        %v3806 = vld [vmem:[%s3612 + $0x4c] sm:$0xf]
        %v3807 = vld [vmem:[%s3612 + $0x54] sm:$0xf]
        %v3808 = vld [vmem:[%s3612 + $0x58] sm:$0xf]
        %v3809 = vld [vmem:[%s3612 + $0x60] sm:$0xf]
        %v3810 = vld [vmem:[%s3612 + $0x64] sm:$0xf]
        %v3811 = vld [vmem:[%s3612 + $0x6c] sm:$0xf]
        %v3812 = vld [vmem:[%s3612 + $0x70] sm:$0xf]
        %v3813 = vld [vmem:[%s3612 + $0x78] sm:$0xf]
        %v3814 = vld [vmem:[%s3612 + $0x7c] sm:$0xf]
        %v3815 = vld [vmem:[%s3612 + $0x84] sm:$0xf]
        %v3816 = vld [vmem:[%s3612 + $0x88] sm:$0xf]
        %v3817 = vld [vmem:[%s3612 + $0x90] sm:$0xf]
        %v3818 = vld [vmem:[%s3612 + $0x94] sm:$0xf]
        %v3819 = vld [vmem:[%s3612 + $0x9c] sm:$0xf]
        %v3820 = vld [vmem:[%s3612 + $0xa0] sm:$0xf]
        %v3821 = vld [vmem:[%s3612 + $0xa8] sm:$0xf]
        %v3822 = vld [vmem:[%s3612 + $0xac] sm:$0xf]
        %v3823 = vld [vmem:[%s3612 + $0xb4] sm:$0xf]
        %v3824 = vld [vmem:[%s3612 + $0xb8] sm:$0xf]
        %v3825 = vld [vmem:[%s3612 + $0x8] sm:$0x1]
        %v3826 = vld [vmem:[%s3612 + $0x14] sm:$0x1]
        %v3827 = vld [vmem:[%s3612 + $0x20] sm:$0x1]
        %v3828 = vld [vmem:[%s3612 + $0x2c] sm:$0x1]
        %v3829 = vld [vmem:[%s3612 + $0x38] sm:$0x1]
        %v3830 = vld [vmem:[%s3612 + $0x44] sm:$0x1]
        %v3831 = vld [vmem:[%s3612 + $0x50] sm:$0x1]
        %v3832 = vld [vmem:[%s3612 + $0x5c] sm:$0x1]
        %v3833 = vld [vmem:[%s3612 + $0x68] sm:$0x1]
        %v3834 = vld [vmem:[%s3612 + $0x74] sm:$0x1]
        %v3835 = vld [vmem:[%s3612 + $0x80] sm:$0x1]
        %v3836 = vld [vmem:[%s3612 + $0x8c] sm:$0x1]
        %v3837 = vld [vmem:[%s3612 + $0x98] sm:$0x1]
        %v3838 = vld [vmem:[%s3612 + $0xa4] sm:$0x1]
        %v3839 = vld [vmem:[%s3612 + $0xb0] sm:$0x1]
        %v3840 = vld [vmem:[%s3612 + $0xbc] sm:$0x1]
        %v3841 = vld [vmem:[%s3612] sm:$0xe]
        %v3842 = vld [vmem:[%s3612 + $0xc] sm:$0xe]
        %v3843 = vld [vmem:[%s3612 + $0x18] sm:$0xe]
        %v3844 = vld [vmem:[%s3612 + $0x24] sm:$0xe]
        %v3845 = vld [vmem:[%s3612 + $0x30] sm:$0xe]
        %v3846 = vld [vmem:[%s3612 + $0x3c] sm:$0xe]
        %v3847 = vld [vmem:[%s3612 + $0x48] sm:$0xe]
        %v3848 = vld [vmem:[%s3612 + $0x54] sm:$0xe]
        %v3849 = vld [vmem:[%s3612 + $0x60] sm:$0xe]
        %v3850 = vld [vmem:[%s3612 + $0x6c] sm:$0xe]
        %v3851 = vld [vmem:[%s3612 + $0x78] sm:$0xe]
        %v3852 = vld [vmem:[%s3612 + $0x84] sm:$0xe]
        %v3853 = vld [vmem:[%s3612 + $0x90] sm:$0xe]
        %v3854 = vld [vmem:[%s3612 + $0x9c] sm:$0xe]
        %v3855 = vld [vmem:[%s3612 + $0xa8] sm:$0xe]
        %v3856 = vld [vmem:[%s3612 + $0xb4] sm:$0xe]
        %s3857 = scalar_lea.vmem [#allocation3], 24
        %v3858 = vld [vmem:[%s3857] sm:$0xf]
        %v3859 = vld [vmem:[%s3857 + $0x4] sm:$0xf]
        %v3860 = vld [vmem:[%s3857 + $0xc] sm:$0xf]
        %v3861 = vld [vmem:[%s3857 + $0x10] sm:$0xf]
        %v3862 = vld [vmem:[%s3857 + $0x18] sm:$0xf]
        %v3863 = vld [vmem:[%s3857 + $0x1c] sm:$0xf]
        %v3864 = vld [vmem:[%s3857 + $0x24] sm:$0xf]
        %v3865 = vld [vmem:[%s3857 + $0x28] sm:$0xf]
        %v3866 = vld [vmem:[%s3857 + $0x30] sm:$0xf]
        %v3867 = vld [vmem:[%s3857 + $0x34] sm:$0xf]
        %v3868 = vld [vmem:[%s3857 + $0x3c] sm:$0xf]
        %v3869 = vld [vmem:[%s3857 + $0x40] sm:$0xf]
        %v3870 = vld [vmem:[%s3857 + $0x48] sm:$0xf]
        %v3871 = vld [vmem:[%s3857 + $0x4c] sm:$0xf]
        %v3872 = vld [vmem:[%s3857 + $0x54] sm:$0xf]
        %v3873 = vld [vmem:[%s3857 + $0x58] sm:$0xf]
        %v3874 = vld [vmem:[%s3857 + $0x60] sm:$0xf]
        %v3875 = vld [vmem:[%s3857 + $0x64] sm:$0xf]
        %v3876 = vld [vmem:[%s3857 + $0x6c] sm:$0xf]
        %v3877 = vld [vmem:[%s3857 + $0x70] sm:$0xf]
        %v3878 = vld [vmem:[%s3857 + $0x78] sm:$0xf]
        %v3879 = vld [vmem:[%s3857 + $0x7c] sm:$0xf]
        %v3880 = vld [vmem:[%s3857 + $0x84] sm:$0xf]
        %v3881 = vld [vmem:[%s3857 + $0x88] sm:$0xf]
        %v3882 = vld [vmem:[%s3857 + $0x90] sm:$0xf]
        %v3883 = vld [vmem:[%s3857 + $0x94] sm:$0xf]
        %v3884 = vld [vmem:[%s3857 + $0x9c] sm:$0xf]
        %v3885 = vld [vmem:[%s3857 + $0xa0] sm:$0xf]
        %v3886 = vld [vmem:[%s3857 + $0xa8] sm:$0xf]
        %v3887 = vld [vmem:[%s3857 + $0xac] sm:$0xf]
        %v3888 = vld [vmem:[%s3857 + $0xb4] sm:$0xf]
        %v3889 = vld [vmem:[%s3857 + $0xb8] sm:$0xf]
        %v3890 = vld [vmem:[%s3857 + $0x8] sm:$0x1]
        %v3891 = vld [vmem:[%s3857 + $0x14] sm:$0x1]
        %v3892 = vld [vmem:[%s3857 + $0x20] sm:$0x1]
        %v3893 = vld [vmem:[%s3857 + $0x2c] sm:$0x1]
        %v3894 = vld [vmem:[%s3857 + $0x38] sm:$0x1]
        %v3895 = vld [vmem:[%s3857 + $0x44] sm:$0x1]
        %v3896 = vld [vmem:[%s3857 + $0x50] sm:$0x1]
        %v3897 = vld [vmem:[%s3857 + $0x5c] sm:$0x1]
        %v3898 = vld [vmem:[%s3857 + $0x68] sm:$0x1]
        %v3899 = vld [vmem:[%s3857 + $0x74] sm:$0x1]
        %v3900 = vld [vmem:[%s3857 + $0x80] sm:$0x1]
        %v3901 = vld [vmem:[%s3857 + $0x8c] sm:$0x1]
        %v3902 = vld [vmem:[%s3857 + $0x98] sm:$0x1]
        %v3903 = vld [vmem:[%s3857 + $0xa4] sm:$0x1]
        %v3904 = vld [vmem:[%s3857 + $0xb0] sm:$0x1]
        %v3905 = vld [vmem:[%s3857 + $0xbc] sm:$0x1]
        %v3906 = vld [vmem:[%s3857] sm:$0xe]
        %v3907 = vld [vmem:[%s3857 + $0xc] sm:$0xe]
        %v3908 = vld [vmem:[%s3857 + $0x18] sm:$0xe]
        %v3909 = vld [vmem:[%s3857 + $0x24] sm:$0xe]
        %v3910 = vld [vmem:[%s3857 + $0x30] sm:$0xe]
        %v3911 = vld [vmem:[%s3857 + $0x3c] sm:$0xe]
        %v3912 = vld [vmem:[%s3857 + $0x48] sm:$0xe]
        %v3913 = vld [vmem:[%s3857 + $0x54] sm:$0xe]
        %v3914 = vld [vmem:[%s3857 + $0x60] sm:$0xe]
        %v3915 = vld [vmem:[%s3857 + $0x6c] sm:$0xe]
        %v3916 = vld [vmem:[%s3857 + $0x78] sm:$0xe]
        %v3917 = vld [vmem:[%s3857 + $0x84] sm:$0xe]
        %v3918 = vld [vmem:[%s3857 + $0x90] sm:$0xe]
        %v3919 = vld [vmem:[%s3857 + $0x9c] sm:$0xe]
        %v3920 = vld [vmem:[%s3857 + $0xa8] sm:$0xe]
        %v3921 = vld [vmem:[%s3857 + $0xb4] sm:$0xe]
        %v3954 = vunpack.c.l.b16 %v3729
        %v3955 = vunpack.c.l.b16 %v3730
        %v3956 = vunpack.c.l.b16 %v3731
        %v3957 = vunpack.c.l.b16 %v3732
        %v3958 = vunpack.c.l.b16 %v3733
        %v3959 = vunpack.c.l.b16 %v3734
        %v3960 = vunpack.c.l.b16 %v3735
        %v3961 = vunpack.c.l.b16 %v3736
        %v3962 = vunpack.c.l.b16 %v3737
        %v3963 = vunpack.c.l.b16 %v3738
        %v3964 = vunpack.c.l.b16 %v3739
        %v3965 = vunpack.c.l.b16 %v3740
        %v3966 = vunpack.c.l.b16 %v3741
        %v3967 = vunpack.c.l.b16 %v3742
        %v3968 = vunpack.c.l.b16 %v3743
        %v3969 = vunpack.c.l.b16 %v3744
        %v3970 = vunpack.c.l.b16 %v3745
        %v3971 = vunpack.c.l.b16 %v3746
        %v3972 = vunpack.c.l.b16 %v3747
        %v3973 = vunpack.c.l.b16 %v3748
        %v3974 = vunpack.c.l.b16 %v3749
        %v3975 = vunpack.c.l.b16 %v3750
        %v3976 = vunpack.c.l.b16 %v3751
        %v3977 = vunpack.c.l.b16 %v3752
        %v3978 = vunpack.c.l.b16 %v3753
        %v3979 = vunpack.c.l.b16 %v3754
        %v3980 = vunpack.c.l.b16 %v3755
        %v3981 = vunpack.c.l.b16 %v3756
        %v3982 = vunpack.c.l.b16 %v3757
        %v3983 = vunpack.c.l.b16 %v3758
        %v3984 = vunpack.c.l.b16 %v3759
        %v3985 = vunpack.c.l.b16 %v3760
        %v3986 = vpack.c.b16 %v3955, %v3954
        %v3987 = vpack.c.b16 %v3957, %v3956
        %v3988 = vpack.c.b16 %v3959, %v3958
        %v3989 = vpack.c.b16 %v3961, %v3960
        %v3990 = vpack.c.b16 %v3963, %v3962
        %v3991 = vpack.c.b16 %v3965, %v3964
        %v3992 = vpack.c.b16 %v3967, %v3966
        %v3993 = vpack.c.b16 %v3969, %v3968
        %v3994 = vpack.c.b16 %v3971, %v3970
        %v3995 = vpack.c.b16 %v3973, %v3972
        %v3996 = vpack.c.b16 %v3975, %v3974
        %v3997 = vpack.c.b16 %v3977, %v3976
        %v3998 = vpack.c.b16 %v3979, %v3978
        %v3999 = vpack.c.b16 %v3981, %v3980
        %v4000 = vpack.c.b16 %v3983, %v3982
        %v4001 = vpack.c.b16 %v3985, %v3984
        %v4034 = vunpack.c.l.b16 %v3761
        %v4035 = vunpack.c.l.b16 %v3762
        %v4036 = vunpack.c.l.b16 %v3763
        %v4037 = vunpack.c.l.b16 %v3764
        %v4038 = vunpack.c.l.b16 %v3765
        %v4039 = vunpack.c.l.b16 %v3766
        %v4040 = vunpack.c.l.b16 %v3767
        %v4041 = vunpack.c.l.b16 %v3768
        %v4042 = vunpack.c.l.b16 %v3769
        %v4043 = vunpack.c.l.b16 %v3770
        %v4044 = vunpack.c.l.b16 %v3771
        %v4045 = vunpack.c.l.b16 %v3772
        %v4046 = vunpack.c.l.b16 %v3773
        %v4047 = vunpack.c.l.b16 %v3774
        %v4048 = vunpack.c.l.b16 %v3775
        %v4049 = vunpack.c.l.b16 %v3776
        %v4050 = vpack.c.b16 %v4034, %v4034
        %v4051 = vpack.c.b16 %v4035, %v4035
        %v4052 = vpack.c.b16 %v4036, %v4036
        %v4053 = vpack.c.b16 %v4037, %v4037
        %v4054 = vpack.c.b16 %v4038, %v4038
        %v4055 = vpack.c.b16 %v4039, %v4039
        %v4056 = vpack.c.b16 %v4040, %v4040
        %v4057 = vpack.c.b16 %v4041, %v4041
        %v4058 = vpack.c.b16 %v4042, %v4042
        %v4059 = vpack.c.b16 %v4043, %v4043
        %v4060 = vpack.c.b16 %v4044, %v4044
        %v4061 = vpack.c.b16 %v4045, %v4045
        %v4062 = vpack.c.b16 %v4046, %v4046
        %v4063 = vpack.c.b16 %v4047, %v4047
        %v4064 = vpack.c.b16 %v4048, %v4048
        %v4065 = vpack.c.b16 %v4049, %v4049
        %v4067 = vshrl.u32 %v3986, 16
        %v4069 = vshll.u32 %v3986, 16
        %v4071 = vrot.slane %v4069, 1
        %v4072 = vor.u32 %v4067, %v4071
        %v4074 = vshll.u32 %v4050, 16
        %v4076 = vrot.slane %v4074, 1
        %v4077 = vsel %vm1297, %v4072, %v4076
        %v4079 = vshrl.u32 %v3987, 16
        %v4081 = vshll.u32 %v3987, 16
        %v4083 = vrot.slane %v4081, 1
        %v4084 = vor.u32 %v4079, %v4083
        %v4086 = vshll.u32 %v4051, 16
        %v4088 = vrot.slane %v4086, 1
        %v4089 = vsel %vm1297, %v4084, %v4088
        %v4091 = vshrl.u32 %v3988, 16
        %v4093 = vshll.u32 %v3988, 16
        %v4095 = vrot.slane %v4093, 1
        %v4096 = vor.u32 %v4091, %v4095
        %v4098 = vshll.u32 %v4052, 16
        %v4100 = vrot.slane %v4098, 1
        %v4101 = vsel %vm1297, %v4096, %v4100
        %v4103 = vshrl.u32 %v3989, 16
        %v4105 = vshll.u32 %v3989, 16
        %v4107 = vrot.slane %v4105, 1
        %v4108 = vor.u32 %v4103, %v4107
        %v4110 = vshll.u32 %v4053, 16
        %v4112 = vrot.slane %v4110, 1
        %v4113 = vsel %vm1297, %v4108, %v4112
        %v4115 = vshrl.u32 %v3990, 16
        %v4117 = vshll.u32 %v3990, 16
        %v4119 = vrot.slane %v4117, 1
        %v4120 = vor.u32 %v4115, %v4119
        %v4122 = vshll.u32 %v4054, 16
        %v4124 = vrot.slane %v4122, 1
        %v4125 = vsel %vm1297, %v4120, %v4124
        %v4127 = vshrl.u32 %v3991, 16
        %v4129 = vshll.u32 %v3991, 16
        %v4131 = vrot.slane %v4129, 1
        %v4132 = vor.u32 %v4127, %v4131
        %v4134 = vshll.u32 %v4055, 16
        %v4136 = vrot.slane %v4134, 1
        %v4137 = vsel %vm1297, %v4132, %v4136
        %v4139 = vshrl.u32 %v3992, 16
        %v4141 = vshll.u32 %v3992, 16
        %v4143 = vrot.slane %v4141, 1
        %v4144 = vor.u32 %v4139, %v4143
        %v4146 = vshll.u32 %v4056, 16
        %v4148 = vrot.slane %v4146, 1
        %v4149 = vsel %vm1297, %v4144, %v4148
        %v4151 = vshrl.u32 %v3993, 16
        %v4153 = vshll.u32 %v3993, 16
        %v4155 = vrot.slane %v4153, 1
        %v4156 = vor.u32 %v4151, %v4155
        %v4158 = vshll.u32 %v4057, 16
        %v4160 = vrot.slane %v4158, 1
        %v4161 = vsel %vm1297, %v4156, %v4160
        %v4163 = vshrl.u32 %v3994, 16
        %v4165 = vshll.u32 %v3994, 16
        %v4167 = vrot.slane %v4165, 1
        %v4168 = vor.u32 %v4163, %v4167
        %v4170 = vshll.u32 %v4058, 16
        %v4172 = vrot.slane %v4170, 1
        %v4173 = vsel %vm1297, %v4168, %v4172
        %v4175 = vshrl.u32 %v3995, 16
        %v4177 = vshll.u32 %v3995, 16
        %v4179 = vrot.slane %v4177, 1
        %v4180 = vor.u32 %v4175, %v4179
        %v4182 = vshll.u32 %v4059, 16
        %v4184 = vrot.slane %v4182, 1
        %v4185 = vsel %vm1297, %v4180, %v4184
        %v4187 = vshrl.u32 %v3996, 16
        %v4189 = vshll.u32 %v3996, 16
        %v4191 = vrot.slane %v4189, 1
        %v4192 = vor.u32 %v4187, %v4191
        %v4194 = vshll.u32 %v4060, 16
        %v4196 = vrot.slane %v4194, 1
        %v4197 = vsel %vm1297, %v4192, %v4196
        %v4199 = vshrl.u32 %v3997, 16
        %v4201 = vshll.u32 %v3997, 16
        %v4203 = vrot.slane %v4201, 1
        %v4204 = vor.u32 %v4199, %v4203
        %v4206 = vshll.u32 %v4061, 16
        %v4208 = vrot.slane %v4206, 1
        %v4209 = vsel %vm1297, %v4204, %v4208
        %v4211 = vshrl.u32 %v3998, 16
        %v4213 = vshll.u32 %v3998, 16
        %v4215 = vrot.slane %v4213, 1
        %v4216 = vor.u32 %v4211, %v4215
        %v4218 = vshll.u32 %v4062, 16
        %v4220 = vrot.slane %v4218, 1
        %v4221 = vsel %vm1297, %v4216, %v4220
        %v4223 = vshrl.u32 %v3999, 16
        %v4225 = vshll.u32 %v3999, 16
        %v4227 = vrot.slane %v4225, 1
        %v4228 = vor.u32 %v4223, %v4227
        %v4230 = vshll.u32 %v4063, 16
        %v4232 = vrot.slane %v4230, 1
        %v4233 = vsel %vm1297, %v4228, %v4232
        %v4235 = vshrl.u32 %v4000, 16
        %v4237 = vshll.u32 %v4000, 16
        %v4239 = vrot.slane %v4237, 1
        %v4240 = vor.u32 %v4235, %v4239
        %v4242 = vshll.u32 %v4064, 16
        %v4244 = vrot.slane %v4242, 1
        %v4245 = vsel %vm1297, %v4240, %v4244
        %v4247 = vshrl.u32 %v4001, 16
        %v4249 = vshll.u32 %v4001, 16
        %v4251 = vrot.slane %v4249, 1
        %v4252 = vor.u32 %v4247, %v4251
        %v4254 = vshll.u32 %v4065, 16
        %v4256 = vrot.slane %v4254, 1
        %v4257 = vsel %vm1297, %v4252, %v4256
        %v4290 = vunpack.c.l.b16 %v3777
        %v4291 = vunpack.c.l.b16 %v3778
        %v4292 = vunpack.c.l.b16 %v3779
        %v4293 = vunpack.c.l.b16 %v3780
        %v4294 = vunpack.c.l.b16 %v3781
        %v4295 = vunpack.c.l.b16 %v3782
        %v4296 = vunpack.c.l.b16 %v3783
        %v4297 = vunpack.c.l.b16 %v3784
        %v4298 = vunpack.c.l.b16 %v3785
        %v4299 = vunpack.c.l.b16 %v3786
        %v4300 = vunpack.c.l.b16 %v3787
        %v4301 = vunpack.c.l.b16 %v3788
        %v4302 = vunpack.c.l.b16 %v3789
        %v4303 = vunpack.c.l.b16 %v3790
        %v4304 = vunpack.c.l.b16 %v3791
        %v4305 = vunpack.c.l.b16 %v3792
        %v4306 = vpack.c.b16 %v3955, %v4290
        %v4307 = vpack.c.b16 %v3957, %v4291
        %v4308 = vpack.c.b16 %v3959, %v4292
        %v4309 = vpack.c.b16 %v3961, %v4293
        %v4310 = vpack.c.b16 %v3963, %v4294
        %v4311 = vpack.c.b16 %v3965, %v4295
        %v4312 = vpack.c.b16 %v3967, %v4296
        %v4313 = vpack.c.b16 %v3969, %v4297
        %v4314 = vpack.c.b16 %v3971, %v4298
        %v4315 = vpack.c.b16 %v3973, %v4299
        %v4316 = vpack.c.b16 %v3975, %v4300
        %v4317 = vpack.c.b16 %v3977, %v4301
        %v4318 = vpack.c.b16 %v3979, %v4302
        %v4319 = vpack.c.b16 %v3981, %v4303
        %v4320 = vpack.c.b16 %v3983, %v4304
        %v4321 = vpack.c.b16 %v3985, %v4305
        %v4322 = vrot.slane %v4306, 1
        %v4323 = vrot.slane %v4050, 1
        %v4324 = vsel %vm1570, %v4322, %v4323
        %v4325 = vrot.slane %v4307, 1
        %v4326 = vrot.slane %v4051, 1
        %v4327 = vsel %vm1570, %v4325, %v4326
        %v4328 = vrot.slane %v4308, 1
        %v4329 = vrot.slane %v4052, 1
        %v4330 = vsel %vm1570, %v4328, %v4329
        %v4331 = vrot.slane %v4309, 1
        %v4332 = vrot.slane %v4053, 1
        %v4333 = vsel %vm1570, %v4331, %v4332
        %v4334 = vrot.slane %v4310, 1
        %v4335 = vrot.slane %v4054, 1
        %v4336 = vsel %vm1570, %v4334, %v4335
        %v4337 = vrot.slane %v4311, 1
        %v4338 = vrot.slane %v4055, 1
        %v4339 = vsel %vm1570, %v4337, %v4338
        %v4340 = vrot.slane %v4312, 1
        %v4341 = vrot.slane %v4056, 1
        %v4342 = vsel %vm1570, %v4340, %v4341
        %v4343 = vrot.slane %v4313, 1
        %v4344 = vrot.slane %v4057, 1
        %v4345 = vsel %vm1570, %v4343, %v4344
        %v4346 = vrot.slane %v4314, 1
        %v4347 = vrot.slane %v4058, 1
        %v4348 = vsel %vm1570, %v4346, %v4347
        %v4349 = vrot.slane %v4315, 1
        %v4350 = vrot.slane %v4059, 1
        %v4351 = vsel %vm1570, %v4349, %v4350
        %v4352 = vrot.slane %v4316, 1
        %v4353 = vrot.slane %v4060, 1
        %v4354 = vsel %vm1570, %v4352, %v4353
        %v4355 = vrot.slane %v4317, 1
        %v4356 = vrot.slane %v4061, 1
        %v4357 = vsel %vm1570, %v4355, %v4356
        %v4358 = vrot.slane %v4318, 1
        %v4359 = vrot.slane %v4062, 1
        %v4360 = vsel %vm1570, %v4358, %v4359
        %v4361 = vrot.slane %v4319, 1
        %v4362 = vrot.slane %v4063, 1
        %v4363 = vsel %vm1570, %v4361, %v4362
        %v4364 = vrot.slane %v4320, 1
        %v4365 = vrot.slane %v4064, 1
        %v4366 = vsel %vm1570, %v4364, %v4365
        %v4367 = vrot.slane %v4321, 1
        %v4368 = vrot.slane %v4065, 1
        %v4369 = vsel %vm1570, %v4367, %v4368
        %v4418 = vunpack.c.l.b16 %v3793
        %v4419 = vunpack.c.l.b16 %v3794
        %v4420 = vunpack.c.l.b16 %v3795
        %v4421 = vunpack.c.l.b16 %v3796
        %v4422 = vunpack.c.l.b16 %v3797
        %v4423 = vunpack.c.l.b16 %v3798
        %v4424 = vunpack.c.l.b16 %v3799
        %v4425 = vunpack.c.l.b16 %v3800
        %v4426 = vunpack.c.l.b16 %v3801
        %v4427 = vunpack.c.l.b16 %v3802
        %v4428 = vunpack.c.l.b16 %v3803
        %v4429 = vunpack.c.l.b16 %v3804
        %v4430 = vunpack.c.l.b16 %v3805
        %v4431 = vunpack.c.l.b16 %v3806
        %v4432 = vunpack.c.l.b16 %v3807
        %v4433 = vunpack.c.l.b16 %v3808
        %v4434 = vunpack.c.l.b16 %v3809
        %v4435 = vunpack.c.l.b16 %v3810
        %v4436 = vunpack.c.l.b16 %v3811
        %v4437 = vunpack.c.l.b16 %v3812
        %v4438 = vunpack.c.l.b16 %v3813
        %v4439 = vunpack.c.l.b16 %v3814
        %v4440 = vunpack.c.l.b16 %v3815
        %v4441 = vunpack.c.l.b16 %v3816
        %v4442 = vunpack.c.l.b16 %v3817
        %v4443 = vunpack.c.l.b16 %v3818
        %v4444 = vunpack.c.l.b16 %v3819
        %v4445 = vunpack.c.l.b16 %v3820
        %v4446 = vunpack.c.l.b16 %v3821
        %v4447 = vunpack.c.l.b16 %v3822
        %v4448 = vunpack.c.l.b16 %v3823
        %v4449 = vunpack.c.l.b16 %v3824
        %v4450 = vpack.c.b16 %v4419, %v4418
        %v4451 = vpack.c.b16 %v4421, %v4420
        %v4452 = vpack.c.b16 %v4423, %v4422
        %v4453 = vpack.c.b16 %v4425, %v4424
        %v4454 = vpack.c.b16 %v4427, %v4426
        %v4455 = vpack.c.b16 %v4429, %v4428
        %v4456 = vpack.c.b16 %v4431, %v4430
        %v4457 = vpack.c.b16 %v4433, %v4432
        %v4458 = vpack.c.b16 %v4435, %v4434
        %v4459 = vpack.c.b16 %v4437, %v4436
        %v4460 = vpack.c.b16 %v4439, %v4438
        %v4461 = vpack.c.b16 %v4441, %v4440
        %v4462 = vpack.c.b16 %v4443, %v4442
        %v4463 = vpack.c.b16 %v4445, %v4444
        %v4464 = vpack.c.b16 %v4447, %v4446
        %v4465 = vpack.c.b16 %v4449, %v4448
        %v4498 = vunpack.c.l.b16 %v3825
        %v4499 = vunpack.c.l.b16 %v3826
        %v4500 = vunpack.c.l.b16 %v3827
        %v4501 = vunpack.c.l.b16 %v3828
        %v4502 = vunpack.c.l.b16 %v3829
        %v4503 = vunpack.c.l.b16 %v3830
        %v4504 = vunpack.c.l.b16 %v3831
        %v4505 = vunpack.c.l.b16 %v3832
        %v4506 = vunpack.c.l.b16 %v3833
        %v4507 = vunpack.c.l.b16 %v3834
        %v4508 = vunpack.c.l.b16 %v3835
        %v4509 = vunpack.c.l.b16 %v3836
        %v4510 = vunpack.c.l.b16 %v3837
        %v4511 = vunpack.c.l.b16 %v3838
        %v4512 = vunpack.c.l.b16 %v3839
        %v4513 = vunpack.c.l.b16 %v3840
        %v4514 = vpack.c.b16 %v4498, %v4498
        %v4515 = vpack.c.b16 %v4499, %v4499
        %v4516 = vpack.c.b16 %v4500, %v4500
        %v4517 = vpack.c.b16 %v4501, %v4501
        %v4518 = vpack.c.b16 %v4502, %v4502
        %v4519 = vpack.c.b16 %v4503, %v4503
        %v4520 = vpack.c.b16 %v4504, %v4504
        %v4521 = vpack.c.b16 %v4505, %v4505
        %v4522 = vpack.c.b16 %v4506, %v4506
        %v4523 = vpack.c.b16 %v4507, %v4507
        %v4524 = vpack.c.b16 %v4508, %v4508
        %v4525 = vpack.c.b16 %v4509, %v4509
        %v4526 = vpack.c.b16 %v4510, %v4510
        %v4527 = vpack.c.b16 %v4511, %v4511
        %v4528 = vpack.c.b16 %v4512, %v4512
        %v4529 = vpack.c.b16 %v4513, %v4513
        %v4531 = vshrl.u32 %v4450, 16
        %v4533 = vshll.u32 %v4450, 16
        %v4535 = vrot.slane %v4533, 1
        %v4536 = vor.u32 %v4531, %v4535
        %v4538 = vshll.u32 %v4514, 16
        %v4540 = vrot.slane %v4538, 1
        %v4541 = vsel %vm1297, %v4536, %v4540
        %v4543 = vshrl.u32 %v4451, 16
        %v4545 = vshll.u32 %v4451, 16
        %v4547 = vrot.slane %v4545, 1
        %v4548 = vor.u32 %v4543, %v4547
        %v4550 = vshll.u32 %v4515, 16
        %v4552 = vrot.slane %v4550, 1
        %v4553 = vsel %vm1297, %v4548, %v4552
        %v4555 = vshrl.u32 %v4452, 16
        %v4557 = vshll.u32 %v4452, 16
        %v4559 = vrot.slane %v4557, 1
        %v4560 = vor.u32 %v4555, %v4559
        %v4562 = vshll.u32 %v4516, 16
        %v4564 = vrot.slane %v4562, 1
        %v4565 = vsel %vm1297, %v4560, %v4564
        %v4567 = vshrl.u32 %v4453, 16
        %v4569 = vshll.u32 %v4453, 16
        %v4571 = vrot.slane %v4569, 1
        %v4572 = vor.u32 %v4567, %v4571
        %v4574 = vshll.u32 %v4517, 16
        %v4576 = vrot.slane %v4574, 1
        %v4577 = vsel %vm1297, %v4572, %v4576
        %v4579 = vshrl.u32 %v4454, 16
        %v4581 = vshll.u32 %v4454, 16
        %v4583 = vrot.slane %v4581, 1
        %v4584 = vor.u32 %v4579, %v4583
        %v4586 = vshll.u32 %v4518, 16
        %v4588 = vrot.slane %v4586, 1
        %v4589 = vsel %vm1297, %v4584, %v4588
        %v4591 = vshrl.u32 %v4455, 16
        %v4593 = vshll.u32 %v4455, 16
        %v4595 = vrot.slane %v4593, 1
        %v4596 = vor.u32 %v4591, %v4595
        %v4598 = vshll.u32 %v4519, 16
        %v4600 = vrot.slane %v4598, 1
        %v4601 = vsel %vm1297, %v4596, %v4600
        %v4603 = vshrl.u32 %v4456, 16
        %v4605 = vshll.u32 %v4456, 16
        %v4607 = vrot.slane %v4605, 1
        %v4608 = vor.u32 %v4603, %v4607
        %v4610 = vshll.u32 %v4520, 16
        %v4612 = vrot.slane %v4610, 1
        %v4613 = vsel %vm1297, %v4608, %v4612
        %v4615 = vshrl.u32 %v4457, 16
        %v4617 = vshll.u32 %v4457, 16
        %v4619 = vrot.slane %v4617, 1
        %v4620 = vor.u32 %v4615, %v4619
        %v4622 = vshll.u32 %v4521, 16
        %v4624 = vrot.slane %v4622, 1
        %v4625 = vsel %vm1297, %v4620, %v4624
        %v4627 = vshrl.u32 %v4458, 16
        %v4629 = vshll.u32 %v4458, 16
        %v4631 = vrot.slane %v4629, 1
        %v4632 = vor.u32 %v4627, %v4631
        %v4634 = vshll.u32 %v4522, 16
        %v4636 = vrot.slane %v4634, 1
        %v4637 = vsel %vm1297, %v4632, %v4636
        %v4639 = vshrl.u32 %v4459, 16
        %v4641 = vshll.u32 %v4459, 16
        %v4643 = vrot.slane %v4641, 1
        %v4644 = vor.u32 %v4639, %v4643
        %v4646 = vshll.u32 %v4523, 16
        %v4648 = vrot.slane %v4646, 1
        %v4649 = vsel %vm1297, %v4644, %v4648
        %v4651 = vshrl.u32 %v4460, 16
        %v4653 = vshll.u32 %v4460, 16
        %v4655 = vrot.slane %v4653, 1
        %v4656 = vor.u32 %v4651, %v4655
        %v4658 = vshll.u32 %v4524, 16
        %v4660 = vrot.slane %v4658, 1
        %v4661 = vsel %vm1297, %v4656, %v4660
        %v4663 = vshrl.u32 %v4461, 16
        %v4665 = vshll.u32 %v4461, 16
        %v4667 = vrot.slane %v4665, 1
        %v4668 = vor.u32 %v4663, %v4667
        %v4670 = vshll.u32 %v4525, 16
        %v4672 = vrot.slane %v4670, 1
        %v4673 = vsel %vm1297, %v4668, %v4672
        %v4675 = vshrl.u32 %v4462, 16
        %v4677 = vshll.u32 %v4462, 16
        %v4679 = vrot.slane %v4677, 1
        %v4680 = vor.u32 %v4675, %v4679
        %v4682 = vshll.u32 %v4526, 16
        %v4684 = vrot.slane %v4682, 1
        %v4685 = vsel %vm1297, %v4680, %v4684
        %v4687 = vshrl.u32 %v4463, 16
        %v4689 = vshll.u32 %v4463, 16
        %v4691 = vrot.slane %v4689, 1
        %v4692 = vor.u32 %v4687, %v4691
        %v4694 = vshll.u32 %v4527, 16
        %v4696 = vrot.slane %v4694, 1
        %v4697 = vsel %vm1297, %v4692, %v4696
        %v4699 = vshrl.u32 %v4464, 16
        %v4701 = vshll.u32 %v4464, 16
        %v4703 = vrot.slane %v4701, 1
        %v4704 = vor.u32 %v4699, %v4703
        %v4706 = vshll.u32 %v4528, 16
        %v4708 = vrot.slane %v4706, 1
        %v4709 = vsel %vm1297, %v4704, %v4708
        %v4711 = vshrl.u32 %v4465, 16
        %v4713 = vshll.u32 %v4465, 16
        %v4715 = vrot.slane %v4713, 1
        %v4716 = vor.u32 %v4711, %v4715
        %v4718 = vshll.u32 %v4529, 16
        %v4720 = vrot.slane %v4718, 1
        %v4721 = vsel %vm1297, %v4716, %v4720
        %v4754 = vunpack.c.l.b16 %v3841
        %v4755 = vunpack.c.l.b16 %v3842
        %v4756 = vunpack.c.l.b16 %v3843
        %v4757 = vunpack.c.l.b16 %v3844
        %v4758 = vunpack.c.l.b16 %v3845
        %v4759 = vunpack.c.l.b16 %v3846
        %v4760 = vunpack.c.l.b16 %v3847
        %v4761 = vunpack.c.l.b16 %v3848
        %v4762 = vunpack.c.l.b16 %v3849
        %v4763 = vunpack.c.l.b16 %v3850
        %v4764 = vunpack.c.l.b16 %v3851
        %v4765 = vunpack.c.l.b16 %v3852
        %v4766 = vunpack.c.l.b16 %v3853
        %v4767 = vunpack.c.l.b16 %v3854
        %v4768 = vunpack.c.l.b16 %v3855
        %v4769 = vunpack.c.l.b16 %v3856
        %v4770 = vpack.c.b16 %v4419, %v4754
        %v4771 = vpack.c.b16 %v4421, %v4755
        %v4772 = vpack.c.b16 %v4423, %v4756
        %v4773 = vpack.c.b16 %v4425, %v4757
        %v4774 = vpack.c.b16 %v4427, %v4758
        %v4775 = vpack.c.b16 %v4429, %v4759
        %v4776 = vpack.c.b16 %v4431, %v4760
        %v4777 = vpack.c.b16 %v4433, %v4761
        %v4778 = vpack.c.b16 %v4435, %v4762
        %v4779 = vpack.c.b16 %v4437, %v4763
        %v4780 = vpack.c.b16 %v4439, %v4764
        %v4781 = vpack.c.b16 %v4441, %v4765
        %v4782 = vpack.c.b16 %v4443, %v4766
        %v4783 = vpack.c.b16 %v4445, %v4767
        %v4784 = vpack.c.b16 %v4447, %v4768
        %v4785 = vpack.c.b16 %v4449, %v4769
        %v4786 = vrot.slane %v4770, 1
        %v4787 = vrot.slane %v4514, 1
        %v4788 = vsel %vm1570, %v4786, %v4787
        %v4789 = vrot.slane %v4771, 1
        %v4790 = vrot.slane %v4515, 1
        %v4791 = vsel %vm1570, %v4789, %v4790
        %v4792 = vrot.slane %v4772, 1
        %v4793 = vrot.slane %v4516, 1
        %v4794 = vsel %vm1570, %v4792, %v4793
        %v4795 = vrot.slane %v4773, 1
        %v4796 = vrot.slane %v4517, 1
        %v4797 = vsel %vm1570, %v4795, %v4796
        %v4798 = vrot.slane %v4774, 1
        %v4799 = vrot.slane %v4518, 1
        %v4800 = vsel %vm1570, %v4798, %v4799
        %v4801 = vrot.slane %v4775, 1
        %v4802 = vrot.slane %v4519, 1
        %v4803 = vsel %vm1570, %v4801, %v4802
        %v4804 = vrot.slane %v4776, 1
        %v4805 = vrot.slane %v4520, 1
        %v4806 = vsel %vm1570, %v4804, %v4805
        %v4807 = vrot.slane %v4777, 1
        %v4808 = vrot.slane %v4521, 1
        %v4809 = vsel %vm1570, %v4807, %v4808
        %v4810 = vrot.slane %v4778, 1
        %v4811 = vrot.slane %v4522, 1
        %v4812 = vsel %vm1570, %v4810, %v4811
        %v4813 = vrot.slane %v4779, 1
        %v4814 = vrot.slane %v4523, 1
        %v4815 = vsel %vm1570, %v4813, %v4814
        %v4816 = vrot.slane %v4780, 1
        %v4817 = vrot.slane %v4524, 1
        %v4818 = vsel %vm1570, %v4816, %v4817
        %v4819 = vrot.slane %v4781, 1
        %v4820 = vrot.slane %v4525, 1
        %v4821 = vsel %vm1570, %v4819, %v4820
        %v4822 = vrot.slane %v4782, 1
        %v4823 = vrot.slane %v4526, 1
        %v4824 = vsel %vm1570, %v4822, %v4823
        %v4825 = vrot.slane %v4783, 1
        %v4826 = vrot.slane %v4527, 1
        %v4827 = vsel %vm1570, %v4825, %v4826
        %v4828 = vrot.slane %v4784, 1
        %v4829 = vrot.slane %v4528, 1
        %v4830 = vsel %vm1570, %v4828, %v4829
        %v4831 = vrot.slane %v4785, 1
        %v4832 = vrot.slane %v4529, 1
        %v4833 = vsel %vm1570, %v4831, %v4832
        %v4882 = vunpack.c.l.b16 %v3858
        %v4883 = vunpack.c.l.b16 %v3859
        %v4884 = vunpack.c.l.b16 %v3860
        %v4885 = vunpack.c.l.b16 %v3861
        %v4886 = vunpack.c.l.b16 %v3862
        %v4887 = vunpack.c.l.b16 %v3863
        %v4888 = vunpack.c.l.b16 %v3864
        %v4889 = vunpack.c.l.b16 %v3865
        %v4890 = vunpack.c.l.b16 %v3866
        %v4891 = vunpack.c.l.b16 %v3867
        %v4892 = vunpack.c.l.b16 %v3868
        %v4893 = vunpack.c.l.b16 %v3869
        %v4894 = vunpack.c.l.b16 %v3870
        %v4895 = vunpack.c.l.b16 %v3871
        %v4896 = vunpack.c.l.b16 %v3872
        %v4897 = vunpack.c.l.b16 %v3873
        %v4898 = vunpack.c.l.b16 %v3874
        %v4899 = vunpack.c.l.b16 %v3875
        %v4900 = vunpack.c.l.b16 %v3876
        %v4901 = vunpack.c.l.b16 %v3877
        %v4902 = vunpack.c.l.b16 %v3878
        %v4903 = vunpack.c.l.b16 %v3879
        %v4904 = vunpack.c.l.b16 %v3880
        %v4905 = vunpack.c.l.b16 %v3881
        %v4906 = vunpack.c.l.b16 %v3882
        %v4907 = vunpack.c.l.b16 %v3883
        %v4908 = vunpack.c.l.b16 %v3884
        %v4909 = vunpack.c.l.b16 %v3885
        %v4910 = vunpack.c.l.b16 %v3886
        %v4911 = vunpack.c.l.b16 %v3887
        %v4912 = vunpack.c.l.b16 %v3888
        %v4913 = vunpack.c.l.b16 %v3889
        %v4914 = vpack.c.b16 %v4883, %v4882
        %v4915 = vpack.c.b16 %v4885, %v4884
        %v4916 = vpack.c.b16 %v4887, %v4886
        %v4917 = vpack.c.b16 %v4889, %v4888
        %v4918 = vpack.c.b16 %v4891, %v4890
        %v4919 = vpack.c.b16 %v4893, %v4892
        %v4920 = vpack.c.b16 %v4895, %v4894
        %v4921 = vpack.c.b16 %v4897, %v4896
        %v4922 = vpack.c.b16 %v4899, %v4898
        %v4923 = vpack.c.b16 %v4901, %v4900
        %v4924 = vpack.c.b16 %v4903, %v4902
        %v4925 = vpack.c.b16 %v4905, %v4904
        %v4926 = vpack.c.b16 %v4907, %v4906
        %v4927 = vpack.c.b16 %v4909, %v4908
        %v4928 = vpack.c.b16 %v4911, %v4910
        %v4929 = vpack.c.b16 %v4913, %v4912
        %v4962 = vunpack.c.l.b16 %v3890
        %v4963 = vunpack.c.l.b16 %v3891
        %v4964 = vunpack.c.l.b16 %v3892
        %v4965 = vunpack.c.l.b16 %v3893
        %v4966 = vunpack.c.l.b16 %v3894
        %v4967 = vunpack.c.l.b16 %v3895
        %v4968 = vunpack.c.l.b16 %v3896
        %v4969 = vunpack.c.l.b16 %v3897
        %v4970 = vunpack.c.l.b16 %v3898
        %v4971 = vunpack.c.l.b16 %v3899
        %v4972 = vunpack.c.l.b16 %v3900
        %v4973 = vunpack.c.l.b16 %v3901
        %v4974 = vunpack.c.l.b16 %v3902
        %v4975 = vunpack.c.l.b16 %v3903
        %v4976 = vunpack.c.l.b16 %v3904
        %v4977 = vunpack.c.l.b16 %v3905
        %v4978 = vpack.c.b16 %v4962, %v4962
        %v4979 = vpack.c.b16 %v4963, %v4963
        %v4980 = vpack.c.b16 %v4964, %v4964
        %v4981 = vpack.c.b16 %v4965, %v4965
        %v4982 = vpack.c.b16 %v4966, %v4966
        %v4983 = vpack.c.b16 %v4967, %v4967
        %v4984 = vpack.c.b16 %v4968, %v4968
        %v4985 = vpack.c.b16 %v4969, %v4969
        %v4986 = vpack.c.b16 %v4970, %v4970
        %v4987 = vpack.c.b16 %v4971, %v4971
        %v4988 = vpack.c.b16 %v4972, %v4972
        %v4989 = vpack.c.b16 %v4973, %v4973
        %v4990 = vpack.c.b16 %v4974, %v4974
        %v4991 = vpack.c.b16 %v4975, %v4975
        %v4992 = vpack.c.b16 %v4976, %v4976
        %v4993 = vpack.c.b16 %v4977, %v4977
        %v4995 = vshrl.u32 %v4914, 16
        %v4997 = vshll.u32 %v4914, 16
        %v4999 = vrot.slane %v4997, 1
        %v5000 = vor.u32 %v4995, %v4999
        %v5002 = vshll.u32 %v4978, 16
        %v5004 = vrot.slane %v5002, 1
        %v5005 = vsel %vm1297, %v5000, %v5004
        %v5007 = vshrl.u32 %v4915, 16
        %v5009 = vshll.u32 %v4915, 16
        %v5011 = vrot.slane %v5009, 1
        %v5012 = vor.u32 %v5007, %v5011
        %v5014 = vshll.u32 %v4979, 16
        %v5016 = vrot.slane %v5014, 1
        %v5017 = vsel %vm1297, %v5012, %v5016
        %v5019 = vshrl.u32 %v4916, 16
        %v5021 = vshll.u32 %v4916, 16
        %v5023 = vrot.slane %v5021, 1
        %v5024 = vor.u32 %v5019, %v5023
        %v5026 = vshll.u32 %v4980, 16
        %v5028 = vrot.slane %v5026, 1
        %v5029 = vsel %vm1297, %v5024, %v5028
        %v5031 = vshrl.u32 %v4917, 16
        %v5033 = vshll.u32 %v4917, 16
        %v5035 = vrot.slane %v5033, 1
        %v5036 = vor.u32 %v5031, %v5035
        %v5038 = vshll.u32 %v4981, 16
        %v5040 = vrot.slane %v5038, 1
        %v5041 = vsel %vm1297, %v5036, %v5040
        %v5043 = vshrl.u32 %v4918, 16
        %v5045 = vshll.u32 %v4918, 16
        %v5047 = vrot.slane %v5045, 1
        %v5048 = vor.u32 %v5043, %v5047
        %v5050 = vshll.u32 %v4982, 16
        %v5052 = vrot.slane %v5050, 1
        %v5053 = vsel %vm1297, %v5048, %v5052
        %v5055 = vshrl.u32 %v4919, 16
        %v5057 = vshll.u32 %v4919, 16
        %v5059 = vrot.slane %v5057, 1
        %v5060 = vor.u32 %v5055, %v5059
        %v5062 = vshll.u32 %v4983, 16
        %v5064 = vrot.slane %v5062, 1
        %v5065 = vsel %vm1297, %v5060, %v5064
        %v5067 = vshrl.u32 %v4920, 16
        %v5069 = vshll.u32 %v4920, 16
        %v5071 = vrot.slane %v5069, 1
        %v5072 = vor.u32 %v5067, %v5071
        %v5074 = vshll.u32 %v4984, 16
        %v5076 = vrot.slane %v5074, 1
        %v5077 = vsel %vm1297, %v5072, %v5076
        %v5079 = vshrl.u32 %v4921, 16
        %v5081 = vshll.u32 %v4921, 16
        %v5083 = vrot.slane %v5081, 1
        %v5084 = vor.u32 %v5079, %v5083
        %v5086 = vshll.u32 %v4985, 16
        %v5088 = vrot.slane %v5086, 1
        %v5089 = vsel %vm1297, %v5084, %v5088
        %v5091 = vshrl.u32 %v4922, 16
        %v5093 = vshll.u32 %v4922, 16
        %v5095 = vrot.slane %v5093, 1
        %v5096 = vor.u32 %v5091, %v5095
        %v5098 = vshll.u32 %v4986, 16
        %v5100 = vrot.slane %v5098, 1
        %v5101 = vsel %vm1297, %v5096, %v5100
        %v5103 = vshrl.u32 %v4923, 16
        %v5105 = vshll.u32 %v4923, 16
        %v5107 = vrot.slane %v5105, 1
        %v5108 = vor.u32 %v5103, %v5107
        %v5110 = vshll.u32 %v4987, 16
        %v5112 = vrot.slane %v5110, 1
        %v5113 = vsel %vm1297, %v5108, %v5112
        %v5115 = vshrl.u32 %v4924, 16
        %v5117 = vshll.u32 %v4924, 16
        %v5119 = vrot.slane %v5117, 1
        %v5120 = vor.u32 %v5115, %v5119
        %v5122 = vshll.u32 %v4988, 16
        %v5124 = vrot.slane %v5122, 1
        %v5125 = vsel %vm1297, %v5120, %v5124
        %v5127 = vshrl.u32 %v4925, 16
        %v5129 = vshll.u32 %v4925, 16
        %v5131 = vrot.slane %v5129, 1
        %v5132 = vor.u32 %v5127, %v5131
        %v5134 = vshll.u32 %v4989, 16
        %v5136 = vrot.slane %v5134, 1
        %v5137 = vsel %vm1297, %v5132, %v5136
        %v5139 = vshrl.u32 %v4926, 16
        %v5141 = vshll.u32 %v4926, 16
        %v5143 = vrot.slane %v5141, 1
        %v5144 = vor.u32 %v5139, %v5143
        %v5146 = vshll.u32 %v4990, 16
        %v5148 = vrot.slane %v5146, 1
        %v5149 = vsel %vm1297, %v5144, %v5148
        %v5151 = vshrl.u32 %v4927, 16
        %v5153 = vshll.u32 %v4927, 16
        %v5155 = vrot.slane %v5153, 1
        %v5156 = vor.u32 %v5151, %v5155
        %v5158 = vshll.u32 %v4991, 16
        %v5160 = vrot.slane %v5158, 1
        %v5161 = vsel %vm1297, %v5156, %v5160
        %v5163 = vshrl.u32 %v4928, 16
        %v5165 = vshll.u32 %v4928, 16
        %v5167 = vrot.slane %v5165, 1
        %v5168 = vor.u32 %v5163, %v5167
        %v5170 = vshll.u32 %v4992, 16
        %v5172 = vrot.slane %v5170, 1
        %v5173 = vsel %vm1297, %v5168, %v5172
        %v5175 = vshrl.u32 %v4929, 16
        %v5177 = vshll.u32 %v4929, 16
        %v5179 = vrot.slane %v5177, 1
        %v5180 = vor.u32 %v5175, %v5179
        %v5182 = vshll.u32 %v4993, 16
        %v5184 = vrot.slane %v5182, 1
        %v5185 = vsel %vm1297, %v5180, %v5184
        %v5218 = vunpack.c.l.b16 %v3906
        %v5219 = vunpack.c.l.b16 %v3907
        %v5220 = vunpack.c.l.b16 %v3908
        %v5221 = vunpack.c.l.b16 %v3909
        %v5222 = vunpack.c.l.b16 %v3910
        %v5223 = vunpack.c.l.b16 %v3911
        %v5224 = vunpack.c.l.b16 %v3912
        %v5225 = vunpack.c.l.b16 %v3913
        %v5226 = vunpack.c.l.b16 %v3914
        %v5227 = vunpack.c.l.b16 %v3915
        %v5228 = vunpack.c.l.b16 %v3916
        %v5229 = vunpack.c.l.b16 %v3917
        %v5230 = vunpack.c.l.b16 %v3918
        %v5231 = vunpack.c.l.b16 %v3919
        %v5232 = vunpack.c.l.b16 %v3920
        %v5233 = vunpack.c.l.b16 %v3921
        %v5234 = vpack.c.b16 %v4883, %v5218
        %v5235 = vpack.c.b16 %v4885, %v5219
        %v5236 = vpack.c.b16 %v4887, %v5220
        %v5237 = vpack.c.b16 %v4889, %v5221
        %v5238 = vpack.c.b16 %v4891, %v5222
        %v5239 = vpack.c.b16 %v4893, %v5223
        %v5240 = vpack.c.b16 %v4895, %v5224
        %v5241 = vpack.c.b16 %v4897, %v5225
        %v5242 = vpack.c.b16 %v4899, %v5226
        %v5243 = vpack.c.b16 %v4901, %v5227
        %v5244 = vpack.c.b16 %v4903, %v5228
        %v5245 = vpack.c.b16 %v4905, %v5229
        %v5246 = vpack.c.b16 %v4907, %v5230
        %v5247 = vpack.c.b16 %v4909, %v5231
        %v5248 = vpack.c.b16 %v4911, %v5232
        %v5249 = vpack.c.b16 %v4913, %v5233
        %v5250 = vrot.slane %v5234, 1
        %v5251 = vrot.slane %v4978, 1
        %v5252 = vsel %vm1570, %v5250, %v5251
        %v5253 = vrot.slane %v5235, 1
        %v5254 = vrot.slane %v4979, 1
        %v5255 = vsel %vm1570, %v5253, %v5254
        %v5256 = vrot.slane %v5236, 1
        %v5257 = vrot.slane %v4980, 1
        %v5258 = vsel %vm1570, %v5256, %v5257
        %v5259 = vrot.slane %v5237, 1
        %v5260 = vrot.slane %v4981, 1
        %v5261 = vsel %vm1570, %v5259, %v5260
        %v5262 = vrot.slane %v5238, 1
        %v5263 = vrot.slane %v4982, 1
        %v5264 = vsel %vm1570, %v5262, %v5263
        %v5265 = vrot.slane %v5239, 1
        %v5266 = vrot.slane %v4983, 1
        %v5267 = vsel %vm1570, %v5265, %v5266
        %v5268 = vrot.slane %v5240, 1
        %v5269 = vrot.slane %v4984, 1
        %v5270 = vsel %vm1570, %v5268, %v5269
        %v5271 = vrot.slane %v5241, 1
        %v5272 = vrot.slane %v4985, 1
        %v5273 = vsel %vm1570, %v5271, %v5272
        %v5274 = vrot.slane %v5242, 1
        %v5275 = vrot.slane %v4986, 1
        %v5276 = vsel %vm1570, %v5274, %v5275
        %v5277 = vrot.slane %v5243, 1
        %v5278 = vrot.slane %v4987, 1
        %v5279 = vsel %vm1570, %v5277, %v5278
        %v5280 = vrot.slane %v5244, 1
        %v5281 = vrot.slane %v4988, 1
        %v5282 = vsel %vm1570, %v5280, %v5281
        %v5283 = vrot.slane %v5245, 1
        %v5284 = vrot.slane %v4989, 1
        %v5285 = vsel %vm1570, %v5283, %v5284
        %v5286 = vrot.slane %v5246, 1
        %v5287 = vrot.slane %v4990, 1
        %v5288 = vsel %vm1570, %v5286, %v5287
        %v5289 = vrot.slane %v5247, 1
        %v5290 = vrot.slane %v4991, 1
        %v5291 = vsel %vm1570, %v5289, %v5290
        %v5292 = vrot.slane %v5248, 1
        %v5293 = vrot.slane %v4992, 1
        %v5294 = vsel %vm1570, %v5292, %v5293
        %v5295 = vrot.slane %v5249, 1
        %v5296 = vrot.slane %v4993, 1
        %v5297 = vsel %vm1570, %v5295, %v5296
        %v5314 = vld [vmem:[#allocation10] sm:$0xf]
        %v5315 = vld [vmem:[#allocation10 + $0x4] sm:$0xf]
        %v5316 = vld [vmem:[#allocation10 + $0x8] sm:$0xf]
        %v5317 = vld [vmem:[#allocation10 + $0xc] sm:$0xf]
        %v5318 = vld [vmem:[#allocation10 + $0x10] sm:$0xf]
        %v5319 = vld [vmem:[#allocation10 + $0x14] sm:$0xf]
        %v5320 = vld [vmem:[#allocation10 + $0x18] sm:$0xf]
        %v5321 = vld [vmem:[#allocation10 + $0x1c] sm:$0xf]
        %v5322 = vld [vmem:[#allocation10 + $0x20] sm:$0xf]
        %v5323 = vld [vmem:[#allocation10 + $0x24] sm:$0xf]
        %v5324 = vld [vmem:[#allocation10 + $0x28] sm:$0xf]
        %v5325 = vld [vmem:[#allocation10 + $0x2c] sm:$0xf]
        %v5326 = vld [vmem:[#allocation10 + $0x30] sm:$0xf]
        %v5327 = vld [vmem:[#allocation10 + $0x34] sm:$0xf]
        %v5328 = vld [vmem:[#allocation10 + $0x38] sm:$0xf]
        %v5329 = vld [vmem:[#allocation10 + $0x3c] sm:$0xf]
        %v5330 = vld [vmem:[#allocation10 + $0x40] sm:$0xf]
        %v5331 = vld [vmem:[#allocation10 + $0x44] sm:$0xf]
        %v5332 = vld [vmem:[#allocation10 + $0x48] sm:$0xf]
        %v5333 = vld [vmem:[#allocation10 + $0x4c] sm:$0xf]
        %v5334 = vld [vmem:[#allocation10 + $0x50] sm:$0xf]
        %v5335 = vld [vmem:[#allocation10 + $0x54] sm:$0xf]
        %v5336 = vld [vmem:[#allocation10 + $0x58] sm:$0xf]
        %v5337 = vld [vmem:[#allocation10 + $0x5c] sm:$0xf]
        %v5338 = vld [vmem:[#allocation10 + $0x60] sm:$0xf]
        %v5339 = vld [vmem:[#allocation10 + $0x64] sm:$0xf]
        %v5340 = vld [vmem:[#allocation10 + $0x68] sm:$0xf]
        %v5341 = vld [vmem:[#allocation10 + $0x6c] sm:$0xf]
        %v5342 = vld [vmem:[#allocation10 + $0x70] sm:$0xf]
        %v5343 = vld [vmem:[#allocation10 + $0x74] sm:$0xf]
        %v5344 = vld [vmem:[#allocation10 + $0x78] sm:$0xf]
        %v5345 = vld [vmem:[#allocation10 + $0x7c] sm:$0xf]
        %v5346 = vld [vmem:[#allocation10 + $0x80] sm:$0xf]
        %v5347 = vld [vmem:[#allocation10 + $0x84] sm:$0xf]
        %v5348 = vld [vmem:[#allocation10 + $0x88] sm:$0xf]
        %v5349 = vld [vmem:[#allocation10 + $0x8c] sm:$0xf]
        %v5350 = vld [vmem:[#allocation10 + $0x90] sm:$0xf]
        %v5351 = vld [vmem:[#allocation10 + $0x94] sm:$0xf]
        %v5352 = vld [vmem:[#allocation10 + $0x98] sm:$0xf]
        %v5353 = vld [vmem:[#allocation10 + $0x9c] sm:$0xf]
        %v5354 = vld [vmem:[#allocation10 + $0xa0] sm:$0xf]
        %v5355 = vld [vmem:[#allocation10 + $0xa4] sm:$0xf]
        %v5356 = vld [vmem:[#allocation10 + $0xa8] sm:$0xf]
        %v5357 = vld [vmem:[#allocation10 + $0xac] sm:$0xf]
        %v5358 = vld [vmem:[#allocation10 + $0xb0] sm:$0xf]
        %v5359 = vld [vmem:[#allocation10 + $0xb4] sm:$0xf]
        %v5360 = vld [vmem:[#allocation10 + $0xb8] sm:$0xf]
        %v5361 = vld [vmem:[#allocation10 + $0xbc] sm:$0xf]
        %v5362 = vld [vmem:[#allocation10 + $0xc0] sm:$0xf]
        %v5363 = vld [vmem:[#allocation10 + $0xc4] sm:$0xf]
        %v5364 = vld [vmem:[#allocation10 + $0xc8] sm:$0xf]
        %v5365 = vld [vmem:[#allocation10 + $0xcc] sm:$0xf]
        %v5366 = vld [vmem:[#allocation10 + $0xd0] sm:$0xf]
        %v5367 = vld [vmem:[#allocation10 + $0xd4] sm:$0xf]
        %v5368 = vld [vmem:[#allocation10 + $0xd8] sm:$0xf]
        %v5369 = vld [vmem:[#allocation10 + $0xdc] sm:$0xf]
        %v5370 = vld [vmem:[#allocation10 + $0xe0] sm:$0xf]
        %v5371 = vld [vmem:[#allocation10 + $0xe4] sm:$0xf]
        %v5372 = vld [vmem:[#allocation10 + $0xe8] sm:$0xf]
        %v5373 = vld [vmem:[#allocation10 + $0xec] sm:$0xf]
        %v5374 = vld [vmem:[#allocation10 + $0xf0] sm:$0xf]
        %v5375 = vld [vmem:[#allocation10 + $0xf4] sm:$0xf]
        %v5376 = vld [vmem:[#allocation10 + $0xf8] sm:$0xf]
        %v5377 = vld [vmem:[#allocation10 + $0xfc] sm:$0xf]
        %v5378 = vld [vmem:[#allocation10 + $0x100] sm:$0xf]
        %v5379 = vld [vmem:[#allocation10 + $0x104] sm:$0xf]
        %v5380 = vld [vmem:[#allocation10 + $0x108] sm:$0xf]
        %v5381 = vld [vmem:[#allocation10 + $0x10c] sm:$0xf]
        %v5382 = vld [vmem:[#allocation10 + $0x110] sm:$0xf]
        %v5383 = vld [vmem:[#allocation10 + $0x114] sm:$0xf]
        %v5384 = vld [vmem:[#allocation10 + $0x118] sm:$0xf]
        %v5385 = vld [vmem:[#allocation10 + $0x11c] sm:$0xf]
        %v5386 = vld [vmem:[#allocation10 + $0x120] sm:$0xf]
        %v5387 = vld [vmem:[#allocation10 + $0x124] sm:$0xf]
        %v5388 = vld [vmem:[#allocation10 + $0x128] sm:$0xf]
        %v5389 = vld [vmem:[#allocation10 + $0x12c] sm:$0xf]
        %v5390 = vld [vmem:[#allocation10 + $0x130] sm:$0xf]
        %v5391 = vld [vmem:[#allocation10 + $0x134] sm:$0xf]
        %v5392 = vld [vmem:[#allocation10 + $0x138] sm:$0xf]
        %v5393 = vld [vmem:[#allocation10 + $0x13c] sm:$0xf]
        %v5394 = vld [vmem:[#allocation10 + $0x140] sm:$0xf]
        %v5395 = vld [vmem:[#allocation10 + $0x144] sm:$0xf]
        %v5396 = vld [vmem:[#allocation10 + $0x148] sm:$0xf]
        %v5397 = vld [vmem:[#allocation10 + $0x14c] sm:$0xf]
        %v5398 = vld [vmem:[#allocation10 + $0x150] sm:$0xf]
        %v5399 = vld [vmem:[#allocation10 + $0x154] sm:$0xf]
        %v5400 = vld [vmem:[#allocation10 + $0x158] sm:$0xf]
        %v5401 = vld [vmem:[#allocation10 + $0x15c] sm:$0xf]
        %v5402 = vld [vmem:[#allocation10 + $0x160] sm:$0xf]
        %v5403 = vld [vmem:[#allocation10 + $0x164] sm:$0xf]
        %v5404 = vld [vmem:[#allocation10 + $0x168] sm:$0xf]
        %v5405 = vld [vmem:[#allocation10 + $0x16c] sm:$0xf]
        %v5406 = vld [vmem:[#allocation10 + $0x170] sm:$0xf]
        %v5407 = vld [vmem:[#allocation10 + $0x174] sm:$0xf]
        %v5408 = vld [vmem:[#allocation10 + $0x178] sm:$0xf]
        %v5409 = vld [vmem:[#allocation10 + $0x17c] sm:$0xf]
        %v5410 = vld [vmem:[#allocation10 + $0x180] sm:$0xf]
        %v5411 = vld [vmem:[#allocation10 + $0x184] sm:$0xf]
        %v5412 = vld [vmem:[#allocation10 + $0x188] sm:$0xf]
        %v5413 = vld [vmem:[#allocation10 + $0x18c] sm:$0xf]
        %v5414 = vld [vmem:[#allocation10 + $0x190] sm:$0xf]
        %v5415 = vld [vmem:[#allocation10 + $0x194] sm:$0xf]
        %v5416 = vld [vmem:[#allocation10 + $0x198] sm:$0xf]
        %v5417 = vld [vmem:[#allocation10 + $0x19c] sm:$0xf]
        %v5418 = vld [vmem:[#allocation10 + $0x1a0] sm:$0xf]
        %v5419 = vld [vmem:[#allocation10 + $0x1a4] sm:$0xf]
        %v5420 = vld [vmem:[#allocation10 + $0x1a8] sm:$0xf]
        %v5421 = vld [vmem:[#allocation10 + $0x1ac] sm:$0xf]
        %v5422 = vld [vmem:[#allocation10 + $0x1b0] sm:$0xf]
        %v5423 = vld [vmem:[#allocation10 + $0x1b4] sm:$0xf]
        %v5424 = vld [vmem:[#allocation10 + $0x1b8] sm:$0xf]
        %v5425 = vld [vmem:[#allocation10 + $0x1bc] sm:$0xf]
        %v5426 = vld [vmem:[#allocation10 + $0x1c0] sm:$0xf]
        %v5427 = vld [vmem:[#allocation10 + $0x1c4] sm:$0xf]
        %v5428 = vld [vmem:[#allocation10 + $0x1c8] sm:$0xf]
        %v5429 = vld [vmem:[#allocation10 + $0x1cc] sm:$0xf]
        %v5430 = vld [vmem:[#allocation10 + $0x1d0] sm:$0xf]
        %v5431 = vld [vmem:[#allocation10 + $0x1d4] sm:$0xf]
        %v5432 = vld [vmem:[#allocation10 + $0x1d8] sm:$0xf]
        %v5433 = vld [vmem:[#allocation10 + $0x1dc] sm:$0xf]
        %v5434 = vld [vmem:[#allocation10 + $0x1e0] sm:$0xf]
        %v5435 = vld [vmem:[#allocation10 + $0x1e4] sm:$0xf]
        %v5436 = vld [vmem:[#allocation10 + $0x1e8] sm:$0xf]
        %v5437 = vld [vmem:[#allocation10 + $0x1ec] sm:$0xf]
        %v5438 = vld [vmem:[#allocation10 + $0x1f0] sm:$0xf]
        %v5439 = vld [vmem:[#allocation10 + $0x1f4] sm:$0xf]
        %v5440 = vld [vmem:[#allocation10 + $0x1f8] sm:$0xf]
        %v5441 = vld [vmem:[#allocation10 + $0x1fc] sm:$0xf]
        %v5442 = vld [vmem:[#allocation10 + $0x200] sm:$0xf]
        %v5443 = vld [vmem:[#allocation10 + $0x204] sm:$0xf]
        %v5444 = vld [vmem:[#allocation10 + $0x208] sm:$0xf]
        %v5445 = vld [vmem:[#allocation10 + $0x20c] sm:$0xf]
        %v5446 = vld [vmem:[#allocation10 + $0x210] sm:$0xf]
        %v5447 = vld [vmem:[#allocation10 + $0x214] sm:$0xf]
        %v5448 = vld [vmem:[#allocation10 + $0x218] sm:$0xf]
        %v5449 = vld [vmem:[#allocation10 + $0x21c] sm:$0xf]
        %v5450 = vld [vmem:[#allocation10 + $0x220] sm:$0xf]
        %v5451 = vld [vmem:[#allocation10 + $0x224] sm:$0xf]
        %v5452 = vld [vmem:[#allocation10 + $0x228] sm:$0xf]
        %v5453 = vld [vmem:[#allocation10 + $0x22c] sm:$0xf]
        %v5454 = vld [vmem:[#allocation10 + $0x230] sm:$0xf]
        %v5455 = vld [vmem:[#allocation10 + $0x234] sm:$0xf]
        %v5456 = vld [vmem:[#allocation10 + $0x238] sm:$0xf]
        %v5457 = vld [vmem:[#allocation10 + $0x23c] sm:$0xf]
        %v5458 = vld [vmem:[#allocation12] sm:$0x1]
        %v5460 = vlaneseq
        %v5461 = vshrl.u32 %v5460, 7
        %v5462 = vsub.s32 0, %v5461
        %v5463 = vrot.slane %v5458, %v5462
        %v5609 = vunpack.c.l.b16 %v5314
        %v5610 = vunpack.c.l.b16 %v5315
        %v5611 = vunpack.c.l.b16 %v5316
        %v5612 = vunpack.c.l.b16 %v5317
        %v5613 = vunpack.c.l.b16 %v5318
        %v5614 = vunpack.c.l.b16 %v5319
        %v5615 = vunpack.c.l.b16 %v5320
        %v5616 = vunpack.c.l.b16 %v5321
        %v5617 = vunpack.c.l.b16 %v5322
        %v5618 = vunpack.c.l.b16 %v5323
        %v5619 = vunpack.c.l.b16 %v5324
        %v5620 = vunpack.c.l.b16 %v5325
        %v5621 = vunpack.c.l.b16 %v5326
        %v5622 = vunpack.c.l.b16 %v5327
        %v5623 = vunpack.c.l.b16 %v5328
        %v5624 = vunpack.c.l.b16 %v5329
        %v5625 = vunpack.c.l.b16 %v5330
        %v5626 = vunpack.c.l.b16 %v5331
        %v5627 = vunpack.c.l.b16 %v5332
        %v5628 = vunpack.c.l.b16 %v5333
        %v5629 = vunpack.c.l.b16 %v5334
        %v5630 = vunpack.c.l.b16 %v5335
        %v5631 = vunpack.c.l.b16 %v5336
        %v5632 = vunpack.c.l.b16 %v5337
        %v5633 = vunpack.c.l.b16 %v5338
        %v5634 = vunpack.c.l.b16 %v5339
        %v5635 = vunpack.c.l.b16 %v5340
        %v5636 = vunpack.c.l.b16 %v5341
        %v5637 = vunpack.c.l.b16 %v5342
        %v5638 = vunpack.c.l.b16 %v5343
        %v5639 = vunpack.c.l.b16 %v5344
        %v5640 = vunpack.c.l.b16 %v5345
        %v5641 = vunpack.c.l.b16 %v5346
        %v5642 = vunpack.c.l.b16 %v5347
        %v5643 = vunpack.c.l.b16 %v5348
        %v5644 = vunpack.c.l.b16 %v5349
        %v5645 = vunpack.c.l.b16 %v5350
        %v5646 = vunpack.c.l.b16 %v5351
        %v5647 = vunpack.c.l.b16 %v5352
        %v5648 = vunpack.c.l.b16 %v5353
        %v5649 = vunpack.c.l.b16 %v5354
        %v5650 = vunpack.c.l.b16 %v5355
        %v5651 = vunpack.c.l.b16 %v5356
        %v5652 = vunpack.c.l.b16 %v5357
        %v5653 = vunpack.c.l.b16 %v5358
        %v5654 = vunpack.c.l.b16 %v5359
        %v5655 = vunpack.c.l.b16 %v5360
        %v5656 = vunpack.c.l.b16 %v5361
        %v5657 = vunpack.c.l.b16 %v5362
        %v5658 = vunpack.c.l.b16 %v5363
        %v5659 = vunpack.c.l.b16 %v5364
        %v5660 = vunpack.c.l.b16 %v5365
        %v5661 = vunpack.c.l.b16 %v5366
        %v5662 = vunpack.c.l.b16 %v5367
        %v5663 = vunpack.c.l.b16 %v5368
        %v5664 = vunpack.c.l.b16 %v5369
        %v5665 = vunpack.c.l.b16 %v5370
        %v5666 = vunpack.c.l.b16 %v5371
        %v5667 = vunpack.c.l.b16 %v5372
        %v5668 = vunpack.c.l.b16 %v5373
        %v5669 = vunpack.c.l.b16 %v5374
        %v5670 = vunpack.c.l.b16 %v5375
        %v5671 = vunpack.c.l.b16 %v5376
        %v5672 = vunpack.c.l.b16 %v5377
        %v5673 = vunpack.c.l.b16 %v5378
        %v5674 = vunpack.c.l.b16 %v5379
        %v5675 = vunpack.c.l.b16 %v5380
        %v5676 = vunpack.c.l.b16 %v5381
        %v5677 = vunpack.c.l.b16 %v5382
        %v5678 = vunpack.c.l.b16 %v5383
        %v5679 = vunpack.c.l.b16 %v5384
        %v5680 = vunpack.c.l.b16 %v5385
        %v5681 = vunpack.c.l.b16 %v5386
        %v5682 = vunpack.c.l.b16 %v5387
        %v5683 = vunpack.c.l.b16 %v5388
        %v5684 = vunpack.c.l.b16 %v5389
        %v5685 = vunpack.c.l.b16 %v5390
        %v5686 = vunpack.c.l.b16 %v5391
        %v5687 = vunpack.c.l.b16 %v5392
        %v5688 = vunpack.c.l.b16 %v5393
        %v5689 = vunpack.c.l.b16 %v5394
        %v5690 = vunpack.c.l.b16 %v5395
        %v5691 = vunpack.c.l.b16 %v5396
        %v5692 = vunpack.c.l.b16 %v5397
        %v5693 = vunpack.c.l.b16 %v5398
        %v5694 = vunpack.c.l.b16 %v5399
        %v5695 = vunpack.c.l.b16 %v5400
        %v5696 = vunpack.c.l.b16 %v5401
        %v5697 = vunpack.c.l.b16 %v5402
        %v5698 = vunpack.c.l.b16 %v5403
        %v5699 = vunpack.c.l.b16 %v5404
        %v5700 = vunpack.c.l.b16 %v5405
        %v5701 = vunpack.c.l.b16 %v5406
        %v5702 = vunpack.c.l.b16 %v5407
        %v5703 = vunpack.c.l.b16 %v5408
        %v5704 = vunpack.c.l.b16 %v5409
        %v5705 = vunpack.c.l.b16 %v5410
        %v5706 = vunpack.c.l.b16 %v5411
        %v5707 = vunpack.c.l.b16 %v5412
        %v5708 = vunpack.c.l.b16 %v5413
        %v5709 = vunpack.c.l.b16 %v5414
        %v5710 = vunpack.c.l.b16 %v5415
        %v5711 = vunpack.c.l.b16 %v5416
        %v5712 = vunpack.c.l.b16 %v5417
        %v5713 = vunpack.c.l.b16 %v5418
        %v5714 = vunpack.c.l.b16 %v5419
        %v5715 = vunpack.c.l.b16 %v5420
        %v5716 = vunpack.c.l.b16 %v5421
        %v5717 = vunpack.c.l.b16 %v5422
        %v5718 = vunpack.c.l.b16 %v5423
        %v5719 = vunpack.c.l.b16 %v5424
        %v5720 = vunpack.c.l.b16 %v5425
        %v5721 = vunpack.c.l.b16 %v5426
        %v5722 = vunpack.c.l.b16 %v5427
        %v5723 = vunpack.c.l.b16 %v5428
        %v5724 = vunpack.c.l.b16 %v5429
        %v5725 = vunpack.c.l.b16 %v5430
        %v5726 = vunpack.c.l.b16 %v5431
        %v5727 = vunpack.c.l.b16 %v5432
        %v5728 = vunpack.c.l.b16 %v5433
        %v5729 = vunpack.c.l.b16 %v5434
        %v5730 = vunpack.c.l.b16 %v5435
        %v5731 = vunpack.c.l.b16 %v5436
        %v5732 = vunpack.c.l.b16 %v5437
        %v5733 = vunpack.c.l.b16 %v5438
        %v5734 = vunpack.c.l.b16 %v5439
        %v5735 = vunpack.c.l.b16 %v5440
        %v5736 = vunpack.c.l.b16 %v5441
        %v5737 = vunpack.c.l.b16 %v5442
        %v5738 = vunpack.c.l.b16 %v5443
        %v5739 = vunpack.c.l.b16 %v5444
        %v5740 = vunpack.c.l.b16 %v5445
        %v5741 = vunpack.c.l.b16 %v5446
        %v5742 = vunpack.c.l.b16 %v5447
        %v5743 = vunpack.c.l.b16 %v5448
        %v5744 = vunpack.c.l.b16 %v5449
        %v5745 = vunpack.c.l.b16 %v5450
        %v5746 = vunpack.c.l.b16 %v5451
        %v5747 = vunpack.c.l.b16 %v5452
        %v5748 = vunpack.c.l.b16 %v5453
        %v5749 = vunpack.c.l.b16 %v5454
        %v5750 = vunpack.c.l.b16 %v5455
        %v5751 = vunpack.c.l.b16 %v5456
        %v5752 = vunpack.c.l.b16 %v5457
        %v5753 = vpack.c.b16 %v5610, %v5609
        %v5754 = vpack.c.b16 %v5612, %v5611
        %v5755 = vpack.c.b16 %v5614, %v5613
        %v5756 = vpack.c.b16 %v5616, %v5615
        %v5757 = vpack.c.b16 %v5618, %v5617
        %v5758 = vpack.c.b16 %v5620, %v5619
        %v5759 = vpack.c.b16 %v5622, %v5621
        %v5760 = vpack.c.b16 %v5624, %v5623
        %v5761 = vpack.c.b16 %v5626, %v5625
        %v5762 = vpack.c.b16 %v5628, %v5627
        %v5763 = vpack.c.b16 %v5630, %v5629
        %v5764 = vpack.c.b16 %v5632, %v5631
        %v5765 = vpack.c.b16 %v5634, %v5633
        %v5766 = vpack.c.b16 %v5636, %v5635
        %v5767 = vpack.c.b16 %v5638, %v5637
        %v5768 = vpack.c.b16 %v5640, %v5639
        %v5769 = vpack.c.b16 %v5642, %v5641
        %v5770 = vpack.c.b16 %v5644, %v5643
        %v5771 = vpack.c.b16 %v5646, %v5645
        %v5772 = vpack.c.b16 %v5648, %v5647
        %v5773 = vpack.c.b16 %v5650, %v5649
        %v5774 = vpack.c.b16 %v5652, %v5651
        %v5775 = vpack.c.b16 %v5654, %v5653
        %v5776 = vpack.c.b16 %v5656, %v5655
        %v5777 = vpack.c.b16 %v5658, %v5657
        %v5778 = vpack.c.b16 %v5660, %v5659
        %v5779 = vpack.c.b16 %v5662, %v5661
        %v5780 = vpack.c.b16 %v5664, %v5663
        %v5781 = vpack.c.b16 %v5666, %v5665
        %v5782 = vpack.c.b16 %v5668, %v5667
        %v5783 = vpack.c.b16 %v5670, %v5669
        %v5784 = vpack.c.b16 %v5672, %v5671
        %v5785 = vpack.c.b16 %v5674, %v5673
        %v5786 = vpack.c.b16 %v5676, %v5675
        %v5787 = vpack.c.b16 %v5678, %v5677
        %v5788 = vpack.c.b16 %v5680, %v5679
        %v5789 = vpack.c.b16 %v5682, %v5681
        %v5790 = vpack.c.b16 %v5684, %v5683
        %v5791 = vpack.c.b16 %v5686, %v5685
        %v5792 = vpack.c.b16 %v5688, %v5687
        %v5793 = vpack.c.b16 %v5690, %v5689
        %v5794 = vpack.c.b16 %v5692, %v5691
        %v5795 = vpack.c.b16 %v5694, %v5693
        %v5796 = vpack.c.b16 %v5696, %v5695
        %v5797 = vpack.c.b16 %v5698, %v5697
        %v5798 = vpack.c.b16 %v5700, %v5699
        %v5799 = vpack.c.b16 %v5702, %v5701
        %v5800 = vpack.c.b16 %v5704, %v5703
        %v5801 = vpack.c.b16 %v5706, %v5705
        %v5802 = vpack.c.b16 %v5708, %v5707
        %v5803 = vpack.c.b16 %v5710, %v5709
        %v5804 = vpack.c.b16 %v5712, %v5711
        %v5805 = vpack.c.b16 %v5714, %v5713
        %v5806 = vpack.c.b16 %v5716, %v5715
        %v5807 = vpack.c.b16 %v5718, %v5717
        %v5808 = vpack.c.b16 %v5720, %v5719
        %v5809 = vpack.c.b16 %v5722, %v5721
        %v5810 = vpack.c.b16 %v5724, %v5723
        %v5811 = vpack.c.b16 %v5726, %v5725
        %v5812 = vpack.c.b16 %v5728, %v5727
        %v5813 = vpack.c.b16 %v5730, %v5729
        %v5814 = vpack.c.b16 %v5732, %v5731
        %v5815 = vpack.c.b16 %v5734, %v5733
        %v5816 = vpack.c.b16 %v5736, %v5735
        %v5817 = vpack.c.b16 %v5738, %v5737
        %v5818 = vpack.c.b16 %v5740, %v5739
        %v5819 = vpack.c.b16 %v5742, %v5741
        %v5820 = vpack.c.b16 %v5744, %v5743
        %v5821 = vpack.c.b16 %v5746, %v5745
        %v5822 = vpack.c.b16 %v5748, %v5747
        %v5823 = vpack.c.b16 %v5750, %v5749
        %v5824 = vpack.c.b16 %v5752, %v5751
        %5897 = vmatprep.subr.bf16.mxu0 0
        %5898 = vmatpush1.bf16.msra.mxu0 %v5753
        %5899 = vmatprep.subr.bf16.mxu0 0
        %5900 = vmatpush1.bf16.msra.mxu0 %v5754
        %5901 = vmatprep.subr.bf16.mxu0 0
        %5902 = vmatpush1.bf16.msra.mxu0 %v5755
        %5903 = vmatprep.subr.bf16.mxu0 0
        %5904 = vmatpush1.bf16.msra.mxu0 %v5756
        %5905 = vmatprep.subr.bf16.mxu0 0
        %5906 = vmatpush1.bf16.msra.mxu0 %v5757
        %5907 = vmatprep.subr.bf16.mxu0 0
        %5908 = vmatpush1.bf16.msra.mxu0 %v5758
        %5909 = vmatprep.subr.bf16.mxu0 0
        %5910 = vmatpush1.bf16.msra.mxu0 %v5759
        %5911 = vmatprep.subr.bf16.mxu0 0
        %5912 = vmatpush1.bf16.msra.mxu0 %v5760
        %5913 = vmatprep.subr.bf16.mxu0 0
        %5914 = vmatpush1.bf16.msra.mxu0 %v5761
        %5915 = vmatprep.subr.bf16.mxu0 0
        %5916 = vmatpush1.bf16.msra.mxu0 %v5762
        %5917 = vmatprep.subr.bf16.mxu0 0
        %5918 = vmatpush1.bf16.msra.mxu0 %v5763
        %5919 = vmatprep.subr.bf16.mxu0 0
        %5920 = vmatpush1.bf16.msra.mxu0 %v5764
        %5921 = vmatprep.subr.bf16.mxu0 0
        %5922 = vmatpush1.bf16.msra.mxu0 %v5765
        %5923 = vmatprep.subr.bf16.mxu0 0
        %5924 = vmatpush1.bf16.msra.mxu0 %v5766
        %5925 = vmatprep.subr.bf16.mxu0 0
        %5926 = vmatpush1.bf16.msra.mxu0 %v5767
        %5927 = vmatprep.subr.bf16.mxu0 0
        %5928 = vmatpush1.bf16.msra.mxu0 %v5768
        %5929 = vmatprep.mubr.bf16.mxu0 %v4077
        %5930 = vmatmul.mubr.bf16.gmra.mrb[0].mxu0 %v3986
        %v5931 = vpop.f32.mrb[0].mxu0
        %v5932 = vadd.f32 %v5463, %v5931
        %v5933 = vpop.f32.mrb[0].mxu0
        %v5934 = vpop.f32.mrb[0].mxu0
        %v5935 = vadd.f32 %v5463, %v5934
        %v5936 = vpop.f32.mrb[0].mxu0
        %5937 = vmatprep.mubr.bf16.mxu0 %v4089
        %5938 = vmatmul.mubr.bf16.gmra.mrb[0].mxu0 %v3987
        %v5939 = vpop.f32.mrb[0].mxu0
        %v5940 = vadd.f32 %v5463, %v5939
        %v5941 = vpop.f32.mrb[0].mxu0
        %v5942 = vpop.f32.mrb[0].mxu0
        %v5943 = vadd.f32 %v5463, %v5942
        %v5944 = vpop.f32.mrb[0].mxu0
        %5945 = vmatprep.mubr.bf16.mxu0 %v4101
        %5946 = vmatmul.mubr.bf16.gmra.mrb[0].mxu0 %v3988
        %v5947 = vpop.f32.mrb[0].mxu0
        %v5948 = vadd.f32 %v5463, %v5947
        %v5949 = vpop.f32.mrb[0].mxu0
        %v5950 = vpop.f32.mrb[0].mxu0
        %v5951 = vadd.f32 %v5463, %v5950
        %v5952 = vpop.f32.mrb[0].mxu0
        %5953 = vmatprep.mubr.bf16.mxu0 %v4113
        %5954 = vmatmul.mubr.bf16.gmra.mrb[0].mxu0 %v3989
        %v5955 = vpop.f32.mrb[0].mxu0
        %v5956 = vadd.f32 %v5463, %v5955
        %v5957 = vpop.f32.mrb[0].mxu0
        %v5958 = vpop.f32.mrb[0].mxu0
        %v5959 = vadd.f32 %v5463, %v5958
        %v5960 = vpop.f32.mrb[0].mxu0
        %5961 = vmatprep.mubr.bf16.mxu0 %v4125
        %5962 = vmatmul.mubr.bf16.gmra.mrb[0].mxu0 %v3990
        %v5963 = vpop.f32.mrb[0].mxu0
        %v5964 = vadd.f32 %v5463, %v5963
        %v5965 = vpop.f32.mrb[0].mxu0
        %v5966 = vpop.f32.mrb[0].mxu0
        %v5967 = vadd.f32 %v5463, %v5966
        %v5968 = vpop.f32.mrb[0].mxu0
        %5969 = vmatprep.mubr.bf16.mxu0 %v4137
        %5970 = vmatmul.mubr.bf16.gmra.mrb[0].mxu0 %v3991
        %v5971 = vpop.f32.mrb[0].mxu0
        %v5972 = vadd.f32 %v5463, %v5971
        %v5973 = vpop.f32.mrb[0].mxu0
        %v5974 = vpop.f32.mrb[0].mxu0
        %v5975 = vadd.f32 %v5463, %v5974
        %v5976 = vpop.f32.mrb[0].mxu0
        %5977 = vmatprep.mubr.bf16.mxu0 %v4149
        %5978 = vmatmul.mubr.bf16.gmra.mrb[0].mxu0 %v3992
        %v5979 = vpop.f32.mrb[0].mxu0
        %v5980 = vadd.f32 %v5463, %v5979
        %v5981 = vpop.f32.mrb[0].mxu0
        %v5982 = vpop.f32.mrb[0].mxu0
        %v5983 = vadd.f32 %v5463, %v5982
        %v5984 = vpop.f32.mrb[0].mxu0
        %5985 = vmatprep.mubr.bf16.mxu0 %v4161
        %5986 = vmatmul.mubr.bf16.gmra.mrb[0].mxu0 %v3993
        %v5987 = vpop.f32.mrb[0].mxu0
        %v5988 = vadd.f32 %v5463, %v5987
        %v5989 = vpop.f32.mrb[0].mxu0
        %v5990 = vpop.f32.mrb[0].mxu0
        %v5991 = vadd.f32 %v5463, %v5990
        %v5992 = vpop.f32.mrb[0].mxu0
        %5993 = vmatprep.mubr.bf16.mxu0 %v4173
        %5994 = vmatmul.mubr.bf16.gmra.mrb[0].mxu0 %v3994
        %v5995 = vpop.f32.mrb[0].mxu0
        %v5996 = vadd.f32 %v5463, %v5995
        %v5997 = vpop.f32.mrb[0].mxu0
        %v5998 = vpop.f32.mrb[0].mxu0
        %v5999 = vadd.f32 %v5463, %v5998
        %v6000 = vpop.f32.mrb[0].mxu0
        %6001 = vmatprep.mubr.bf16.mxu0 %v4185
        %6002 = vmatmul.mubr.bf16.gmra.mrb[0].mxu0 %v3995
        %v6003 = vpop.f32.mrb[0].mxu0
        %v6004 = vadd.f32 %v5463, %v6003
        %v6005 = vpop.f32.mrb[0].mxu0
        %v6006 = vpop.f32.mrb[0].mxu0
        %v6007 = vadd.f32 %v5463, %v6006
        %v6008 = vpop.f32.mrb[0].mxu0
        %6009 = vmatprep.mubr.bf16.mxu0 %v4197
        %6010 = vmatmul.mubr.bf16.gmra.mrb[0].mxu0 %v3996
        %v6011 = vpop.f32.mrb[0].mxu0
        %v6012 = vadd.f32 %v5463, %v6011
        %v6013 = vpop.f32.mrb[0].mxu0
        %v6014 = vpop.f32.mrb[0].mxu0
        %v6015 = vadd.f32 %v5463, %v6014
        %v6016 = vpop.f32.mrb[0].mxu0
        %6017 = vmatprep.mubr.bf16.mxu0 %v4209
        %6018 = vmatmul.mubr.bf16.gmra.mrb[0].mxu0 %v3997
        %v6019 = vpop.f32.mrb[0].mxu0
        %v6020 = vadd.f32 %v5463, %v6019
        %v6021 = vpop.f32.mrb[0].mxu0
        %v6022 = vpop.f32.mrb[0].mxu0
        %v6023 = vadd.f32 %v5463, %v6022
        %v6024 = vpop.f32.mrb[0].mxu0
        %6025 = vmatprep.mubr.bf16.mxu0 %v4221
        %6026 = vmatmul.mubr.bf16.gmra.mrb[0].mxu0 %v3998
        %v6027 = vpop.f32.mrb[0].mxu0
        %v6028 = vadd.f32 %v5463, %v6027
        %v6029 = vpop.f32.mrb[0].mxu0
        %v6030 = vpop.f32.mrb[0].mxu0
        %v6031 = vadd.f32 %v5463, %v6030
        %v6032 = vpop.f32.mrb[0].mxu0
        %6033 = vmatprep.mubr.bf16.mxu0 %v4233
        %6034 = vmatmul.mubr.bf16.gmra.mrb[0].mxu0 %v3999
        %v6035 = vpop.f32.mrb[0].mxu0
        %v6036 = vadd.f32 %v5463, %v6035
        %v6037 = vpop.f32.mrb[0].mxu0
        %v6038 = vpop.f32.mrb[0].mxu0
        %v6039 = vadd.f32 %v5463, %v6038
        %v6040 = vpop.f32.mrb[0].mxu0
        %6041 = vmatprep.mubr.bf16.mxu0 %v4245
        %6042 = vmatmul.mubr.bf16.gmra.mrb[0].mxu0 %v4000
        %v6043 = vpop.f32.mrb[0].mxu0
        %v6044 = vadd.f32 %v5463, %v6043
        %v6045 = vpop.f32.mrb[0].mxu0
        %v6046 = vpop.f32.mrb[0].mxu0
        %v6047 = vadd.f32 %v5463, %v6046
        %v6048 = vpop.f32.mrb[0].mxu0
        %6049 = vmatprep.mubr.bf16.mxu0 %v4257
        %6050 = vmatmul.mubr.bf16.gmra.mrb[0].mxu0 %v4001
        %v6051 = vpop.f32.mrb[0].mxu0
        %v6052 = vadd.f32 %v5463, %v6051
        %v6053 = vpop.f32.mrb[0].mxu0
        %v6054 = vpop.f32.mrb[0].mxu0
        %v6055 = vadd.f32 %v5463, %v6054
        %v6056 = vpop.f32.mrb[0].mxu0
        %6057 = vdwg.mxu0
        %6058 = vmatprep.subr.bf16.mxu0 0
        %6059 = vmatpush1.bf16.msra.mxu0 %v5769
        %6060 = vmatprep.subr.bf16.mxu0 0
        %6061 = vmatpush1.bf16.msra.mxu0 %v5770
        %6062 = vmatprep.subr.bf16.mxu0 0
        %6063 = vmatpush1.bf16.msra.mxu0 %v5771
        %6064 = vmatprep.subr.bf16.mxu0 0
        %6065 = vmatpush1.bf16.msra.mxu0 %v5772
        %6066 = vmatprep.subr.bf16.mxu0 0
        %6067 = vmatpush1.bf16.msra.mxu0 %v5773
        %6068 = vmatprep.subr.bf16.mxu0 0
        %6069 = vmatpush1.bf16.msra.mxu0 %v5774
        %6070 = vmatprep.subr.bf16.mxu0 0
        %6071 = vmatpush1.bf16.msra.mxu0 %v5775
        %6072 = vmatprep.subr.bf16.mxu0 0
        %6073 = vmatpush1.bf16.msra.mxu0 %v5776
        %6074 = vmatprep.subr.bf16.mxu0 0
        %6075 = vmatpush1.bf16.msra.mxu0 %v5777
        %6076 = vmatprep.subr.bf16.mxu0 0
        %6077 = vmatpush1.bf16.msra.mxu0 %v5778
        %6078 = vmatprep.subr.bf16.mxu0 0
        %6079 = vmatpush1.bf16.msra.mxu0 %v5779
        %6080 = vmatprep.subr.bf16.mxu0 0
        %6081 = vmatpush1.bf16.msra.mxu0 %v5780
        %6082 = vmatprep.subr.bf16.mxu0 0
        %6083 = vmatpush1.bf16.msra.mxu0 %v5781
        %6084 = vmatprep.subr.bf16.mxu0 0
        %6085 = vmatpush1.bf16.msra.mxu0 %v5782
        %6086 = vmatprep.subr.bf16.mxu0 0
        %6087 = vmatpush1.bf16.msra.mxu0 %v5783
        %6088 = vmatprep.subr.bf16.mxu0 0
        %6089 = vmatpush1.bf16.msra.mxu0 %v5784
        %6090 = vmatprep.mubr.bf16.mxu0 %v4450
        %6091 = vmatmul.mubr.bf16.gmra.mrb[0].mxu0 %v4324
        %v6092 = vpop.f32.mrb[0].mxu0
        %v6093 = vadd.f32 %v5932, %v6092
        %v6094 = vpop.f32.mrb[0].mxu0
        %v6095 = vpop.f32.mrb[0].mxu0
        %v6096 = vadd.f32 %v5935, %v6095
        %v6097 = vpop.f32.mrb[0].mxu0
        %6098 = vmatprep.mubr.bf16.mxu0 %v4451
        %6099 = vmatmul.mubr.bf16.gmra.mrb[0].mxu0 %v4327
        %v6100 = vpop.f32.mrb[0].mxu0
        %v6101 = vadd.f32 %v5940, %v6100
        %v6102 = vpop.f32.mrb[0].mxu0
        %v6103 = vpop.f32.mrb[0].mxu0
        %v6104 = vadd.f32 %v5943, %v6103
        %v6105 = vpop.f32.mrb[0].mxu0
        %6106 = vmatprep.mubr.bf16.mxu0 %v4452
        %6107 = vmatmul.mubr.bf16.gmra.mrb[0].mxu0 %v4330
        %v6108 = vpop.f32.mrb[0].mxu0
        %v6109 = vadd.f32 %v5948, %v6108
        %v6110 = vpop.f32.mrb[0].mxu0
        %v6111 = vpop.f32.mrb[0].mxu0
        %v6112 = vadd.f32 %v5951, %v6111
        %v6113 = vpop.f32.mrb[0].mxu0
        %6114 = vmatprep.mubr.bf16.mxu0 %v4453
        %6115 = vmatmul.mubr.bf16.gmra.mrb[0].mxu0 %v4333
        %v6116 = vpop.f32.mrb[0].mxu0
        %v6117 = vadd.f32 %v5956, %v6116
        %v6118 = vpop.f32.mrb[0].mxu0
        %v6119 = vpop.f32.mrb[0].mxu0
        %v6120 = vadd.f32 %v5959, %v6119
        %v6121 = vpop.f32.mrb[0].mxu0
        %6122 = vmatprep.mubr.bf16.mxu0 %v4454
        %6123 = vmatmul.mubr.bf16.gmra.mrb[0].mxu0 %v4336
        %v6124 = vpop.f32.mrb[0].mxu0
        %v6125 = vadd.f32 %v5964, %v6124
        %v6126 = vpop.f32.mrb[0].mxu0
        %v6127 = vpop.f32.mrb[0].mxu0
        %v6128 = vadd.f32 %v5967, %v6127
        %v6129 = vpop.f32.mrb[0].mxu0
        %6130 = vmatprep.mubr.bf16.mxu0 %v4455
        %6131 = vmatmul.mubr.bf16.gmra.mrb[0].mxu0 %v4339
        %v6132 = vpop.f32.mrb[0].mxu0
        %v6133 = vadd.f32 %v5972, %v6132
        %v6134 = vpop.f32.mrb[0].mxu0
        %v6135 = vpop.f32.mrb[0].mxu0
        %v6136 = vadd.f32 %v5975, %v6135
        %v6137 = vpop.f32.mrb[0].mxu0
        %6138 = vmatprep.mubr.bf16.mxu0 %v4456
        %6139 = vmatmul.mubr.bf16.gmra.mrb[0].mxu0 %v4342
        %v6140 = vpop.f32.mrb[0].mxu0
        %v6141 = vadd.f32 %v5980, %v6140
        %v6142 = vpop.f32.mrb[0].mxu0
        %v6143 = vpop.f32.mrb[0].mxu0
        %v6144 = vadd.f32 %v5983, %v6143
        %v6145 = vpop.f32.mrb[0].mxu0
        %6146 = vmatprep.mubr.bf16.mxu0 %v4457
        %6147 = vmatmul.mubr.bf16.gmra.mrb[0].mxu0 %v4345
        %v6148 = vpop.f32.mrb[0].mxu0
        %v6149 = vadd.f32 %v5988, %v6148
        %v6150 = vpop.f32.mrb[0].mxu0
        %v6151 = vpop.f32.mrb[0].mxu0
        %v6152 = vadd.f32 %v5991, %v6151
        %v6153 = vpop.f32.mrb[0].mxu0
        %6154 = vmatprep.mubr.bf16.mxu0 %v4458
        %6155 = vmatmul.mubr.bf16.gmra.mrb[0].mxu0 %v4348
        %v6156 = vpop.f32.mrb[0].mxu0
        %v6157 = vadd.f32 %v5996, %v6156
        %v6158 = vpop.f32.mrb[0].mxu0
        %v6159 = vpop.f32.mrb[0].mxu0
        %v6160 = vadd.f32 %v5999, %v6159
        %v6161 = vpop.f32.mrb[0].mxu0
        %6162 = vmatprep.mubr.bf16.mxu0 %v4459
        %6163 = vmatmul.mubr.bf16.gmra.mrb[0].mxu0 %v4351
        %v6164 = vpop.f32.mrb[0].mxu0
        %v6165 = vadd.f32 %v6004, %v6164
        %v6166 = vpop.f32.mrb[0].mxu0
        %v6167 = vpop.f32.mrb[0].mxu0
        %v6168 = vadd.f32 %v6007, %v6167
        %v6169 = vpop.f32.mrb[0].mxu0
        %6170 = vmatprep.mubr.bf16.mxu0 %v4460
        %6171 = vmatmul.mubr.bf16.gmra.mrb[0].mxu0 %v4354
        %v6172 = vpop.f32.mrb[0].mxu0
        %v6173 = vadd.f32 %v6012, %v6172
        %v6174 = vpop.f32.mrb[0].mxu0
        %v6175 = vpop.f32.mrb[0].mxu0
        %v6176 = vadd.f32 %v6015, %v6175
        %v6177 = vpop.f32.mrb[0].mxu0
        %6178 = vmatprep.mubr.bf16.mxu0 %v4461
        %6179 = vmatmul.mubr.bf16.gmra.mrb[0].mxu0 %v4357
        %v6180 = vpop.f32.mrb[0].mxu0
        %v6181 = vadd.f32 %v6020, %v6180
        %v6182 = vpop.f32.mrb[0].mxu0
        %v6183 = vpop.f32.mrb[0].mxu0
        %v6184 = vadd.f32 %v6023, %v6183
        %v6185 = vpop.f32.mrb[0].mxu0
        %6186 = vmatprep.mubr.bf16.mxu0 %v4462
        %6187 = vmatmul.mubr.bf16.gmra.mrb[0].mxu0 %v4360
        %v6188 = vpop.f32.mrb[0].mxu0
        %v6189 = vadd.f32 %v6028, %v6188
        %v6190 = vpop.f32.mrb[0].mxu0
        %v6191 = vpop.f32.mrb[0].mxu0
        %v6192 = vadd.f32 %v6031, %v6191
        %v6193 = vpop.f32.mrb[0].mxu0
        %6194 = vmatprep.mubr.bf16.mxu0 %v4463
        %6195 = vmatmul.mubr.bf16.gmra.mrb[0].mxu0 %v4363
        %v6196 = vpop.f32.mrb[0].mxu0
        %v6197 = vadd.f32 %v6036, %v6196
        %v6198 = vpop.f32.mrb[0].mxu0
        %v6199 = vpop.f32.mrb[0].mxu0
        %v6200 = vadd.f32 %v6039, %v6199
        %v6201 = vpop.f32.mrb[0].mxu0
        %6202 = vmatprep.mubr.bf16.mxu0 %v4464
        %6203 = vmatmul.mubr.bf16.gmra.mrb[0].mxu0 %v4366
        %v6204 = vpop.f32.mrb[0].mxu0
        %v6205 = vadd.f32 %v6044, %v6204
        %v6206 = vpop.f32.mrb[0].mxu0
        %v6207 = vpop.f32.mrb[0].mxu0
        %v6208 = vadd.f32 %v6047, %v6207
        %v6209 = vpop.f32.mrb[0].mxu0
        %6210 = vmatprep.mubr.bf16.mxu0 %v4465
        %6211 = vmatmul.mubr.bf16.gmra.mrb[0].mxu0 %v4369
        %v6212 = vpop.f32.mrb[0].mxu0
        %v6213 = vadd.f32 %v6052, %v6212
        %v6214 = vpop.f32.mrb[0].mxu0
        %v6215 = vpop.f32.mrb[0].mxu0
        %v6216 = vadd.f32 %v6055, %v6215
        %v6217 = vpop.f32.mrb[0].mxu0
        %6218 = vdwg.mxu0
        %6219 = vmatprep.subr.bf16.mxu0 0
        %6220 = vmatpush1.bf16.msra.mxu0 %v5785
        %6221 = vmatprep.subr.bf16.mxu0 0
        %6222 = vmatpush1.bf16.msra.mxu0 %v5786
        %6223 = vmatprep.subr.bf16.mxu0 0
        %6224 = vmatpush1.bf16.msra.mxu0 %v5787
        %6225 = vmatprep.subr.bf16.mxu0 0
        %6226 = vmatpush1.bf16.msra.mxu0 %v5788
        %6227 = vmatprep.subr.bf16.mxu0 0
        %6228 = vmatpush1.bf16.msra.mxu0 %v5789
        %6229 = vmatprep.subr.bf16.mxu0 0
        %6230 = vmatpush1.bf16.msra.mxu0 %v5790
        %6231 = vmatprep.subr.bf16.mxu0 0
        %6232 = vmatpush1.bf16.msra.mxu0 %v5791
        %6233 = vmatprep.subr.bf16.mxu0 0
        %6234 = vmatpush1.bf16.msra.mxu0 %v5792
        %6235 = vmatprep.subr.bf16.mxu0 0
        %6236 = vmatpush1.bf16.msra.mxu0 %v5793
        %6237 = vmatprep.subr.bf16.mxu0 0
        %6238 = vmatpush1.bf16.msra.mxu0 %v5794
        %6239 = vmatprep.subr.bf16.mxu0 0
        %6240 = vmatpush1.bf16.msra.mxu0 %v5795
        %6241 = vmatprep.subr.bf16.mxu0 0
        %6242 = vmatpush1.bf16.msra.mxu0 %v5796
        %6243 = vmatprep.subr.bf16.mxu0 0
        %6244 = vmatpush1.bf16.msra.mxu0 %v5797
        %6245 = vmatprep.subr.bf16.mxu0 0
        %6246 = vmatpush1.bf16.msra.mxu0 %v5798
        %6247 = vmatprep.subr.bf16.mxu0 0
        %6248 = vmatpush1.bf16.msra.mxu0 %v5799
        %6249 = vmatprep.subr.bf16.mxu0 0
        %6250 = vmatpush1.bf16.msra.mxu0 %v5800
        %6251 = vmatprep.mubr.bf16.mxu0 %v4788
        %6252 = vmatmul.mubr.bf16.gmra.mrb[0].mxu0 %v4541
        %v6253 = vpop.f32.mrb[0].mxu0
        %v6254 = vadd.f32 %v6093, %v6253
        %v6255 = vpop.f32.mrb[0].mxu0
        %v6256 = vpop.f32.mrb[0].mxu0
        %v6257 = vadd.f32 %v6096, %v6256
        %v6258 = vpop.f32.mrb[0].mxu0
        %6259 = vmatprep.mubr.bf16.mxu0 %v4791
        %6260 = vmatmul.mubr.bf16.gmra.mrb[0].mxu0 %v4553
        %v6261 = vpop.f32.mrb[0].mxu0
        %v6262 = vadd.f32 %v6101, %v6261
        %v6263 = vpop.f32.mrb[0].mxu0
        %v6264 = vpop.f32.mrb[0].mxu0
        %v6265 = vadd.f32 %v6104, %v6264
        %v6266 = vpop.f32.mrb[0].mxu0
        %6267 = vmatprep.mubr.bf16.mxu0 %v4794
        %6268 = vmatmul.mubr.bf16.gmra.mrb[0].mxu0 %v4565
        %v6269 = vpop.f32.mrb[0].mxu0
        %v6270 = vadd.f32 %v6109, %v6269
        %v6271 = vpop.f32.mrb[0].mxu0
        %v6272 = vpop.f32.mrb[0].mxu0
        %v6273 = vadd.f32 %v6112, %v6272
        %v6274 = vpop.f32.mrb[0].mxu0
        %6275 = vmatprep.mubr.bf16.mxu0 %v4797
        %6276 = vmatmul.mubr.bf16.gmra.mrb[0].mxu0 %v4577
        %v6277 = vpop.f32.mrb[0].mxu0
        %v6278 = vadd.f32 %v6117, %v6277
        %v6279 = vpop.f32.mrb[0].mxu0
        %v6280 = vpop.f32.mrb[0].mxu0
        %v6281 = vadd.f32 %v6120, %v6280
        %v6282 = vpop.f32.mrb[0].mxu0
        %6283 = vmatprep.mubr.bf16.mxu0 %v4800
        %6284 = vmatmul.mubr.bf16.gmra.mrb[0].mxu0 %v4589
        %v6285 = vpop.f32.mrb[0].mxu0
        %v6286 = vadd.f32 %v6125, %v6285
        %v6287 = vpop.f32.mrb[0].mxu0
        %v6288 = vpop.f32.mrb[0].mxu0
        %v6289 = vadd.f32 %v6128, %v6288
        %v6290 = vpop.f32.mrb[0].mxu0
        %6291 = vmatprep.mubr.bf16.mxu0 %v4803
        %6292 = vmatmul.mubr.bf16.gmra.mrb[0].mxu0 %v4601
        %v6293 = vpop.f32.mrb[0].mxu0
        %v6294 = vadd.f32 %v6133, %v6293
        %v6295 = vpop.f32.mrb[0].mxu0
        %v6296 = vpop.f32.mrb[0].mxu0
        %v6297 = vadd.f32 %v6136, %v6296
        %v6298 = vpop.f32.mrb[0].mxu0
        %6299 = vmatprep.mubr.bf16.mxu0 %v4806
        %6300 = vmatmul.mubr.bf16.gmra.mrb[0].mxu0 %v4613
        %v6301 = vpop.f32.mrb[0].mxu0
        %v6302 = vadd.f32 %v6141, %v6301
        %v6303 = vpop.f32.mrb[0].mxu0
        %v6304 = vpop.f32.mrb[0].mxu0
        %v6305 = vadd.f32 %v6144, %v6304
        %v6306 = vpop.f32.mrb[0].mxu0
        %6307 = vmatprep.mubr.bf16.mxu0 %v4809
        %6308 = vmatmul.mubr.bf16.gmra.mrb[0].mxu0 %v4625
        %v6309 = vpop.f32.mrb[0].mxu0
        %v6310 = vadd.f32 %v6149, %v6309
        %v6311 = vpop.f32.mrb[0].mxu0
        %v6312 = vpop.f32.mrb[0].mxu0
        %v6313 = vadd.f32 %v6152, %v6312
        %v6314 = vpop.f32.mrb[0].mxu0
        %6315 = vmatprep.mubr.bf16.mxu0 %v4812
        %6316 = vmatmul.mubr.bf16.gmra.mrb[0].mxu0 %v4637
        %v6317 = vpop.f32.mrb[0].mxu0
        %v6318 = vadd.f32 %v6157, %v6317
        %v6319 = vpop.f32.mrb[0].mxu0
        %v6320 = vpop.f32.mrb[0].mxu0
        %v6321 = vadd.f32 %v6160, %v6320
        %v6322 = vpop.f32.mrb[0].mxu0
        %6323 = vmatprep.mubr.bf16.mxu0 %v4815
        %6324 = vmatmul.mubr.bf16.gmra.mrb[0].mxu0 %v4649
        %v6325 = vpop.f32.mrb[0].mxu0
        %v6326 = vadd.f32 %v6165, %v6325
        %v6327 = vpop.f32.mrb[0].mxu0
        %v6328 = vpop.f32.mrb[0].mxu0
        %v6329 = vadd.f32 %v6168, %v6328
        %v6330 = vpop.f32.mrb[0].mxu0
        %6331 = vmatprep.mubr.bf16.mxu0 %v4818
        %6332 = vmatmul.mubr.bf16.gmra.mrb[0].mxu0 %v4661
        %v6333 = vpop.f32.mrb[0].mxu0
        %v6334 = vadd.f32 %v6173, %v6333
        %v6335 = vpop.f32.mrb[0].mxu0
        %v6336 = vpop.f32.mrb[0].mxu0
        %v6337 = vadd.f32 %v6176, %v6336
        %v6338 = vpop.f32.mrb[0].mxu0
        %6339 = vmatprep.mubr.bf16.mxu0 %v4821
        %6340 = vmatmul.mubr.bf16.gmra.mrb[0].mxu0 %v4673
        %v6341 = vpop.f32.mrb[0].mxu0
        %v6342 = vadd.f32 %v6181, %v6341
        %v6343 = vpop.f32.mrb[0].mxu0
        %v6344 = vpop.f32.mrb[0].mxu0
        %v6345 = vadd.f32 %v6184, %v6344
        %v6346 = vpop.f32.mrb[0].mxu0
        %6347 = vmatprep.mubr.bf16.mxu0 %v4824
        %6348 = vmatmul.mubr.bf16.gmra.mrb[0].mxu0 %v4685
        %v6349 = vpop.f32.mrb[0].mxu0
        %v6350 = vadd.f32 %v6189, %v6349
        %v6351 = vpop.f32.mrb[0].mxu0
        %v6352 = vpop.f32.mrb[0].mxu0
        %v6353 = vadd.f32 %v6192, %v6352
        %v6354 = vpop.f32.mrb[0].mxu0
        %6355 = vmatprep.mubr.bf16.mxu0 %v4827
        %6356 = vmatmul.mubr.bf16.gmra.mrb[0].mxu0 %v4697
        %v6357 = vpop.f32.mrb[0].mxu0
        %v6358 = vadd.f32 %v6197, %v6357
        %v6359 = vpop.f32.mrb[0].mxu0
        %v6360 = vpop.f32.mrb[0].mxu0
        %v6361 = vadd.f32 %v6200, %v6360
        %v6362 = vpop.f32.mrb[0].mxu0
        %6363 = vmatprep.mubr.bf16.mxu0 %v4830
        %6364 = vmatmul.mubr.bf16.gmra.mrb[0].mxu0 %v4709
        %v6365 = vpop.f32.mrb[0].mxu0
        %v6366 = vadd.f32 %v6205, %v6365
        %v6367 = vpop.f32.mrb[0].mxu0
        %v6368 = vpop.f32.mrb[0].mxu0
        %v6369 = vadd.f32 %v6208, %v6368
        %v6370 = vpop.f32.mrb[0].mxu0
        %6371 = vmatprep.mubr.bf16.mxu0 %v4833
        %6372 = vmatmul.mubr.bf16.gmra.mrb[0].mxu0 %v4721
        %v6373 = vpop.f32.mrb[0].mxu0
        %v6374 = vadd.f32 %v6213, %v6373
        %v6375 = vpop.f32.mrb[0].mxu0
        %v6376 = vpop.f32.mrb[0].mxu0
        %v6377 = vadd.f32 %v6216, %v6376
        %v6378 = vpop.f32.mrb[0].mxu0
        %6379 = vdwg.mxu0
        %6380 = vmatprep.subr.bf16.mxu0 0
        %6381 = vmatpush1.bf16.msra.mxu0 %v5801
        %6382 = vmatprep.subr.bf16.mxu0 0
        %6383 = vmatpush1.bf16.msra.mxu0 %v5802
        %6384 = vmatprep.subr.bf16.mxu0 0
        %6385 = vmatpush1.bf16.msra.mxu0 %v5803
        %6386 = vmatprep.subr.bf16.mxu0 0
        %6387 = vmatpush1.bf16.msra.mxu0 %v5804
        %6388 = vmatprep.subr.bf16.mxu0 0
        %6389 = vmatpush1.bf16.msra.mxu0 %v5805
        %6390 = vmatprep.subr.bf16.mxu0 0
        %6391 = vmatpush1.bf16.msra.mxu0 %v5806
        %6392 = vmatprep.subr.bf16.mxu0 0
        %6393 = vmatpush1.bf16.msra.mxu0 %v5807
        %6394 = vmatprep.subr.bf16.mxu0 0
        %6395 = vmatpush1.bf16.msra.mxu0 %v5808
        %6396 = vmatprep.subr.bf16.mxu0 0
        %6397 = vmatpush1.bf16.msra.mxu0 %v5809
        %6398 = vmatprep.subr.bf16.mxu0 0
        %6399 = vmatpush1.bf16.msra.mxu0 %v5810
        %6400 = vmatprep.subr.bf16.mxu0 0
        %6401 = vmatpush1.bf16.msra.mxu0 %v5811
        %6402 = vmatprep.subr.bf16.mxu0 0
        %6403 = vmatpush1.bf16.msra.mxu0 %v5812
        %6404 = vmatprep.subr.bf16.mxu0 0
        %6405 = vmatpush1.bf16.msra.mxu0 %v5813
        %6406 = vmatprep.subr.bf16.mxu0 0
        %6407 = vmatpush1.bf16.msra.mxu0 %v5814
        %6408 = vmatprep.subr.bf16.mxu0 0
        %6409 = vmatpush1.bf16.msra.mxu0 %v5815
        %6410 = vmatprep.subr.bf16.mxu0 0
        %6411 = vmatpush1.bf16.msra.mxu0 %v5816
        %6412 = vmatprep.mubr.bf16.mxu0 %v5005
        %6413 = vmatmul.mubr.bf16.gmra.mrb[0].mxu0 %v4914
        %v6414 = vpop.f32.mrb[0].mxu0
        %v6415 = vadd.f32 %v6254, %v6414
        %v6416 = vpop.f32.mrb[0].mxu0
        %v6417 = vpop.f32.mrb[0].mxu0
        %v6418 = vadd.f32 %v6257, %v6417
        %v6419 = vpop.f32.mrb[0].mxu0
        %6420 = vmatprep.mubr.bf16.mxu0 %v5017
        %6421 = vmatmul.mubr.bf16.gmra.mrb[0].mxu0 %v4915
        %v6422 = vpop.f32.mrb[0].mxu0
        %v6423 = vadd.f32 %v6262, %v6422
        %v6424 = vpop.f32.mrb[0].mxu0
        %v6425 = vpop.f32.mrb[0].mxu0
        %v6426 = vadd.f32 %v6265, %v6425
        %v6427 = vpop.f32.mrb[0].mxu0
        %6428 = vmatprep.mubr.bf16.mxu0 %v5029
        %6429 = vmatmul.mubr.bf16.gmra.mrb[0].mxu0 %v4916
        %v6430 = vpop.f32.mrb[0].mxu0
        %v6431 = vadd.f32 %v6270, %v6430
        %v6432 = vpop.f32.mrb[0].mxu0
        %v6433 = vpop.f32.mrb[0].mxu0
        %v6434 = vadd.f32 %v6273, %v6433
        %v6435 = vpop.f32.mrb[0].mxu0
        %6436 = vmatprep.mubr.bf16.mxu0 %v5041
        %6437 = vmatmul.mubr.bf16.gmra.mrb[0].mxu0 %v4917
        %v6438 = vpop.f32.mrb[0].mxu0
        %v6439 = vadd.f32 %v6278, %v6438
        %v6440 = vpop.f32.mrb[0].mxu0
        %v6441 = vpop.f32.mrb[0].mxu0
        %v6442 = vadd.f32 %v6281, %v6441
        %v6443 = vpop.f32.mrb[0].mxu0
        %6444 = vmatprep.mubr.bf16.mxu0 %v5053
        %6445 = vmatmul.mubr.bf16.gmra.mrb[0].mxu0 %v4918
        %v6446 = vpop.f32.mrb[0].mxu0
        %v6447 = vadd.f32 %v6286, %v6446
        %v6448 = vpop.f32.mrb[0].mxu0
        %v6449 = vpop.f32.mrb[0].mxu0
        %v6450 = vadd.f32 %v6289, %v6449
        %v6451 = vpop.f32.mrb[0].mxu0
        %6452 = vmatprep.mubr.bf16.mxu0 %v5065
        %6453 = vmatmul.mubr.bf16.gmra.mrb[0].mxu0 %v4919
        %v6454 = vpop.f32.mrb[0].mxu0
        %v6455 = vadd.f32 %v6294, %v6454
        %v6456 = vpop.f32.mrb[0].mxu0
        %v6457 = vpop.f32.mrb[0].mxu0
        %v6458 = vadd.f32 %v6297, %v6457
        %v6459 = vpop.f32.mrb[0].mxu0
        %6460 = vmatprep.mubr.bf16.mxu0 %v5077
        %6461 = vmatmul.mubr.bf16.gmra.mrb[0].mxu0 %v4920
        %v6462 = vpop.f32.mrb[0].mxu0
        %v6463 = vadd.f32 %v6302, %v6462
        %v6464 = vpop.f32.mrb[0].mxu0
        %v6465 = vpop.f32.mrb[0].mxu0
        %v6466 = vadd.f32 %v6305, %v6465
        %v6467 = vpop.f32.mrb[0].mxu0
        %6468 = vmatprep.mubr.bf16.mxu0 %v5089
        %6469 = vmatmul.mubr.bf16.gmra.mrb[0].mxu0 %v4921
        %v6470 = vpop.f32.mrb[0].mxu0
        %v6471 = vadd.f32 %v6310, %v6470
        %v6472 = vpop.f32.mrb[0].mxu0
        %v6473 = vpop.f32.mrb[0].mxu0
        %v6474 = vadd.f32 %v6313, %v6473
        %v6475 = vpop.f32.mrb[0].mxu0
        %6476 = vmatprep.mubr.bf16.mxu0 %v5101
        %6477 = vmatmul.mubr.bf16.gmra.mrb[0].mxu0 %v4922
        %v6478 = vpop.f32.mrb[0].mxu0
        %v6479 = vadd.f32 %v6318, %v6478
        %v6480 = vpop.f32.mrb[0].mxu0
        %v6481 = vpop.f32.mrb[0].mxu0
        %v6482 = vadd.f32 %v6321, %v6481
        %v6483 = vpop.f32.mrb[0].mxu0
        %6484 = vmatprep.mubr.bf16.mxu0 %v5113
        %6485 = vmatmul.mubr.bf16.gmra.mrb[0].mxu0 %v4923
        %v6486 = vpop.f32.mrb[0].mxu0
        %v6487 = vadd.f32 %v6326, %v6486
        %v6488 = vpop.f32.mrb[0].mxu0
        %v6489 = vpop.f32.mrb[0].mxu0
        %v6490 = vadd.f32 %v6329, %v6489
        %v6491 = vpop.f32.mrb[0].mxu0
        %6492 = vmatprep.mubr.bf16.mxu0 %v5125
        %6493 = vmatmul.mubr.bf16.gmra.mrb[0].mxu0 %v4924
        %v6494 = vpop.f32.mrb[0].mxu0
        %v6495 = vadd.f32 %v6334, %v6494
        %v6496 = vpop.f32.mrb[0].mxu0
        %v6497 = vpop.f32.mrb[0].mxu0
        %v6498 = vadd.f32 %v6337, %v6497
        %v6499 = vpop.f32.mrb[0].mxu0
        %6500 = vmatprep.mubr.bf16.mxu0 %v5137
        %6501 = vmatmul.mubr.bf16.gmra.mrb[0].mxu0 %v4925
        %v6502 = vpop.f32.mrb[0].mxu0
        %v6503 = vadd.f32 %v6342, %v6502
        %v6504 = vpop.f32.mrb[0].mxu0
        %v6505 = vpop.f32.mrb[0].mxu0
        %v6506 = vadd.f32 %v6345, %v6505
        %v6507 = vpop.f32.mrb[0].mxu0
        %6508 = vmatprep.mubr.bf16.mxu0 %v5149
        %6509 = vmatmul.mubr.bf16.gmra.mrb[0].mxu0 %v4926
        %v6510 = vpop.f32.mrb[0].mxu0
        %v6511 = vadd.f32 %v6350, %v6510
        %v6512 = vpop.f32.mrb[0].mxu0
        %v6513 = vpop.f32.mrb[0].mxu0
        %v6514 = vadd.f32 %v6353, %v6513
        %v6515 = vpop.f32.mrb[0].mxu0
        %6516 = vmatprep.mubr.bf16.mxu0 %v5161
        %6517 = vmatmul.mubr.bf16.gmra.mrb[0].mxu0 %v4927
        %v6518 = vpop.f32.mrb[0].mxu0
        %v6519 = vadd.f32 %v6358, %v6518
        %v6520 = vpop.f32.mrb[0].mxu0
        %v6521 = vpop.f32.mrb[0].mxu0
        %v6522 = vadd.f32 %v6361, %v6521
        %v6523 = vpop.f32.mrb[0].mxu0
        %6524 = vmatprep.mubr.bf16.mxu0 %v5173
        %6525 = vmatmul.mubr.bf16.gmra.mrb[0].mxu0 %v4928
        %v6526 = vpop.f32.mrb[0].mxu0
        %v6527 = vadd.f32 %v6366, %v6526
        %v6528 = vpop.f32.mrb[0].mxu0
        %v6529 = vpop.f32.mrb[0].mxu0
        %v6530 = vadd.f32 %v6369, %v6529
        %v6531 = vpop.f32.mrb[0].mxu0
        %6532 = vmatprep.mubr.bf16.mxu0 %v5185
        %6533 = vmatmul.mubr.bf16.gmra.mrb[0].mxu0 %v4929
        %v6534 = vpop.f32.mrb[0].mxu0
        %v6535 = vadd.f32 %v6374, %v6534
        %v6536 = vpop.f32.mrb[0].mxu0
        %v6537 = vpop.f32.mrb[0].mxu0
        %v6538 = vadd.f32 %v6377, %v6537
        %v6539 = vpop.f32.mrb[0].mxu0
        %6540 = vdwg.mxu0
        %6541 = vmatprep.subr.bf16.mxu0 0
        %6542 = vmatpush1.bf16.msra.mxu0 %v5817
        %6543 = vmatprep.subr.bf16.mxu0 0
        %6544 = vmatpush1.bf16.msra.mxu0 %v5818
        %6545 = vmatprep.subr.bf16.mxu0 0
        %6546 = vmatpush1.bf16.msra.mxu0 %v5819
        %6547 = vmatprep.subr.bf16.mxu0 0
        %6548 = vmatpush1.bf16.msra.mxu0 %v5820
        %6549 = vmatprep.subr.bf16.mxu0 0
        %6550 = vmatpush1.bf16.msra.mxu0 %v5821
        %6551 = vmatprep.subr.bf16.mxu0 0
        %6552 = vmatpush1.bf16.msra.mxu0 %v5822
        %6553 = vmatprep.subr.bf16.mxu0 0
        %6554 = vmatpush1.bf16.msra.mxu0 %v5823
        %6555 = vmatprep.subr.bf16.mxu0 0
        %6556 = vmatpush1.bf16.msra.mxu0 %v5824
        %6557 = vmatprep.subr.bf16.mxu0 0
        %6558 = vmatpush1.bf16.msra.mxu0 0
        %6559 = vmatprep.subr.bf16.mxu0 0
        %6560 = vmatpush1.bf16.msra.mxu0 0
        %6561 = vmatprep.subr.bf16.mxu0 0
        %6562 = vmatpush1.bf16.msra.mxu0 0
        %6563 = vmatprep.subr.bf16.mxu0 0
        %6564 = vmatpush1.bf16.msra.mxu0 0
        %6565 = vmatprep.subr.bf16.mxu0 0
        %6566 = vmatpush1.bf16.msra.mxu0 0
        %6567 = vmatprep.subr.bf16.mxu0 0
        %6568 = vmatpush1.bf16.msra.mxu0 0
        %6569 = vmatprep.subr.bf16.mxu0 0
        %6570 = vmatpush1.bf16.msra.mxu0 0
        %6571 = vmatprep.subr.bf16.mxu0 0
        %6572 = vmatpush1.bf16.msra.mxu0 0
        %6573 = vmatprep.mubr.bf16.mxu0 0
        %6574 = vmatmul.mubr.bf16.gmra.mrb[0].mxu0 %v5252
        %v6575 = vpop.f32.mrb[0].mxu0
        %v6576 = vadd.f32 %v6415, %v6575
        %v6577 = vpop.f32.mrb[0].mxu0
        %v6578 = vpop.f32.mrb[0].mxu0
        %v6579 = vadd.f32 %v6418, %v6578
        %v6580 = vpop.f32.mrb[0].mxu0
        %6581 = vmatprep.mubr.bf16.mxu0 0
        %6582 = vmatmul.mubr.bf16.gmra.mrb[0].mxu0 %v5255
        %v6583 = vpop.f32.mrb[0].mxu0
        %v6584 = vadd.f32 %v6423, %v6583
        %v6585 = vpop.f32.mrb[0].mxu0
        %v6586 = vpop.f32.mrb[0].mxu0
        %v6587 = vadd.f32 %v6426, %v6586
        %v6588 = vpop.f32.mrb[0].mxu0
        %6589 = vmatprep.mubr.bf16.mxu0 0
        %6590 = vmatmul.mubr.bf16.gmra.mrb[0].mxu0 %v5258
        %v6591 = vpop.f32.mrb[0].mxu0
        %v6592 = vadd.f32 %v6431, %v6591
        %v6593 = vpop.f32.mrb[0].mxu0
        %v6594 = vpop.f32.mrb[0].mxu0
        %v6595 = vadd.f32 %v6434, %v6594
        %v6596 = vpop.f32.mrb[0].mxu0
        %6597 = vmatprep.mubr.bf16.mxu0 0
        %6598 = vmatmul.mubr.bf16.gmra.mrb[0].mxu0 %v5261
        %v6599 = vpop.f32.mrb[0].mxu0
        %v6600 = vadd.f32 %v6439, %v6599
        %v6601 = vpop.f32.mrb[0].mxu0
        %v6602 = vpop.f32.mrb[0].mxu0
        %v6603 = vadd.f32 %v6442, %v6602
        %v6604 = vpop.f32.mrb[0].mxu0
        %6605 = vmatprep.mubr.bf16.mxu0 0
        %6606 = vmatmul.mubr.bf16.gmra.mrb[0].mxu0 %v5264
        %v6607 = vpop.f32.mrb[0].mxu0
        %v6608 = vadd.f32 %v6447, %v6607
        %v6609 = vpop.f32.mrb[0].mxu0
        %v6610 = vpop.f32.mrb[0].mxu0
        %v6611 = vadd.f32 %v6450, %v6610
        %v6612 = vpop.f32.mrb[0].mxu0
        %6613 = vmatprep.mubr.bf16.mxu0 0
        %6614 = vmatmul.mubr.bf16.gmra.mrb[0].mxu0 %v5267
        %v6615 = vpop.f32.mrb[0].mxu0
        %v6616 = vadd.f32 %v6455, %v6615
        %v6617 = vpop.f32.mrb[0].mxu0
        %v6618 = vpop.f32.mrb[0].mxu0
        %v6619 = vadd.f32 %v6458, %v6618
        %v6620 = vpop.f32.mrb[0].mxu0
        %6621 = vmatprep.mubr.bf16.mxu0 0
        %6622 = vmatmul.mubr.bf16.gmra.mrb[0].mxu0 %v5270
        %v6623 = vpop.f32.mrb[0].mxu0
        %v6624 = vadd.f32 %v6463, %v6623
        %v6625 = vpop.f32.mrb[0].mxu0
        %v6626 = vpop.f32.mrb[0].mxu0
        %v6627 = vadd.f32 %v6466, %v6626
        %v6628 = vpop.f32.mrb[0].mxu0
        %6629 = vmatprep.mubr.bf16.mxu0 0
        %6630 = vmatmul.mubr.bf16.gmra.mrb[0].mxu0 %v5273
        %v6631 = vpop.f32.mrb[0].mxu0
        %v6632 = vadd.f32 %v6471, %v6631
        %v6633 = vpop.f32.mrb[0].mxu0
        %v6634 = vpop.f32.mrb[0].mxu0
        %v6635 = vadd.f32 %v6474, %v6634
        %v6636 = vpop.f32.mrb[0].mxu0
        %6637 = vmatprep.mubr.bf16.mxu0 0
        %6638 = vmatmul.mubr.bf16.gmra.mrb[0].mxu0 %v5276
        %v6639 = vpop.f32.mrb[0].mxu0
        %v6640 = vadd.f32 %v6479, %v6639
        %v6641 = vpop.f32.mrb[0].mxu0
        %v6642 = vpop.f32.mrb[0].mxu0
        %v6643 = vadd.f32 %v6482, %v6642
        %v6644 = vpop.f32.mrb[0].mxu0
        %6645 = vmatprep.mubr.bf16.mxu0 0
        %6646 = vmatmul.mubr.bf16.gmra.mrb[0].mxu0 %v5279
        %v6647 = vpop.f32.mrb[0].mxu0
        %v6648 = vadd.f32 %v6487, %v6647
        %v6649 = vpop.f32.mrb[0].mxu0
        %v6650 = vpop.f32.mrb[0].mxu0
        %v6651 = vadd.f32 %v6490, %v6650
        %v6652 = vpop.f32.mrb[0].mxu0
        %6653 = vmatprep.mubr.bf16.mxu0 0
        %6654 = vmatmul.mubr.bf16.gmra.mrb[0].mxu0 %v5282
        %v6655 = vpop.f32.mrb[0].mxu0
        %v6656 = vadd.f32 %v6495, %v6655
        %v6657 = vpop.f32.mrb[0].mxu0
        %v6658 = vpop.f32.mrb[0].mxu0
        %v6659 = vadd.f32 %v6498, %v6658
        %v6660 = vpop.f32.mrb[0].mxu0
        %6661 = vmatprep.mubr.bf16.mxu0 0
        %6662 = vmatmul.mubr.bf16.gmra.mrb[0].mxu0 %v5285
        %v6663 = vpop.f32.mrb[0].mxu0
        %v6664 = vadd.f32 %v6503, %v6663
        %v6665 = vpop.f32.mrb[0].mxu0
        %v6666 = vpop.f32.mrb[0].mxu0
        %v6667 = vadd.f32 %v6506, %v6666
        %v6668 = vpop.f32.mrb[0].mxu0
        %6669 = vmatprep.mubr.bf16.mxu0 0
        %6670 = vmatmul.mubr.bf16.gmra.mrb[0].mxu0 %v5288
        %v6671 = vpop.f32.mrb[0].mxu0
        %v6672 = vadd.f32 %v6511, %v6671
        %v6673 = vpop.f32.mrb[0].mxu0
        %v6674 = vpop.f32.mrb[0].mxu0
        %v6675 = vadd.f32 %v6514, %v6674
        %v6676 = vpop.f32.mrb[0].mxu0
        %6677 = vmatprep.mubr.bf16.mxu0 0
        %6678 = vmatmul.mubr.bf16.gmra.mrb[0].mxu0 %v5291
        %v6679 = vpop.f32.mrb[0].mxu0
        %v6680 = vadd.f32 %v6519, %v6679
        %v6681 = vpop.f32.mrb[0].mxu0
        %v6682 = vpop.f32.mrb[0].mxu0
        %v6683 = vadd.f32 %v6522, %v6682
        %v6684 = vpop.f32.mrb[0].mxu0
        %6685 = vmatprep.mubr.bf16.mxu0 0
        %6686 = vmatmul.mubr.bf16.gmra.mrb[0].mxu0 %v5294
        %v6687 = vpop.f32.mrb[0].mxu0
        %v6688 = vadd.f32 %v6527, %v6687
        %v6689 = vpop.f32.mrb[0].mxu0
        %v6690 = vpop.f32.mrb[0].mxu0
        %v6691 = vadd.f32 %v6530, %v6690
        %v6692 = vpop.f32.mrb[0].mxu0
        %6693 = vmatprep.mubr.bf16.mxu0 0
        %6694 = vmatmul.mubr.bf16.gmra.mrb[0].mxu0 %v5297
        %v6695 = vpop.f32.mrb[0].mxu0
        %v6696 = vadd.f32 %v6535, %v6695
        %v6697 = vpop.f32.mrb[0].mxu0
        %v6698 = vpop.f32.mrb[0].mxu0
        %v6699 = vadd.f32 %v6538, %v6698
        %v6700 = vpop.f32.mrb[0].mxu0
        %6701 = vdwg.mxu0
        %v6702 = vmax.f32 %v6576, 0.0
        %v6703 = vmax.f32 %v6579, 0.0
        %v6704 = vmax.f32 %v6584, 0.0
        %v6705 = vmax.f32 %v6587, 0.0
        %v6706 = vmax.f32 %v6592, 0.0
        %v6707 = vmax.f32 %v6595, 0.0
        %v6708 = vmax.f32 %v6600, 0.0
        %v6709 = vmax.f32 %v6603, 0.0
        %v6710 = vmax.f32 %v6608, 0.0
        %v6711 = vmax.f32 %v6611, 0.0
        %v6712 = vmax.f32 %v6616, 0.0
        %v6713 = vmax.f32 %v6619, 0.0
        %v6714 = vmax.f32 %v6624, 0.0
        %v6715 = vmax.f32 %v6627, 0.0
        %v6716 = vmax.f32 %v6632, 0.0
        %v6717 = vmax.f32 %v6635, 0.0
        %v6718 = vmax.f32 %v6640, 0.0
        %v6719 = vmax.f32 %v6643, 0.0
        %v6720 = vmax.f32 %v6648, 0.0
        %v6721 = vmax.f32 %v6651, 0.0
        %v6722 = vmax.f32 %v6656, 0.0
        %v6723 = vmax.f32 %v6659, 0.0
        %v6724 = vmax.f32 %v6664, 0.0
        %v6725 = vmax.f32 %v6667, 0.0
        %v6726 = vmax.f32 %v6672, 0.0
        %v6727 = vmax.f32 %v6675, 0.0
        %v6728 = vmax.f32 %v6680, 0.0
        %v6729 = vmax.f32 %v6683, 0.0
        %v6730 = vmax.f32 %v6688, 0.0
        %v6731 = vmax.f32 %v6691, 0.0
        %v6732 = vmax.f32 %v6696, 0.0
        %v6733 = vmax.f32 %v6699, 0.0
        %6734 = vst [vmem:[%s296] sm:$0xff] %v6702
        %6735 = vst [vmem:[%s296 + $0x8] sm:$0xff] %v6703
        %6736 = vst [vmem:[%s296 + $0x10] sm:$0xff] %v6704
        %6737 = vst [vmem:[%s296 + $0x18] sm:$0xff] %v6705
        %6738 = vst [vmem:[%s296 + $0x20] sm:$0xff] %v6706
        %6739 = vst [vmem:[%s296 + $0x28] sm:$0xff] %v6707
        %6740 = vst [vmem:[%s296 + $0x30] sm:$0xff] %v6708
        %6741 = vst [vmem:[%s296 + $0x38] sm:$0xff] %v6709
        %6742 = vst [vmem:[%s296 + $0x40] sm:$0xff] %v6710
        %6743 = vst [vmem:[%s296 + $0x48] sm:$0xff] %v6711
        %6744 = vst [vmem:[%s296 + $0x50] sm:$0xff] %v6712
        %6745 = vst [vmem:[%s296 + $0x58] sm:$0xff] %v6713
        %6746 = vst [vmem:[%s296 + $0x60] sm:$0xff] %v6714
        %6747 = vst [vmem:[%s296 + $0x68] sm:$0xff] %v6715
        %6748 = vst [vmem:[%s296 + $0x70] sm:$0xff] %v6716
        %6749 = vst [vmem:[%s296 + $0x78] sm:$0xff] %v6717
        %6750 = vst [vmem:[%s296 + $0x80] sm:$0xff] %v6718
        %6751 = vst [vmem:[%s296 + $0x88] sm:$0xff] %v6719
        %6752 = vst [vmem:[%s296 + $0x90] sm:$0xff] %v6720
        %6753 = vst [vmem:[%s296 + $0x98] sm:$0xff] %v6721
        %6754 = vst [vmem:[%s296 + $0xa0] sm:$0xff] %v6722
        %6755 = vst [vmem:[%s296 + $0xa8] sm:$0xff] %v6723
        %6756 = vst [vmem:[%s296 + $0xb0] sm:$0xff] %v6724
        %6757 = vst [vmem:[%s296 + $0xb8] sm:$0xff] %v6725
        %6758 = vst [vmem:[%s296 + $0xc0] sm:$0xff] %v6726
        %6759 = vst [vmem:[%s296 + $0xc8] sm:$0xff] %v6727
        %6760 = vst [vmem:[%s296 + $0xd0] sm:$0xff] %v6728
        %6761 = vst [vmem:[%s296 + $0xd8] sm:$0xff] %v6729
        %6762 = vst [vmem:[%s296 + $0xe0] sm:$0xff] %v6730
        %6763 = vst [vmem:[%s296 + $0xe8] sm:$0xff] %v6731
        %6764 = vst [vmem:[%s296 + $0xf0] sm:$0xff] %v6732
        %6765 = vst [vmem:[%s296 + $0xf8] sm:$0xff] %v6733
        %s6766 = sand.u32 %s142, 1
        %s6767 = scalar_lea.sflag [#allocation6], %s6766
        %s6768 = sand.u32 %s142, 1
        %s6769 = smul.addr %s6768, 256
        %s6770 = scalar_lea.vmem [#allocation13], %s6769
        // Predicated region
        $region61: #{tpu_custom_call.1} parent=39 // pred_check
          %p6771 = pneg %p152
        $region62: #{tpu_custom_call.1} parent=39 // pred_check_branch
          %6773 = sbr.rel (%p6771) target = $region64
        $region63: #{tpu_custom_call.1} parent=39 // pred_region
          %s6775 = ssub.s32 4096, 4096
          %6776 = vsyncadd %s6767, %s6775
          %s6777 = smul.addr %s24, 32
          %s6778 = smul.addr %s6777, 128
          %s6779 = scalar_lea.hbm %s5, %s6778
          %s6780 = sshll.u32 %s6770, 4
          %s6781 = int_to_ptr.vmem [resolvable:$true] %s6780
          %6786 = dma.vmem_to_hbm [thread:$0]  %s6781, 4096, %s6779, %s6767, 128, 128, 8
        $region64: #{tpu_custom_call.1} parent=39 // pred_fallthru
          _
      $region40: #{tpu_custom_call.1} parent=5 // pred_fallthru
        _
      %p6787 = scmp.le.s32.totalorder 2, %s19
      // Predicated region
      $region65: #{tpu_custom_call.1} parent=5 // pred_check
        %p6788 = pneg %p6787
      $region66: #{tpu_custom_call.1} parent=5 // pred_check_branch
        %6790 = sbr.rel (%p6788) target = $region68
      $region67: #{tpu_custom_call.1} parent=5 // pred_region
        %s6791 = ssub.s32 %s19, 2
        // Predicated region
        $region69: #{tpu_custom_call.1} parent=67 // pred_check
          %p6792 = pneg %p158
        $region70: #{tpu_custom_call.1} parent=67 // pred_check_branch
          %6794 = sbr.rel (%p6792) target = $region72
        $region71: #{tpu_custom_call.1} parent=67 // pred_region
          %s6795 = sand.u32 %s143, 1
          %s6796 = scalar_lea.sflag [#allocation6], %s6795
          %s6797 = sand.u32 %s143, 1
          %s6798 = smul.addr %s6797, 256
          %s6799 = scalar_lea.vmem [#allocation13], %s6798
          %6800 = dma.done %s6796, 4096
        $region72: #{tpu_custom_call.1} parent=67 // pred_fallthru
          _
      $region68: #{tpu_custom_call.1} parent=5 // pred_fallthru
        _
    $region6: #{tpu_custom_call.1} parent=1 // loop_footer
      %s23 = sadd.s32 1, %s19
    $region7: #{tpu_custom_call.1} parent=1 // loop_footer_branch
      %18 = sbr.rel target = $region3
    $region8: #{tpu_custom_call.1} parent=1 // loop_exit
      _
    %6801 = vsyncpa [#allocation5], 1
    %s6802 = scalar_lea.sflag [#allocation5], 1
    %6803 = vsyncpa %s6802, 1
    %6804 = vsyncpa [#allocation8], 1
    %6805 = vsyncpa [#allocation11], 1
    %6806 = vsyncpa [#allocation6], 1
    %s6807 = scalar_lea.sflag [#allocation6], 1
    %6808 = vsyncpa %s6807, 1

</llo_original>
